<compile_context>
chip_gen: v7x
topology: tpu7x:2x2x1
jax: 0.10.0
libtpu: 0.0.40
codegen_flags: <defaults>
</compile_context>

<pallas_src>
import jax
import jax.numpy as jnp
from jax.experimental import pallas as pl
from jax.experimental.pallas import tpu as pltpu

_H1, _H2, _H3, _H4, _H5 = 1024, 512, 256, 128, 64
_OUT = 2
_OUT_PAD = 128  # lane-dense output width


def _round_up(x, m):
    return (x + m - 1) // m * m


# -----------------------------------------------------------------------------
# Kernel
# -----------------------------------------------------------------------------
def _mlp_kernel(x_ref,
                w1_ref, b1_ref, w2_ref, b2_ref, w3_ref, b3_ref,
                w4_ref, b4_ref, w5_ref, b5_ref, w6_ref, b6_ref,
                o_ref, acc_ref):
    """grid = (batch_tiles, k_tiles). fc1 is K-reduced into acc_ref; layers 2-6 fused."""
    k = pl.program_id(1)

    @pl.when(k == 0)
    def _init():
        acc_ref[...] = jnp.zeros_like(acc_ref)

    # Layer 1 partial product for this K slab.  x tile arrives f32 and is cast to
    # bf16 here (no extra HBM pass in the wrapper); accumulation stays f32.
    acc_ref[...] += jnp.dot(x_ref[...].astype(jnp.bfloat16), w1_ref[...],
                            preferred_element_type=jnp.float32)

    @pl.when(k == pl.num_programs(1) - 1)
    def _finish():
        # Bias + ReLU in f32 (VPU); only the dot operands are bf16.
        h = jnp.maximum(acc_ref[...] + b1_ref[...], 0.0)

        def layer(h, w_ref, b_ref, relu):
            z = jnp.dot(h.astype(jnp.bfloat16), w_ref[...],
                        preferred_element_type=jnp.float32)
            z = z + b_ref[...]
            return jnp.maximum(z, 0.0) if relu else z

        h = layer(h, w2_ref, b2_ref, True)
        h = layer(h, w3_ref, b3_ref, True)
        h = layer(h, w4_ref, b4_ref, True)
        h = layer(h, w5_ref, b5_ref, True)
        out = layer(h, w6_ref, b6_ref, False)   # fc6: no ReLU, no dropout
        o_ref[...] = out.astype(o_ref.dtype)


# -----------------------------------------------------------------------------
# Tiling / generation heuristics (trace-time Python only)
# -----------------------------------------------------------------------------
def _tpu_generation():
    try:
        kind = jax.devices()[0].device_kind.lower()
    except Exception:
        return "other"
    if "v7" in kind:
        return "v7x"
    if "v6" in kind:
        return "v6e"
    if "v5" in kind:
        return "v5e"
    return "other"


def _pick_tb(B, gen):
    """Batch tile: big enough to beat the HBM roofline on the fc1 weight stream,
    small enough for VMEM; >= 2 tiles on v7x so both TensorCores get work."""
    target = {"v6e": 1024, "v7x": 512, "v5e": 256}.get(gen, 512)
    b8 = _round_up(max(B, 1), 8)
    if gen == "v7x" and b8 >= 16:
        target = min(target, _round_up(pl.cdiv(b8, 2), 8))
    if b8 <= target:
        return b8
    # Prefer a tile that divides round_up(B, 8) so the wrapper never copies x just
    # to pad the batch dim; fall back to the target (last tile padded) otherwise.
    for tb in range(target, max(target // 2, 8) - 1, -8):
        if b8 % tb == 0:
            return tb
    return target


def _pick_tk(k_pad):
    for tk in (2048, 1024, 512, 256):
        if k_pad % tk == 0:
            return tk
    return 256  # unreachable: k_pad is always a multiple of 256


def _vmem_limit(tb, tk, gen):
    """Double-buffered footprint + margin, capped per generation."""
    bf, f32 = 2, 4
    x_tiles = 2 * tb * tk * f32
    w1_slabs = 2 * tk * _H1 * bf
    acc = tb * _H1 * f32
    resident_w = 2 * bf * (_H1 * _H2 + _H2 * _H3 + _H3 * _H4 + _H4 * _H5 + _H5 * _OUT_PAD)
    biases = 2 * f32 * (_H1 + _H2 + _H3 + _H4 + _H5 + _OUT_PAD)
    out = 2 * tb * _OUT_PAD * f32
    need = int(1.25 * (x_tiles + w1_slabs + acc + resident_w + biases + out)) + (4 << 20)
    cap = (48 << 20) if gen == "v7x" else (100 << 20)
    return min(max(need, 32 << 20), cap)


# -----------------------------------------------------------------------------
# One-time parameter preparation (call ONCE, outside the per-step forward)
# -----------------------------------------------------------------------------
def prepare_params(params):
    """Pad + bf16-cast weights once.  Biases stay f32.  W stored [in, out]."""
    (w1, b1), (w2, b2), (w3, b3), (w4, b4), (w5, b5), (w6, b6) = params
    K = w1.shape[0]
    K_pad = _round_up(K, 256)
    w1p = w1.astype(jnp.bfloat16)
    if K_pad != K:
        w1p = jnp.zeros((K_pad, _H1), jnp.bfloat16).at[:K, :].set(w1p)
    w2p = w2.astype(jnp.bfloat16)
    w3p = w3.astype(jnp.bfloat16)
    w4p = w4.astype(jnp.bfloat16)
    w5p = w5.astype(jnp.bfloat16)
    w6p = jnp.zeros((_H5, _OUT_PAD), jnp.bfloat16).at[:, :_OUT].set(w6.astype(jnp.bfloat16))
    b6p = jnp.zeros((1, _OUT_PAD), jnp.float32).at[:, :_OUT].set(b6)
    prepared = (w1p, b1, w2p, b2, w3p, b3, w4p, b4, w5p, b5, w6p, b6p)
    return jax.tree_util.tree_map(jax.device_put, prepared)


# -----------------------------------------------------------------------------
# Forward
# -----------------------------------------------------------------------------
@jax.jit
def simple_nn_forward(x, prepared):
    """x: [B, C, H, W] float32.  prepared: output of prepare_params()."""
    (w1p, b1, w2p, b2, w3p, b3, w4p, b4, w5p, b5, w6p, b6p) = prepared

    B = x.shape[0]
    x_flat = x.reshape(B, -1)                    # x.view(x.size(0), -1)
    K = x_flat.shape[1]
    K_pad = w1p.shape[0]

    gen = _tpu_generation()
    TB = _pick_tb(B, gen)
    B_pad = _round_up(B, TB)
    TK = _pick_tk(K_pad)

    # Pad only when required (batch remainder rows, or the rare K not % 256 case).
    if B_pad != B or K_pad != K:
        x_flat = jnp.zeros((B_pad, K_pad), x_flat.dtype).at[:B, :K].set(x_flat)

    grid = (B_pad // TB, K_pad // TK)

    # TODO(synk): if profiling shows exposed DMA at batch-tile boundaries, add
    # pipeline_mode=pl.Buffered(3) to the x and w1 BlockSpecs below.
    in_specs = [
        pl.BlockSpec((TB, TK), lambda i, k: (i, k)),         # x: batch & K tiled (f32)
        pl.BlockSpec((TK, _H1), lambda i, k: (k, 0)),        # w1: streamed over K (bf16)
        pl.BlockSpec((1, _H1), lambda i, k: (0, 0)),         # b1 (resident)
        pl.BlockSpec((_H1, _H2), lambda i, k: (0, 0)),       # w2 (resident)
        pl.BlockSpec((1, _H2), lambda i, k: (0, 0)),
        pl.BlockSpec((_H2, _H3), lambda i, k: (0, 0)),
        pl.BlockSpec((1, _H3), lambda i, k: (0, 0)),
        pl.BlockSpec((_H3, _H4), lambda i, k: (0, 0)),
        pl.BlockSpec((1, _H4), lambda i, k: (0, 0)),
        pl.BlockSpec((_H4, _H5), lambda i, k: (0, 0)),
        pl.BlockSpec((1, _H5), lambda i, k: (0, 0)),
        pl.BlockSpec((_H5, _OUT_PAD), lambda i, k: (0, 0)),  # w6 (padded to 128 lanes)
        pl.BlockSpec((1, _OUT_PAD), lambda i, k: (0, 0)),    # b6 (padded)
    ]
    out_spec = pl.BlockSpec((TB, _OUT_PAD), lambda i, k: (i, 0))

    # Advisory cost estimate for XLA scheduling.
    dims = [K_pad, _H1, _H2, _H3, _H4, _H5, _OUT_PAD]
    layer_prods = [a * b for a, b in zip(dims[:-1], dims[1:])]
    flops = int(2 * B_pad * sum(layer_prods))
    bytes_accessed = int(grid[0] * 2 * K_pad * _H1              # bf16 w1 stream per batch tile
                         + 2 * sum(layer_prods[1:])             # resident bf16 weights
                         + 4 * sum(dims[1:])                    # f32 biases
                         + B_pad * (4 * K_pad + 4 * _OUT_PAD))  # x in (f32), out
    cost = pl.CostEstimate(flops=flops, transcendentals=0,
                           bytes_accessed=bytes_accessed)

    out = pl.pallas_call(
        _mlp_kernel,
        out_shape=jax.ShapeDtypeStruct((B_pad, _OUT_PAD), jnp.float32),
        grid_spec=pltpu.PrefetchScalarGridSpec(
            num_scalar_prefetch=0,
            grid=grid,
            in_specs=in_specs,
            out_specs=out_spec,
            scratch_shapes=[pltpu.VMEM((TB, _H1), jnp.float32)],
        ),
        compiler_params=pltpu.CompilerParams(
            dimension_semantics=("parallel", "arbitrary"),
            vmem_limit_bytes=_vmem_limit(TB, TK, gen),
        ),
        cost_estimate=cost,
    )(x_flat, w1p, b1, w2p, b2, w3p, b3, w4p, b4, w5p, b5, w6p, b6p)

    return out[:B, :_OUT]


# -----------------------------------------------------------------------------
# Params / reference
# -----------------------------------------------------------------------------
def init_params(key, input_size):
    """nn.Linear-style init (U[-1/sqrt(fan_in), 1/sqrt(fan_in)]), W stored [in, out]."""
    dims = [input_size, _H1, _H2, _H3, _H4, _H5, _OUT]
    params = []
    for i in range(len(dims) - 1):
        fan_in, fan_out = dims[i], dims[i + 1]
        key, kw, kb = jax.random.split(key, 3)
        bound = 1.0 / jnp.sqrt(fan_in)
        w = jax.random.uniform(kw, (fan_in, fan_out), jnp.float32, -bound, bound)
        b = jax.random.uniform(kb, (1, fan_out), jnp.float32, -bound, bound)
        params.append((w, b))
    return params


def reference_forward(x, params):
    """Pure-JAX reference matching the kernel's numerics (bf16 dot inputs, f32 acc)."""
    h = x.reshape(x.shape[0], -1)
    for i, (w, b) in enumerate(params):
        z = jnp.dot(h.astype(jnp.bfloat16), w.astype(jnp.bfloat16),
                    preferred_element_type=jnp.float32) + b
        h = jnp.maximum(z, 0.0) if i < len(params) - 1 else z
    return h


if __name__ == "__main__":
    # Small shapes consistent with the forward (NCHW image flattened into fc1).
    B, C, H, W = 2, 3, 16, 16
    input_size = C * H * W  # 768 (stand-in for 224*224*3; kernel K-tiles fc1 either way)

    key = jax.random.PRNGKey(0)
    key, kx = jax.random.split(key)
    x = jax.random.normal(kx, (B, C, H, W), dtype=jnp.float32)

    params = init_params(key, input_size)
    prepared = prepare_params(params)      # one-time pad/cast, outside the jit'd forward

    out = simple_nn_forward(x, prepared)
    out = jax.block_until_ready(out)

    ref = reference_forward(x, params)
    assert out.shape == (B, _OUT), out.shape
    assert jnp.allclose(out, ref, atol=1e-2, rtol=1e-2), "mismatch vs. reference"

    print("KERNEL_OK")
</pallas_src>

<mosaic_0001>
module attributes {stable_mosaic.version = 11 : i64} {
  func.func @_mlp_kernel(%arg0: i32, %arg1: i32, %arg2: memref<8x256xf32, #tpu.memory_space<vmem>>, %arg3: memref<256x1024xbf16, #tpu.memory_space<vmem>>, %arg4: memref<1x1024xf32, #tpu.memory_space<vmem>>, %arg5: memref<1024x512xbf16, #tpu.memory_space<vmem>>, %arg6: memref<1x512xf32, #tpu.memory_space<vmem>>, %arg7: memref<512x256xbf16, #tpu.memory_space<vmem>>, %arg8: memref<1x256xf32, #tpu.memory_space<vmem>>, %arg9: memref<256x128xbf16, #tpu.memory_space<vmem>>, %arg10: memref<1x128xf32, #tpu.memory_space<vmem>>, %arg11: memref<128x64xbf16, #tpu.memory_space<vmem>>, %arg12: memref<1x64xf32, #tpu.memory_space<vmem>>, %arg13: memref<64x128xbf16, #tpu.memory_space<vmem>>, %arg14: memref<1x128xf32, #tpu.memory_space<vmem>>, %arg15: memref<8x128xf32, #tpu.memory_space<vmem>>, %arg16: memref<8x1024xf32, #tpu.memory_space<vmem>>) attributes {dimension_semantics = [#tpu.dimension_semantics<parallel>, #tpu.dimension_semantics<arbitrary>], iteration_bounds = array<i64: 1, 3>, scalar_prefetch = 0 : i64, scratch_operands = 1 : i64, tpu.core_type = #tpu.core_type<tc>, window_params = [{transform_indices = @transform_0, window_bounds = array<i64: 8, 256>}, {transform_indices = @transform_1, window_bounds = array<i64: 256, 1024>}, {pipeline_mode = #tpu.pipeline_mode<synchronous>, transform_indices = @transform_2, window_bounds = array<i64: 1, 1024>}, {pipeline_mode = #tpu.pipeline_mode<synchronous>, transform_indices = @transform_3, window_bounds = array<i64: 1024, 512>}, {pipeline_mode = #tpu.pipeline_mode<synchronous>, transform_indices = @transform_4, window_bounds = array<i64: 1, 512>}, {pipeline_mode = #tpu.pipeline_mode<synchronous>, transform_indices = @transform_5, window_bounds = array<i64: 512, 256>}, {pipeline_mode = #tpu.pipeline_mode<synchronous>, transform_indices = @transform_6, window_bounds = array<i64: 1, 256>}, {pipeline_mode = #tpu.pipeline_mode<synchronous>, transform_indices = @transform_7, window_bounds = array<i64: 256, 128>}, {pipeline_mode = #tpu.pipeline_mode<synchronous>, transform_indices = @transform_8, window_bounds = array<i64: 1, 128>}, {pipeline_mode = #tpu.pipeline_mode<synchronous>, transform_indices = @transform_9, window_bounds = array<i64: 128, 64>}, {pipeline_mode = #tpu.pipeline_mode<synchronous>, transform_indices = @transform_10, window_bounds = array<i64: 1, 64>}, {pipeline_mode = #tpu.pipeline_mode<synchronous>, transform_indices = @transform_11, window_bounds = array<i64: 64, 128>}, {pipeline_mode = #tpu.pipeline_mode<synchronous>, transform_indices = @transform_12, window_bounds = array<i64: 1, 128>}, {transform_indices = @transform_13, window_bounds = array<i64: 8, 128>}]} {
    %c0_i32 = arith.constant 0 : i32
    %0 = arith.cmpi eq, %arg1, %c0_i32 : i32
    %1 = arith.extui %0 : i1 to i32
    %c0_i32_0 = arith.constant 0 : i32
    %2 = arith.cmpi ne, %1, %c0_i32_0 : i32
    scf.if %2 {
      %cst_9 = arith.constant 0.000000e+00 : f32
      %13 = vector.broadcast %cst_9 : f32 to vector<8x1024xf32>
      %c0_10 = arith.constant 0 : index
      %c0_11 = arith.constant 0 : index
      %14 = vector.load %arg16[%c0_10, %c0_11] : memref<8x1024xf32, #tpu.memory_space<vmem>>, vector<8x1024xf32>
      tpu.vector_store %arg16[%c0_10, %c0_11], %13 {strides = array<i32>} : memref<8x1024xf32, #tpu.memory_space<vmem>>, vector<8x1024xf32>,
    } else {
    }
    %c0 = arith.constant 0 : index
    %c0_1 = arith.constant 0 : index
    %3 = vector.load %arg16[%c0, %c0_1] : memref<8x1024xf32, #tpu.memory_space<vmem>>, vector<8x1024xf32>
    %c0_2 = arith.constant 0 : index
    %c0_3 = arith.constant 0 : index
    %4 = vector.load %arg2[%c0_2, %c0_3] : memref<8x256xf32, #tpu.memory_space<vmem>>, vector<8x256xf32>
    %5 = arith.truncf %4 : vector<8x256xf32> to vector<8x256xbf16>
    %c0_4 = arith.constant 0 : index
    %c0_5 = arith.constant 0 : index
    %6 = vector.load %arg3[%c0_4, %c0_5] : memref<256x1024xbf16, #tpu.memory_space<vmem>>, vector<256x1024xbf16>
    %cst = arith.constant dense<0.000000e+00> : vector<8x1024xf32>
    %7 = tpu.matmul %5, %6, %cst {dimension_numbers = #tpu.dot_dimension_numbers<[1], [0], [0], [1], [0, 0, 1, 1], [], []>} : vector<8x256xbf16>, vector<256x1024xbf16>, vector<8x1024xf32> -> vector<8x1024xf32>
    %8 = arith.addf %3, %7 : vector<8x1024xf32>
    %c0_6 = arith.constant 0 : index
    %c0_7 = arith.constant 0 : index
    %9 = vector.load %arg16[%c0_6, %c0_7] : memref<8x1024xf32, #tpu.memory_space<vmem>>, vector<8x1024xf32>
    tpu.vector_store %arg16[%c0_6, %c0_7], %8 {strides = array<i32>} : memref<8x1024xf32, #tpu.memory_space<vmem>>, vector<8x1024xf32>,
    %c2_i32 = arith.constant 2 : i32
    %10 = arith.cmpi eq, %arg1, %c2_i32 : i32
    %11 = arith.extui %10 : i1 to i32
    %c0_i32_8 = arith.constant 0 : i32
    %12 = arith.cmpi ne, %11, %c0_i32_8 : i32
    scf.if %12 {
      %c0_9 = arith.constant 0 : index
      %c0_10 = arith.constant 0 : index
      %13 = vector.load %arg16[%c0_9, %c0_10] : memref<8x1024xf32, #tpu.memory_space<vmem>>, vector<8x1024xf32>
      %c0_11 = arith.constant 0 : index
      %c0_12 = arith.constant 0 : index
      %14 = vector.load %arg4[%c0_11, %c0_12] : memref<1x1024xf32, #tpu.memory_space<vmem>>, vector<1x1024xf32>
      %15 = vector.broadcast %14 : vector<1x1024xf32> to vector<8x1024xf32>
      %16 = arith.addf %13, %15 : vector<8x1024xf32>
      %cst_13 = arith.constant 0.000000e+00 : f32
      %17 = vector.broadcast %cst_13 : f32 to vector<8x1024xf32>
      %18 = arith.maximumf %16, %17 : vector<8x1024xf32>
      %19 = arith.truncf %18 : vector<8x1024xf32> to vector<8x1024xbf16>
      %c0_14 = arith.constant 0 : index
      %c0_15 = arith.constant 0 : index
      %20 = vector.load %arg5[%c0_14, %c0_15] : memref<1024x512xbf16, #tpu.memory_space<vmem>>, vector<1024x512xbf16>
      %cst_16 = arith.constant dense<0.000000e+00> : vector<8x512xf32>
      %21 = tpu.matmul %19, %20, %cst_16 {dimension_numbers = #tpu.dot_dimension_numbers<[1], [0], [0], [1], [0, 0, 1, 1], [], []>} : vector<8x1024xbf16>, vector<1024x512xbf16>, vector<8x512xf32> -> vector<8x512xf32>
      %c0_17 = arith.constant 0 : index
      %c0_18 = arith.constant 0 : index
      %22 = vector.load %arg6[%c0_17, %c0_18] : memref<1x512xf32, #tpu.memory_space<vmem>>, vector<1x512xf32>
      %23 = vector.broadcast %22 : vector<1x512xf32> to vector<8x512xf32>
      %24 = arith.addf %21, %23 : vector<8x512xf32>
      %cst_19 = arith.constant 0.000000e+00 : f32
      %25 = vector.broadcast %cst_19 : f32 to vector<8x512xf32>
      %26 = arith.maximumf %24, %25 : vector<8x512xf32>
      %27 = arith.truncf %26 : vector<8x512xf32> to vector<8x512xbf16>
      %c0_20 = arith.constant 0 : index
      %c0_21 = arith.constant 0 : index
      %28 = vector.load %arg7[%c0_20, %c0_21] : memref<512x256xbf16, #tpu.memory_space<vmem>>, vector<512x256xbf16>
      %cst_22 = arith.constant dense<0.000000e+00> : vector<8x256xf32>
      %29 = tpu.matmul %27, %28, %cst_22 {dimension_numbers = #tpu.dot_dimension_numbers<[1], [0], [0], [1], [0, 0, 1, 1], [], []>} : vector<8x512xbf16>, vector<512x256xbf16>, vector<8x256xf32> -> vector<8x256xf32>
      %c0_23 = arith.constant 0 : index
      %c0_24 = arith.constant 0 : index
      %30 = vector.load %arg8[%c0_23, %c0_24] : memref<1x256xf32, #tpu.memory_space<vmem>>, vector<1x256xf32>
      %31 = vector.broadcast %30 : vector<1x256xf32> to vector<8x256xf32>
      %32 = arith.addf %29, %31 : vector<8x256xf32>
      %cst_25 = arith.constant 0.000000e+00 : f32
      %33 = vector.broadcast %cst_25 : f32 to vector<8x256xf32>
      %34 = arith.maximumf %32, %33 : vector<8x256xf32>
      %35 = arith.truncf %34 : vector<8x256xf32> to vector<8x256xbf16>
      %c0_26 = arith.constant 0 : index
      %c0_27 = arith.constant 0 : index
      %36 = vector.load %arg9[%c0_26, %c0_27] : memref<256x128xbf16, #tpu.memory_space<vmem>>, vector<256x128xbf16>
      %cst_28 = arith.constant dense<0.000000e+00> : vector<8x128xf32>
      %37 = tpu.matmul %35, %36, %cst_28 {dimension_numbers = #tpu.dot_dimension_numbers<[1], [0], [0], [1], [0, 0, 1, 1], [], []>} : vector<8x256xbf16>, vector<256x128xbf16>, vector<8x128xf32> -> vector<8x128xf32>
      %c0_29 = arith.constant 0 : index
      %c0_30 = arith.constant 0 : index
      %38 = vector.load %arg10[%c0_29, %c0_30] : memref<1x128xf32, #tpu.memory_space<vmem>>, vector<1x128xf32>
      %39 = vector.broadcast %38 : vector<1x128xf32> to vector<8x128xf32>
      %40 = arith.addf %37, %39 : vector<8x128xf32>
      %cst_31 = arith.constant 0.000000e+00 : f32
      %41 = vector.broadcast %cst_31 : f32 to vector<8x128xf32>
      %42 = arith.maximumf %40, %41 : vector<8x128xf32>
      %43 = arith.truncf %42 : vector<8x128xf32> to vector<8x128xbf16>
      %c0_32 = arith.constant 0 : index
      %c0_33 = arith.constant 0 : index
      %44 = vector.load %arg11[%c0_32, %c0_33] : memref<128x64xbf16, #tpu.memory_space<vmem>>, vector<128x64xbf16>
      %cst_34 = arith.constant dense<0.000000e+00> : vector<8x64xf32>
      %45 = tpu.matmul %43, %44, %cst_34 {dimension_numbers = #tpu.dot_dimension_numbers<[1], [0], [0], [1], [0, 0, 1, 1], [], []>} : vector<8x128xbf16>, vector<128x64xbf16>, vector<8x64xf32> -> vector<8x64xf32>
      %c0_35 = arith.constant 0 : index
      %c0_36 = arith.constant 0 : index
      %46 = vector.load %arg12[%c0_35, %c0_36] : memref<1x64xf32, #tpu.memory_space<vmem>>, vector<1x64xf32>
      %47 = vector.broadcast %46 : vector<1x64xf32> to vector<8x64xf32>
      %48 = arith.addf %45, %47 : vector<8x64xf32>
      %cst_37 = arith.constant 0.000000e+00 : f32
      %49 = vector.broadcast %cst_37 : f32 to vector<8x64xf32>
      %50 = arith.maximumf %48, %49 : vector<8x64xf32>
      %51 = arith.truncf %50 : vector<8x64xf32> to vector<8x64xbf16>
      %c0_38 = arith.constant 0 : index
      %c0_39 = arith.constant 0 : index
      %52 = vector.load %arg13[%c0_38, %c0_39] : memref<64x128xbf16, #tpu.memory_space<vmem>>, vector<64x128xbf16>
      %cst_40 = arith.constant dense<0.000000e+00> : vector<8x128xf32>
      %53 = tpu.matmul %51, %52, %cst_40 {dimension_numbers = #tpu.dot_dimension_numbers<[1], [0], [0], [1], [0, 0, 1, 1], [], []>} : vector<8x64xbf16>, vector<64x128xbf16>, vector<8x128xf32> -> vector<8x128xf32>
      %c0_41 = arith.constant 0 : index
      %c0_42 = arith.constant 0 : index
      %54 = vector.load %arg14[%c0_41, %c0_42] : memref<1x128xf32, #tpu.memory_space<vmem>>, vector<1x128xf32>
      %55 = vector.broadcast %54 : vector<1x128xf32> to vector<8x128xf32>
      %56 = arith.addf %53, %55 : vector<8x128xf32>
      %c0_43 = arith.constant 0 : index
      %c0_44 = arith.constant 0 : index
      %57 = vector.load %arg15[%c0_43, %c0_44] : memref<8x128xf32, #tpu.memory_space<vmem>>, vector<8x128xf32>
      tpu.vector_store %arg15[%c0_43, %c0_44], %56 {strides = array<i32>} : memref<8x128xf32, #tpu.memory_space<vmem>>, vector<8x128xf32>,
    } else {
    }
    return
  }
  func.func @transform_0(%arg0: i32, %arg1: i32) -> (i32, i32) {
    %c0_i32 = arith.constant 0 : i32
    return %arg0, %arg1 : i32, i32
  }
  func.func @transform_1(%arg0: i32, %arg1: i32) -> (i32, i32) {
    %c0_i32 = arith.constant 0 : i32
    %c0_i32_0 = arith.constant 0 : i32
    return %arg1, %c0_i32 : i32, i32
  }
  func.func @transform_2(%arg0: i32, %arg1: i32) -> (i32, i32) {
    %c0_i32 = arith.constant 0 : i32
    %c0_i32_0 = arith.constant 0 : i32
    %c0_i32_1 = arith.constant 0 : i32
    return %c0_i32, %c0_i32_0 : i32, i32
  }
  func.func @transform_3(%arg0: i32, %arg1: i32) -> (i32, i32) {
    %c0_i32 = arith.constant 0 : i32
    %c0_i32_0 = arith.constant 0 : i32
    %c0_i32_1 = arith.constant 0 : i32
    return %c0_i32, %c0_i32_0 : i32, i32
  }
  func.func @transform_4(%arg0: i32, %arg1: i32) -> (i32, i32) {
    %c0_i32 = arith.constant 0 : i32
    %c0_i32_0 = arith.constant 0 : i32
    %c0_i32_1 = arith.constant 0 : i32
    return %c0_i32, %c0_i32_0 : i32, i32
  }
  func.func @transform_5(%arg0: i32, %arg1: i32) -> (i32, i32) {
    %c0_i32 = arith.constant 0 : i32
    %c0_i32_0 = arith.constant 0 : i32
    %c0_i32_1 = arith.constant 0 : i32
    return %c0_i32, %c0_i32_0 : i32, i32
  }
  func.func @transform_6(%arg0: i32, %arg1: i32) -> (i32, i32) {
    %c0_i32 = arith.constant 0 : i32
    %c0_i32_0 = arith.constant 0 : i32
    %c0_i32_1 = arith.constant 0 : i32
    return %c0_i32, %c0_i32_0 : i32, i32
  }
  func.func @transform_7(%arg0: i32, %arg1: i32) -> (i32, i32) {
    %c0_i32 = arith.constant 0 : i32
    %c0_i32_0 = arith.constant 0 : i32
    %c0_i32_1 = arith.constant 0 : i32
    return %c0_i32, %c0_i32_0 : i32, i32
  }
  func.func @transform_8(%arg0: i32, %arg1: i32) -> (i32, i32) {
    %c0_i32 = arith.constant 0 : i32
    %c0_i32_0 = arith.constant 0 : i32
    %c0_i32_1 = arith.constant 0 : i32
    return %c0_i32, %c0_i32_0 : i32, i32
  }
  func.func @transform_9(%arg0: i32, %arg1: i32) -> (i32, i32) {
    %c0_i32 = arith.constant 0 : i32
    %c0_i32_0 = arith.constant 0 : i32
    %c0_i32_1 = arith.constant 0 : i32
    return %c0_i32, %c0_i32_0 : i32, i32
  }
  func.func @transform_10(%arg0: i32, %arg1: i32) -> (i32, i32) {
    %c0_i32 = arith.constant 0 : i32
    %c0_i32_0 = arith.constant 0 : i32
    %c0_i32_1 = arith.constant 0 : i32
    return %c0_i32, %c0_i32_0 : i32, i32
  }
  func.func @transform_11(%arg0: i32, %arg1: i32) -> (i32, i32) {
    %c0_i32 = arith.constant 0 : i32
    %c0_i32_0 = arith.constant 0 : i32
    %c0_i32_1 = arith.constant 0 : i32
    return %c0_i32, %c0_i32_0 : i32, i32
  }
  func.func @transform_12(%arg0: i32, %arg1: i32) -> (i32, i32) {
    %c0_i32 = arith.constant 0 : i32
    %c0_i32_0 = arith.constant 0 : i32
    %c0_i32_1 = arith.constant 0 : i32
    return %c0_i32, %c0_i32_0 : i32, i32
  }
  func.func @transform_13(%arg0: i32, %arg1: i32) -> (i32, i32) {
    %c0_i32 = arith.constant 0 : i32
    %c0_i32_0 = arith.constant 0 : i32
    return %arg0, %c0_i32 : i32, i32
  }
}

</mosaic_0001>

<llo_original>
// kernel: simple_nn_forward.1
$region0: #{simple_nn_forward.1}
  #allocation0 [shape = 'u32[]', space=smem, size = 0x4, offset = 0x4, fixed_abs, tag = 'smem constant byte address 0x4 - core index']
  #allocation1 [shape = 'u32[144,128]{1,0:T(1,128)}', space=vmem, size = 0x12000, scoped, tag = 'internal scratch']
  #allocation2 [shape = 'f32[8,1024]{1,0:T(8,128)}', space=vmem, size = 0x8000, scoped, tag = 'scratch operand']
  %s0 = inlined_call_operand.vmem [shape: f32[8,768], index: 0, kind: input, shape index: {}]
  %s1 = inlined_call_operand.hbm [shape: bf16[768,1024], index: 1, kind: input, shape index: {}]
  %s2 = inlined_call_operand.hbm [shape: f32[1,1024], index: 2, kind: input, shape index: {}]
  %s3 = inlined_call_operand.hbm [shape: bf16[1024,512], index: 3, kind: input, shape index: {}]
  %s4 = inlined_call_operand.hbm [shape: f32[1,512], index: 4, kind: input, shape index: {}]
  %s5 = inlined_call_operand.hbm [shape: bf16[512,256], index: 5, kind: input, shape index: {}]
  %s6 = inlined_call_operand.hbm [shape: f32[1,256], index: 6, kind: input, shape index: {}]
  %s7 = inlined_call_operand.hbm [shape: bf16[256,128], index: 7, kind: input, shape index: {}]
  %s8 = inlined_call_operand.hbm [shape: f32[1,128], index: 8, kind: input, shape index: {}]
  %s9 = inlined_call_operand.vmem [shape: bf16[128,64], index: 9, kind: input, shape index: {}]
  %s10 = inlined_call_operand.hbm [shape: f32[1,64], index: 10, kind: input, shape index: {}]
  %s11 = inlined_call_operand.hbm [shape: bf16[64,128], index: 11, kind: input, shape index: {}]
  %s12 = inlined_call_operand.hbm [shape: f32[1,128], index: 12, kind: input, shape index: {}]
  %s13 = inlined_call_operand.vmem [shape: f32[8,128], index: 13, kind: output, shape index: {}]
  %s14 = sld [smem:[#allocation0]]
  $region137: #{simple_nn_forward.1} parent=0
    _
  %s16 = ssub.s32 1, %s14
  %s17 = scalar_select 0, %s16, %s14
  $region1: #{simple_nn_forward.1} parent=0
    #allocation3 [shape = 'u8[1048576]{0}', space=vmem, size = 0x100000, scoped, tag = 'input window, operand 1']
    #allocation4 [shape = 's32[2]{0}', space=sflag, size = 0x8, scoped, tag = 'scoped memory for simple_nn_forward.1']
    #allocation5 [shape = 'u8[4096]{0}', space=vmem, size = 0x1000, scoped, tag = 'input window, operand 2, single buffered']
    #allocation6 [shape = 's32[1]{0}', space=sflag, size = 0x4, scoped, tag = 'scoped memory for simple_nn_forward.1']
    #allocation7 [shape = 'u8[1048576]{0}', space=vmem, size = 0x100000, scoped, tag = 'input window, operand 3, single buffered']
    #allocation8 [shape = 'u8[2048]{0}', space=vmem, size = 0x800, scoped, tag = 'input window, operand 4, single buffered']
    #allocation9 [shape = 's32[1]{0}', space=sflag, size = 0x4, scoped, tag = 'scoped memory for simple_nn_forward.1']
    #allocation10 [shape = 'u8[262144]{0}', space=vmem, size = 0x40000, scoped, tag = 'input window, operand 5, single buffered']
    #allocation11 [shape = 'u8[1024]{0}', space=vmem, size = 0x400, scoped, tag = 'input window, operand 6, single buffered']
    #allocation12 [shape = 's32[1]{0}', space=sflag, size = 0x4, scoped, tag = 'scoped memory for simple_nn_forward.1']
    #allocation13 [shape = 'u8[65536]{0}', space=vmem, size = 0x10000, scoped, tag = 'input window, operand 7, single buffered']
    #allocation14 [shape = 'u8[512]{0}', space=vmem, size = 0x400, scoped, tag = 'input window, operand 8, single buffered']
    #allocation15 [shape = 's32[1]{0}', space=sflag, size = 0x4, scoped, tag = 'scoped memory for simple_nn_forward.1']
    #allocation16 [shape = 'u8[512]{0}', space=vmem, size = 0x400, scoped, tag = 'input window, operand 10, single buffered']
    #allocation17 [shape = 'u8[16384]{0}', space=vmem, size = 0x4000, scoped, tag = 'input window, operand 11, single buffered']
    #allocation18 [shape = 's32[1]{0}', space=sflag, size = 0x4, scoped, tag = 'scoped memory for simple_nn_forward.1']
    #allocation19 [shape = 'u8[512]{0}', space=vmem, size = 0x400, scoped, tag = 'input window, operand 12, single buffered']
    %18 = vsyncpa [#allocation4], 0
    %s19 = scalar_lea.sflag [#allocation4], 1
    %20 = vsyncpa %s19, 0
    %21 = vsyncpa [#allocation6], 0
    %22 = vsyncpa [#allocation9], 0
    %23 = vsyncpa [#allocation12], 0
    %24 = vsyncpa [#allocation15], 0
    %25 = vsyncpa [#allocation18], 0
    loop: start=0, step=1, limit=5
    $region2: #{simple_nn_forward.1} parent=1 // loop_pre_header
      _
    $region3: #{simple_nn_forward.1} parent=1 // loop_header
      %s27 = sphi 0, %s31
      %p28 = scmp.ge.s32.totalorder %s27, 5
      %s34 = sphi 0, %s46
      %s35 = sphi 0, %s42
      %s36 = sphi 0, %s34
      %s37 = sphi 0, %s35
      %s38 = sphi 0, %s36
      %s39 = sphi 0, %s37
      %s51 = sphi 0, %s53
      %s54 = sphi 0, %s51
      %s55 = sphi 0, %s54
      %s71 = sphi 0, %s55
      %s77 = sphi 0, %s79
      %s80 = sphi 0, %s77
      %s81 = sphi 0, %s80
      %s97 = sphi 0, %s81
      %s101 = sphi 0, %s101
      %s103 = sphi 0, %s101
      %s104 = sphi 0, %s103
      %s118 = sphi 0, %s104
      %s122 = sphi 0, %s122
      %s124 = sphi 0, %s122
      %s125 = sphi 0, %s124
      %s139 = sphi 0, %s125
      %s143 = sphi 0, %s143
      %s145 = sphi 0, %s143
      %s146 = sphi 0, %s145
      %s160 = sphi 0, %s146
      %s164 = sphi 0, %s164
      %s166 = sphi 0, %s164
      %s167 = sphi 0, %s166
      %s181 = sphi 0, %s167
      %s185 = sphi 0, %s185
      %s187 = sphi 0, %s185
      %s188 = sphi 0, %s187
      %s202 = sphi 0, %s188
      %s206 = sphi 0, %s206
      %s208 = sphi 0, %s206
      %s209 = sphi 0, %s208
      %s223 = sphi 0, %s209
      %s227 = sphi 0, %s227
      %s229 = sphi 0, %s227
      %s230 = sphi 0, %s229
      %s244 = sphi 0, %s230
      %s248 = sphi 0, %s248
      %s250 = sphi 0, %s248
      %s251 = sphi 0, %s250
      %s265 = sphi 0, %s251
      %s269 = sphi 0, %s269
      %s271 = sphi 0, %s269
      %s272 = sphi 0, %s271
      %s286 = sphi 0, %s272
      %s290 = sphi 0, %s290
      %s292 = sphi 0, %s290
      %s293 = sphi 0, %s292
      %s307 = sphi 0, %s293
      %s311 = sphi 0, %s311
      %s313 = sphi 0, %s311
      %s314 = sphi 0, %s313
      %s328 = sphi 0, %s314
      %s334 = sphi 0, %s336
      %s337 = sphi 0, %s334
      %s338 = sphi 0, %s337
      %s354 = sphi 0, %s338
    $region4: #{simple_nn_forward.1} parent=1 // loop_header_branch
      %30 = sbr.rel (%p28) target = $region8
    $region5: #{simple_nn_forward.1} parent=1 // loop_body
      %s32 = ssub.s32 %s27, 1
      %s33 = ssub.s32 %s27, 2
      %s40 = sadd.s32 1, %s35
      %p41 = scmp.ge.s32.totalorder %s40, 3
      %s42 = scalar_select %p41, 0, %s40
      %s43 = sadd.s32 1, %s34
      %s44 = scalar_select %p41, %s43, %s34
      %p45 = scmp.ge.s32.totalorder %s44, 1
      %s46 = scalar_select %p45, 0, %s44
      %s47 = ssub.s32 %s34, %s46
      %s48 = ssub.s32 %s35, %s42
      %s49 = sor.u32 %s47, %s48
      %p50 = scmp.eq.s32.totalorder %s49, 0
      %s52 = sadd.s32 %s51, 1
      %s53 = scalar_select %p50, %s51, %s52
      %p56 = pneg %p50
      %p57 = scmp.eq.s32.totalorder %s27, 2
      %p58 = por %p56, %p57
      %p59 = scmp.ne.s32.totalorder %s51, %s54
      %p60 = scmp.eq.s32.totalorder %s27, 0
      %p61 = por %p59, %p60
      %p62 = scmp.ne.s32.totalorder %s51, %s54
      %p63 = scmp.eq.s32.totalorder %s32, 2
      %p64 = por %p62, %p63
      %p65 = scmp.ne.s32.totalorder %s54, %s55
      %p66 = scmp.eq.s32.totalorder %s32, 0
      %p67 = por %p65, %p66
      %p68 = scmp.ne.s32.totalorder %s54, %s55
      %p69 = scmp.eq.s32.totalorder %s33, 2
      %p70 = por %p68, %p69
      %p72 = scmp.ne.s32.totalorder %s55, %s71
      %p73 = scmp.eq.s32.totalorder %s33, 0
      %p74 = por %p72, %p73
      %s75 = ssub.s32 %s35, %s42
      %p76 = scmp.eq.s32.totalorder %s75, 0
      %s78 = sadd.s32 %s77, 1
      %s79 = scalar_select %p76, %s77, %s78
      %p82 = pneg %p76
      %p83 = scmp.eq.s32.totalorder %s27, 2
      %p84 = por %p82, %p83
      %p85 = scmp.ne.s32.totalorder %s77, %s80
      %p86 = scmp.eq.s32.totalorder %s27, 0
      %p87 = por %p85, %p86
      %p88 = scmp.ne.s32.totalorder %s77, %s80
      %p89 = scmp.eq.s32.totalorder %s32, 2
      %p90 = por %p88, %p89
      %p91 = scmp.ne.s32.totalorder %s80, %s81
      %p92 = scmp.eq.s32.totalorder %s32, 0
      %p93 = por %p91, %p92
      %p94 = scmp.ne.s32.totalorder %s80, %s81
      %p95 = scmp.eq.s32.totalorder %s33, 2
      %p96 = por %p94, %p95
      %p98 = scmp.ne.s32.totalorder %s81, %s97
      %p99 = scmp.eq.s32.totalorder %s33, 0
      %p100 = por %p98, %p99
      %s102 = sadd.s32 %s101, 1
      %p105 = scmp.eq.s32.totalorder %s27, 2
      %p106 = scmp.ne.s32.totalorder %s101, %s103
      %p107 = scmp.eq.s32.totalorder %s27, 0
      %p108 = por %p106, %p107
      %p109 = scmp.ne.s32.totalorder %s101, %s103
      %p110 = scmp.eq.s32.totalorder %s32, 2
      %p111 = por %p109, %p110
      %p112 = scmp.ne.s32.totalorder %s103, %s104
      %p113 = scmp.eq.s32.totalorder %s32, 0
      %p114 = por %p112, %p113
      %p115 = scmp.ne.s32.totalorder %s103, %s104
      %p116 = scmp.eq.s32.totalorder %s33, 2
      %p117 = por %p115, %p116
      %p119 = scmp.ne.s32.totalorder %s104, %s118
      %p120 = scmp.eq.s32.totalorder %s33, 0
      %p121 = por %p119, %p120
      %s123 = sadd.s32 %s122, 1
      %p126 = scmp.eq.s32.totalorder %s27, 2
      %p127 = scmp.ne.s32.totalorder %s122, %s124
      %p128 = scmp.eq.s32.totalorder %s27, 0
      %p129 = por %p127, %p128
      %p130 = scmp.ne.s32.totalorder %s122, %s124
      %p131 = scmp.eq.s32.totalorder %s32, 2
      %p132 = por %p130, %p131
      %p133 = scmp.ne.s32.totalorder %s124, %s125
      %p134 = scmp.eq.s32.totalorder %s32, 0
      %p135 = por %p133, %p134
      %p136 = scmp.ne.s32.totalorder %s124, %s125
      %p137 = scmp.eq.s32.totalorder %s33, 2
      %p138 = por %p136, %p137
      %p140 = scmp.ne.s32.totalorder %s125, %s139
      %p141 = scmp.eq.s32.totalorder %s33, 0
      %p142 = por %p140, %p141
      %s144 = sadd.s32 %s143, 1
      %p147 = scmp.eq.s32.totalorder %s27, 2
      %p148 = scmp.ne.s32.totalorder %s143, %s145
      %p149 = scmp.eq.s32.totalorder %s27, 0
      %p150 = por %p148, %p149
      %p151 = scmp.ne.s32.totalorder %s143, %s145
      %p152 = scmp.eq.s32.totalorder %s32, 2
      %p153 = por %p151, %p152
      %p154 = scmp.ne.s32.totalorder %s145, %s146
      %p155 = scmp.eq.s32.totalorder %s32, 0
      %p156 = por %p154, %p155
      %p157 = scmp.ne.s32.totalorder %s145, %s146
      %p158 = scmp.eq.s32.totalorder %s33, 2
      %p159 = por %p157, %p158
      %p161 = scmp.ne.s32.totalorder %s146, %s160
      %p162 = scmp.eq.s32.totalorder %s33, 0
      %p163 = por %p161, %p162
      %s165 = sadd.s32 %s164, 1
      %p168 = scmp.eq.s32.totalorder %s27, 2
      %p169 = scmp.ne.s32.totalorder %s164, %s166
      %p170 = scmp.eq.s32.totalorder %s27, 0
      %p171 = por %p169, %p170
      %p172 = scmp.ne.s32.totalorder %s164, %s166
      %p173 = scmp.eq.s32.totalorder %s32, 2
      %p174 = por %p172, %p173
      %p175 = scmp.ne.s32.totalorder %s166, %s167
      %p176 = scmp.eq.s32.totalorder %s32, 0
      %p177 = por %p175, %p176
      %p178 = scmp.ne.s32.totalorder %s166, %s167
      %p179 = scmp.eq.s32.totalorder %s33, 2
      %p180 = por %p178, %p179
      %p182 = scmp.ne.s32.totalorder %s167, %s181
      %p183 = scmp.eq.s32.totalorder %s33, 0
      %p184 = por %p182, %p183
      %s186 = sadd.s32 %s185, 1
      %p189 = scmp.eq.s32.totalorder %s27, 2
      %p190 = scmp.ne.s32.totalorder %s185, %s187
      %p191 = scmp.eq.s32.totalorder %s27, 0
      %p192 = por %p190, %p191
      %p193 = scmp.ne.s32.totalorder %s185, %s187
      %p194 = scmp.eq.s32.totalorder %s32, 2
      %p195 = por %p193, %p194
      %p196 = scmp.ne.s32.totalorder %s187, %s188
      %p197 = scmp.eq.s32.totalorder %s32, 0
      %p198 = por %p196, %p197
      %p199 = scmp.ne.s32.totalorder %s187, %s188
      %p200 = scmp.eq.s32.totalorder %s33, 2
      %p201 = por %p199, %p200
      %p203 = scmp.ne.s32.totalorder %s188, %s202
      %p204 = scmp.eq.s32.totalorder %s33, 0
      %p205 = por %p203, %p204
      %s207 = sadd.s32 %s206, 1
      %p210 = scmp.eq.s32.totalorder %s27, 2
      %p211 = scmp.ne.s32.totalorder %s206, %s208
      %p212 = scmp.eq.s32.totalorder %s27, 0
      %p213 = por %p211, %p212
      %p214 = scmp.ne.s32.totalorder %s206, %s208
      %p215 = scmp.eq.s32.totalorder %s32, 2
      %p216 = por %p214, %p215
      %p217 = scmp.ne.s32.totalorder %s208, %s209
      %p218 = scmp.eq.s32.totalorder %s32, 0
      %p219 = por %p217, %p218
      %p220 = scmp.ne.s32.totalorder %s208, %s209
      %p221 = scmp.eq.s32.totalorder %s33, 2
      %p222 = por %p220, %p221
      %p224 = scmp.ne.s32.totalorder %s209, %s223
      %p225 = scmp.eq.s32.totalorder %s33, 0
      %p226 = por %p224, %p225
      %s228 = sadd.s32 %s227, 1
      %p231 = scmp.eq.s32.totalorder %s27, 2
      %p232 = scmp.ne.s32.totalorder %s227, %s229
      %p233 = scmp.eq.s32.totalorder %s27, 0
      %p234 = por %p232, %p233
      %p235 = scmp.ne.s32.totalorder %s227, %s229
      %p236 = scmp.eq.s32.totalorder %s32, 2
      %p237 = por %p235, %p236
      %p238 = scmp.ne.s32.totalorder %s229, %s230
      %p239 = scmp.eq.s32.totalorder %s32, 0
      %p240 = por %p238, %p239
      %p241 = scmp.ne.s32.totalorder %s229, %s230
      %p242 = scmp.eq.s32.totalorder %s33, 2
      %p243 = por %p241, %p242
      %p245 = scmp.ne.s32.totalorder %s230, %s244
      %p246 = scmp.eq.s32.totalorder %s33, 0
      %p247 = por %p245, %p246
      %s249 = sadd.s32 %s248, 1
      %p252 = scmp.eq.s32.totalorder %s27, 2
      %p253 = scmp.ne.s32.totalorder %s248, %s250
      %p254 = scmp.eq.s32.totalorder %s27, 0
      %p255 = por %p253, %p254
      %p256 = scmp.ne.s32.totalorder %s248, %s250
      %p257 = scmp.eq.s32.totalorder %s32, 2
      %p258 = por %p256, %p257
      %p259 = scmp.ne.s32.totalorder %s250, %s251
      %p260 = scmp.eq.s32.totalorder %s32, 0
      %p261 = por %p259, %p260
      %p262 = scmp.ne.s32.totalorder %s250, %s251
      %p263 = scmp.eq.s32.totalorder %s33, 2
      %p264 = por %p262, %p263
      %p266 = scmp.ne.s32.totalorder %s251, %s265
      %p267 = scmp.eq.s32.totalorder %s33, 0
      %p268 = por %p266, %p267
      %s270 = sadd.s32 %s269, 1
      %p273 = scmp.eq.s32.totalorder %s27, 2
      %p274 = scmp.ne.s32.totalorder %s269, %s271
      %p275 = scmp.eq.s32.totalorder %s27, 0
      %p276 = por %p274, %p275
      %p277 = scmp.ne.s32.totalorder %s269, %s271
      %p278 = scmp.eq.s32.totalorder %s32, 2
      %p279 = por %p277, %p278
      %p280 = scmp.ne.s32.totalorder %s271, %s272
      %p281 = scmp.eq.s32.totalorder %s32, 0
      %p282 = por %p280, %p281
      %p283 = scmp.ne.s32.totalorder %s271, %s272
      %p284 = scmp.eq.s32.totalorder %s33, 2
      %p285 = por %p283, %p284
      %p287 = scmp.ne.s32.totalorder %s272, %s286
      %p288 = scmp.eq.s32.totalorder %s33, 0
      %p289 = por %p287, %p288
      %s291 = sadd.s32 %s290, 1
      %p294 = scmp.eq.s32.totalorder %s27, 2
      %p295 = scmp.ne.s32.totalorder %s290, %s292
      %p296 = scmp.eq.s32.totalorder %s27, 0
      %p297 = por %p295, %p296
      %p298 = scmp.ne.s32.totalorder %s290, %s292
      %p299 = scmp.eq.s32.totalorder %s32, 2
      %p300 = por %p298, %p299
      %p301 = scmp.ne.s32.totalorder %s292, %s293
      %p302 = scmp.eq.s32.totalorder %s32, 0
      %p303 = por %p301, %p302
      %p304 = scmp.ne.s32.totalorder %s292, %s293
      %p305 = scmp.eq.s32.totalorder %s33, 2
      %p306 = por %p304, %p305
      %p308 = scmp.ne.s32.totalorder %s293, %s307
      %p309 = scmp.eq.s32.totalorder %s33, 0
      %p310 = por %p308, %p309
      %s312 = sadd.s32 %s311, 1
      %p315 = scmp.eq.s32.totalorder %s27, 2
      %p316 = scmp.ne.s32.totalorder %s311, %s313
      %p317 = scmp.eq.s32.totalorder %s27, 0
      %p318 = por %p316, %p317
      %p319 = scmp.ne.s32.totalorder %s311, %s313
      %p320 = scmp.eq.s32.totalorder %s32, 2
      %p321 = por %p319, %p320
      %p322 = scmp.ne.s32.totalorder %s313, %s314
      %p323 = scmp.eq.s32.totalorder %s32, 0
      %p324 = por %p322, %p323
      %p325 = scmp.ne.s32.totalorder %s313, %s314
      %p326 = scmp.eq.s32.totalorder %s33, 2
      %p327 = por %p325, %p326
      %p329 = scmp.ne.s32.totalorder %s314, %s328
      %p330 = scmp.eq.s32.totalorder %s33, 0
      %p331 = por %p329, %p330
      %s332 = ssub.s32 %s34, %s46
      %p333 = scmp.eq.s32.totalorder %s332, 0
      %s335 = sadd.s32 %s334, 1
      %s336 = scalar_select %p333, %s334, %s335
      %p339 = pneg %p333
      %p340 = scmp.eq.s32.totalorder %s27, 2
      %p341 = por %p339, %p340
      %p342 = scmp.ne.s32.totalorder %s334, %s337
      %p343 = scmp.eq.s32.totalorder %s27, 0
      %p344 = por %p342, %p343
      %p345 = scmp.ne.s32.totalorder %s334, %s337
      %p346 = scmp.eq.s32.totalorder %s32, 2
      %p347 = por %p345, %p346
      %p348 = scmp.ne.s32.totalorder %s337, %s338
      %p349 = scmp.eq.s32.totalorder %s32, 0
      %p350 = por %p348, %p349
      %p351 = scmp.ne.s32.totalorder %s337, %s338
      %p352 = scmp.eq.s32.totalorder %s33, 2
      %p353 = por %p351, %p352
      %p355 = scmp.ne.s32.totalorder %s338, %s354
      %p356 = scmp.eq.s32.totalorder %s33, 0
      %p357 = por %p355, %p356
      %p358 = scmp.le.s32.totalorder 1, %s27
      %p359 = scmp.lt.s32.totalorder %s27, 4
      %p360 = pnand %p358, %p359
      %p361 = pneg %p360
      // Predicated region
      $region9: #{simple_nn_forward.1} parent=5 // pred_check
        _
      $region10: #{simple_nn_forward.1} parent=5 // pred_check_branch
        %363 = sbr.rel (%p360) target = $region12
      $region11: #{simple_nn_forward.1} parent=5 // pred_region
        %s364 = ssub.s32 %s27, 1
        // Predicated region
        $region13: #{simple_nn_forward.1} parent=11 // pred_check
          %p365 = pneg %p114
        $region14: #{simple_nn_forward.1} parent=11 // pred_check_branch
          %367 = sbr.rel (%p365) target = $region16
        $region15: #{simple_nn_forward.1} parent=11 // pred_region
          %s369 = ssub.s32 128, 128
          %370 = vsyncadd [#allocation6], %s369
          %s372 = sshll.u32 [#allocation5], 4
          %s373 = int_to_ptr.vmem [resolvable:$true] %s372
          %375 = dma.hbm_to_vmem [thread:$0]  %s2, 128, %s373, [#allocation6]
        $region16: #{simple_nn_forward.1} parent=11 // pred_fallthru
          _
        // Predicated region
        $region17: #{simple_nn_forward.1} parent=11 // pred_check
          %p376 = pneg %p135
        $region18: #{simple_nn_forward.1} parent=11 // pred_check_branch
          %378 = sbr.rel (%p376) target = $region20
        $region19: #{simple_nn_forward.1} parent=11 // pred_region
          %s380 = ssub.s32 32768, 32768
          %381 = vsyncadd [#allocation6], %s380
          %s382 = sshll.u32 [#allocation7], 4
          %s383 = int_to_ptr.vmem [resolvable:$true] %s382
          %388 = dma.hbm_to_vmem [thread:$0]  %s3, 32768, %s383, [#allocation6], 256, 256, 16
        $region20: #{simple_nn_forward.1} parent=11 // pred_fallthru
          _
        // Predicated region
        $region21: #{simple_nn_forward.1} parent=11 // pred_check
          %p389 = pneg %p156
        $region22: #{simple_nn_forward.1} parent=11 // pred_check_branch
          %391 = sbr.rel (%p389) target = $region24
        $region23: #{simple_nn_forward.1} parent=11 // pred_region
          %s393 = ssub.s32 64, 64
          %394 = vsyncadd [#allocation9], %s393
          %s396 = sshll.u32 [#allocation8], 4
          %s397 = int_to_ptr.vmem [resolvable:$true] %s396
          %399 = dma.hbm_to_vmem [thread:$0]  %s4, 64, %s397, [#allocation9]
        $region24: #{simple_nn_forward.1} parent=11 // pred_fallthru
          _
        // Predicated region
        $region25: #{simple_nn_forward.1} parent=11 // pred_check
          %p400 = pneg %p177
        $region26: #{simple_nn_forward.1} parent=11 // pred_check_branch
          %402 = sbr.rel (%p400) target = $region28
        $region27: #{simple_nn_forward.1} parent=11 // pred_region
          %s404 = ssub.s32 8192, 8192
          %405 = vsyncadd [#allocation9], %s404
          %s406 = sshll.u32 [#allocation10], 4
          %s407 = int_to_ptr.vmem [resolvable:$true] %s406
          %412 = dma.hbm_to_vmem [thread:$0]  %s5, 8192, %s407, [#allocation9], 128, 128, 8
        $region28: #{simple_nn_forward.1} parent=11 // pred_fallthru
          _
        // Predicated region
        $region29: #{simple_nn_forward.1} parent=11 // pred_check
          %p413 = pneg %p198
        $region30: #{simple_nn_forward.1} parent=11 // pred_check_branch
          %415 = sbr.rel (%p413) target = $region32
        $region31: #{simple_nn_forward.1} parent=11 // pred_region
          %s417 = ssub.s32 32, 32
          %418 = vsyncadd [#allocation12], %s417
          %s420 = sshll.u32 [#allocation11], 4
          %s421 = int_to_ptr.vmem [resolvable:$true] %s420
          %423 = dma.hbm_to_vmem [thread:$0]  %s6, 32, %s421, [#allocation12]
        $region32: #{simple_nn_forward.1} parent=11 // pred_fallthru
          _
        // Predicated region
        $region33: #{simple_nn_forward.1} parent=11 // pred_check
          %p424 = pneg %p219
        $region34: #{simple_nn_forward.1} parent=11 // pred_check_branch
          %426 = sbr.rel (%p424) target = $region36
        $region35: #{simple_nn_forward.1} parent=11 // pred_region
          %s428 = ssub.s32 2048, 2048
          %429 = vsyncadd [#allocation12], %s428
          %s430 = sshll.u32 [#allocation13], 4
          %s431 = int_to_ptr.vmem [resolvable:$true] %s430
          %436 = dma.hbm_to_vmem [thread:$0]  %s7, 2048, %s431, [#allocation12], 64, 64, 4
        $region36: #{simple_nn_forward.1} parent=11 // pred_fallthru
          _
        // Predicated region
        $region37: #{simple_nn_forward.1} parent=11 // pred_check
          %p437 = pneg %p240
        $region38: #{simple_nn_forward.1} parent=11 // pred_check_branch
          %439 = sbr.rel (%p437) target = $region40
        $region39: #{simple_nn_forward.1} parent=11 // pred_region
          %s441 = ssub.s32 16, 16
          %442 = vsyncadd [#allocation15], %s441
          %s444 = sshll.u32 [#allocation14], 4
          %s445 = int_to_ptr.vmem [resolvable:$true] %s444
          %447 = dma.hbm_to_vmem [thread:$0]  %s8, 16, %s445, [#allocation15]
        $region40: #{simple_nn_forward.1} parent=11 // pred_fallthru
          _
        // Predicated region
        $region41: #{simple_nn_forward.1} parent=11 // pred_check
          %p448 = pneg %p261
        $region42: #{simple_nn_forward.1} parent=11 // pred_check_branch
          %450 = sbr.rel (%p448) target = $region44
        $region43: #{simple_nn_forward.1} parent=11 // pred_region
          _
        $region44: #{simple_nn_forward.1} parent=11 // pred_fallthru
          _
        // Predicated region
        $region45: #{simple_nn_forward.1} parent=11 // pred_check
          %p451 = pneg %p282
        $region46: #{simple_nn_forward.1} parent=11 // pred_check_branch
          %453 = sbr.rel (%p451) target = $region48
        $region47: #{simple_nn_forward.1} parent=11 // pred_region
          %s455 = ssub.s32 16, 16
          %456 = vsyncadd [#allocation15], %s455
          %s458 = sshll.u32 [#allocation16], 4
          %s459 = int_to_ptr.vmem [resolvable:$true] %s458
          %461 = dma.hbm_to_vmem [thread:$0]  %s10, 16, %s459, [#allocation15]
        $region48: #{simple_nn_forward.1} parent=11 // pred_fallthru
          _
        // Predicated region
        $region49: #{simple_nn_forward.1} parent=11 // pred_check
          %p462 = pneg %p303
        $region50: #{simple_nn_forward.1} parent=11 // pred_check_branch
          %464 = sbr.rel (%p462) target = $region52
        $region51: #{simple_nn_forward.1} parent=11 // pred_region
          %s466 = ssub.s32 512, 512
          %467 = vsyncadd [#allocation18], %s466
          %s468 = sshll.u32 [#allocation17], 4
          %s469 = int_to_ptr.vmem [resolvable:$true] %s468
          %474 = dma.hbm_to_vmem [thread:$0]  %s11, 512, %s469, [#allocation18], 64, 64, 4
        $region52: #{simple_nn_forward.1} parent=11 // pred_fallthru
          _
        // Predicated region
        $region53: #{simple_nn_forward.1} parent=11 // pred_check
          %p475 = pneg %p324
        $region54: #{simple_nn_forward.1} parent=11 // pred_check_branch
          %477 = sbr.rel (%p475) target = $region56
        $region55: #{simple_nn_forward.1} parent=11 // pred_region
          %s479 = ssub.s32 16, 16
          %480 = vsyncadd [#allocation18], %s479
          %s482 = sshll.u32 [#allocation19], 4
          %s483 = int_to_ptr.vmem [resolvable:$true] %s482
          %485 = dma.hbm_to_vmem [thread:$0]  %s12, 16, %s483, [#allocation18]
        $region56: #{simple_nn_forward.1} parent=11 // pred_fallthru
          _
      $region12: #{simple_nn_forward.1} parent=5 // pred_fallthru
        _
      %p486 = scmp.lt.s32.totalorder %s27, 3
      // Predicated region
      $region57: #{simple_nn_forward.1} parent=5 // pred_check
        %p487 = pneg %p486
      $region58: #{simple_nn_forward.1} parent=5 // pred_check_branch
        %489 = sbr.rel (%p487) target = $region60
      $region59: #{simple_nn_forward.1} parent=5 // pred_region
        // Predicated region
        $region61: #{simple_nn_forward.1} parent=59 // pred_check
          %p490 = pneg %p61
        $region62: #{simple_nn_forward.1} parent=59 // pred_check_branch
          %492 = sbr.rel (%p490) target = $region64
        $region63: #{simple_nn_forward.1} parent=59 // pred_region
          %s493 = smul.u32 2, %s35
          %p494 = scmp.lt.s32.totalorder %s34, 0
          %s495 = scalar_select %p494, %s34, 0
          %p496 = scmp.lt.s32.totalorder %s493, 5
          %s497 = scalar_select %p496, %s493, 5
          %s498 = smul.addr %s495, 6
          %s499 = sadd.s32 %s497, %s498
          %s500 = smul.addr %s499, 8
          %s501 = scalar_lea.vmem %s0, %s500
          %s502 = smul.u32 2, %s35
        $region64: #{simple_nn_forward.1} parent=59 // pred_fallthru
          _
        // Predicated region
        $region65: #{simple_nn_forward.1} parent=59 // pred_check
          %p503 = pneg %p87
        $region66: #{simple_nn_forward.1} parent=59 // pred_check_branch
          %505 = sbr.rel (%p503) target = $region68
        $region67: #{simple_nn_forward.1} parent=59 // pred_region
          %s506 = sand.u32 %s77, 1
          %s507 = scalar_lea.sflag [#allocation4], %s506
          %s508 = sand.u32 %s77, 1
          %s509 = smul.addr %s508, 1024
          %s510 = scalar_lea.vmem [#allocation3], %s509
          %s511 = smul.u32 32, %s35
          %s513 = ssub.s32 16384, 16384
          %514 = vsyncadd %s507, %s513
          %s515 = smul.addr %s511, 8
          %s516 = smul.addr %s515, 64
          %s517 = scalar_lea.hbm %s1, %s516
          %s518 = sshll.u32 %s510, 4
          %s519 = int_to_ptr.vmem [resolvable:$true] %s518
          %524 = dma.hbm_to_vmem [thread:$0]  %s517, 16384, %s519, %s507, 512, 512, 32
        $region68: #{simple_nn_forward.1} parent=59 // pred_fallthru
          _
      $region60: #{simple_nn_forward.1} parent=5 // pred_fallthru
        _
      %p525 = scmp.le.s32.totalorder 1, %s27
      %p526 = scmp.lt.s32.totalorder %s27, 4
      %p527 = pnand %p525, %p526
      %p528 = pneg %p527
      // Predicated region
      $region69: #{simple_nn_forward.1} parent=5 // pred_check
        _
      $region70: #{simple_nn_forward.1} parent=5 // pred_check_branch
        %530 = sbr.rel (%p527) target = $region72
      $region71: #{simple_nn_forward.1} parent=5 // pred_region
        %s531 = ssub.s32 %s27, 1
        %s532 = sand.u32 %s80, 1
        %s533 = scalar_lea.sflag [#allocation4], %s532
        %s534 = sand.u32 %s80, 1
        %s535 = smul.addr %s534, 1024
        %s536 = scalar_lea.vmem [#allocation3], %s535
        // Predicated region
        $region73: #{simple_nn_forward.1} parent=71 // pred_check
          %p537 = pneg %p93
        $region74: #{simple_nn_forward.1} parent=71 // pred_check_branch
          %539 = sbr.rel (%p537) target = $region76
        $region75: #{simple_nn_forward.1} parent=71 // pred_region
          %540 = dma.done %s533, 16384
        $region76: #{simple_nn_forward.1} parent=71 // pred_fallthru
          _
        // Predicated region
        $region77: #{simple_nn_forward.1} parent=71 // pred_check
          %p541 = pneg %p114
        $region78: #{simple_nn_forward.1} parent=71 // pred_check_branch
          %543 = sbr.rel (%p541) target = $region80
        $region79: #{simple_nn_forward.1} parent=71 // pred_region
          %544 = dma.done [#allocation6], 128
        $region80: #{simple_nn_forward.1} parent=71 // pred_fallthru
          _
        // Predicated region
        $region81: #{simple_nn_forward.1} parent=71 // pred_check
          %p545 = pneg %p135
        $region82: #{simple_nn_forward.1} parent=71 // pred_check_branch
          %547 = sbr.rel (%p545) target = $region84
        $region83: #{simple_nn_forward.1} parent=71 // pred_region
          %548 = dma.done [#allocation6], 32768
        $region84: #{simple_nn_forward.1} parent=71 // pred_fallthru
          _
        // Predicated region
        $region85: #{simple_nn_forward.1} parent=71 // pred_check
          %p549 = pneg %p156
        $region86: #{simple_nn_forward.1} parent=71 // pred_check_branch
          %551 = sbr.rel (%p549) target = $region88
        $region87: #{simple_nn_forward.1} parent=71 // pred_region
          %552 = dma.done [#allocation9], 64
        $region88: #{simple_nn_forward.1} parent=71 // pred_fallthru
          _
        // Predicated region
        $region89: #{simple_nn_forward.1} parent=71 // pred_check
          %p553 = pneg %p177
        $region90: #{simple_nn_forward.1} parent=71 // pred_check_branch
          %555 = sbr.rel (%p553) target = $region92
        $region91: #{simple_nn_forward.1} parent=71 // pred_region
          %556 = dma.done [#allocation9], 8192
        $region92: #{simple_nn_forward.1} parent=71 // pred_fallthru
          _
        // Predicated region
        $region93: #{simple_nn_forward.1} parent=71 // pred_check
          %p557 = pneg %p198
        $region94: #{simple_nn_forward.1} parent=71 // pred_check_branch
          %559 = sbr.rel (%p557) target = $region96
        $region95: #{simple_nn_forward.1} parent=71 // pred_region
          %560 = dma.done [#allocation12], 32
        $region96: #{simple_nn_forward.1} parent=71 // pred_fallthru
          _
        // Predicated region
        $region97: #{simple_nn_forward.1} parent=71 // pred_check
          %p561 = pneg %p219
        $region98: #{simple_nn_forward.1} parent=71 // pred_check_branch
          %563 = sbr.rel (%p561) target = $region100
        $region99: #{simple_nn_forward.1} parent=71 // pred_region
          %564 = dma.done [#allocation12], 2048
        $region100: #{simple_nn_forward.1} parent=71 // pred_fallthru
          _
        // Predicated region
        $region101: #{simple_nn_forward.1} parent=71 // pred_check
          %p565 = pneg %p240
        $region102: #{simple_nn_forward.1} parent=71 // pred_check_branch
          %567 = sbr.rel (%p565) target = $region104
        $region103: #{simple_nn_forward.1} parent=71 // pred_region
          %568 = dma.done [#allocation15], 16
        $region104: #{simple_nn_forward.1} parent=71 // pred_fallthru
          _
        // Predicated region
        $region105: #{simple_nn_forward.1} parent=71 // pred_check
          %p569 = pneg %p282
        $region106: #{simple_nn_forward.1} parent=71 // pred_check_branch
          %571 = sbr.rel (%p569) target = $region108
        $region107: #{simple_nn_forward.1} parent=71 // pred_region
          %572 = dma.done [#allocation15], 16
        $region108: #{simple_nn_forward.1} parent=71 // pred_fallthru
          _
        // Predicated region
        $region109: #{simple_nn_forward.1} parent=71 // pred_check
          %p573 = pneg %p303
        $region110: #{simple_nn_forward.1} parent=71 // pred_check_branch
          %575 = sbr.rel (%p573) target = $region112
        $region111: #{simple_nn_forward.1} parent=71 // pred_region
          %576 = dma.done [#allocation18], 512
        $region112: #{simple_nn_forward.1} parent=71 // pred_fallthru
          _
        // Predicated region
        $region113: #{simple_nn_forward.1} parent=71 // pred_check
          %p577 = pneg %p324
        $region114: #{simple_nn_forward.1} parent=71 // pred_check_branch
          %579 = sbr.rel (%p577) target = $region116
        $region115: #{simple_nn_forward.1} parent=71 // pred_region
          %580 = dma.done [#allocation18], 16
        $region116: #{simple_nn_forward.1} parent=71 // pred_fallthru
          _
        %s581 = smul.u32 2, %s37
        %p582 = scmp.lt.s32.totalorder %s36, 0
        %s583 = scalar_select %p582, %s36, 0
        %p584 = scmp.lt.s32.totalorder %s581, 5
        %s585 = scalar_select %p584, %s581, 5
        %s586 = smul.addr %s583, 6
        %s587 = sadd.s32 %s585, %s586
        %s588 = smul.addr %s587, 8
        %s589 = scalar_lea.vmem %s0, %s588
        %p590 = pneg %p67
        %p591 = pneg %p64
        %s592 = sand.u32 %s80, 1
        %s593 = scalar_lea.sflag [#allocation4], %s592
        %s594 = sand.u32 %s80, 1
        %s595 = smul.addr %s594, 1024
        %s596 = scalar_lea.vmem [#allocation3], %s595
        %p597 = pneg %p93
        %p598 = pneg %p90
        %p599 = pneg %p114
        %p600 = pneg %p111
        %p601 = pneg %p135
        %p602 = pneg %p132
        %p603 = pneg %p156
        %p604 = pneg %p153
        %p605 = pneg %p177
        %p606 = pneg %p174
        %p607 = pneg %p198
        %p608 = pneg %p195
        %p609 = pneg %p219
        %p610 = pneg %p216
        %p611 = pneg %p240
        %p612 = pneg %p237
        %p613 = pneg %p261
        %p614 = pneg %p258
        %p615 = pneg %p282
        %p616 = pneg %p279
        %p617 = pneg %p303
        %p618 = pneg %p300
        %p619 = pneg %p324
        %p620 = pneg %p321
        %p621 = pneg %p350
        %p622 = pneg %p347
        %p623 = scmp.lt.s32.totalorder %s36, 0
        %s624 = scalar_select %p623, %s36, 0
        %s625 = smul.addr %s624, 8
        %s626 = scalar_lea.vmem %s13, %s625
        %s627 = smul.u32 2, %s37
        %p628 = scmp.lt.s32.totalorder %s36, 0
        %s629 = scalar_select %p628, %s36, 0
        %p630 = scmp.lt.s32.totalorder %s627, 5
        %s631 = scalar_select %p630, %s627, 5
        %s632 = smul.addr %s629, 6
        %s633 = sadd.s32 %s631, %s632
        %s634 = smul.addr %s633, 8
        %s635 = scalar_lea.vmem %s0, %s634
        %s636 = smul.u32 2, %s37
        %s637 = smul.u32 32, %s37
        %p638 = scmp.lt.s32.totalorder %s36, 0
        %s639 = scalar_select %p638, %s36, 0
        %s640 = smul.addr %s639, 8
        %s641 = scalar_lea.vmem %s13, %s640
        %p643 = scmp.eq.s32.totalorder %s37, 0
        // Predicated region
        $region117: #{simple_nn_forward.1} parent=71 // pred_check
          %p644 = pneg %p643
        $region118: #{simple_nn_forward.1} parent=71 // pred_check_branch
          %646 = sbr.rel (%p644) target = $region120
        $region119: #{simple_nn_forward.1} parent=71 // pred_region
          %647 = vst [vmem:[#allocation2] sm:$0xff] 0.0
          %648 = vst [vmem:[#allocation2 + $0x8] sm:$0xff] 0.0
          %649 = vst [vmem:[#allocation2 + $0x10] sm:$0xff] 0.0
          %650 = vst [vmem:[#allocation2 + $0x18] sm:$0xff] 0.0
          %651 = vst [vmem:[#allocation2 + $0x20] sm:$0xff] 0.0
          %652 = vst [vmem:[#allocation2 + $0x28] sm:$0xff] 0.0
          %653 = vst [vmem:[#allocation2 + $0x30] sm:$0xff] 0.0
          %654 = vst [vmem:[#allocation2 + $0x38] sm:$0xff] 0.0
        $region120: #{simple_nn_forward.1} parent=71 // pred_fallthru
          _
        %v655 = vld [vmem:[#allocation2] sm:$0xff]
        %v656 = vld [vmem:[#allocation2 + $0x8] sm:$0xff]
        %v657 = vld [vmem:[#allocation2 + $0x10] sm:$0xff]
        %v658 = vld [vmem:[#allocation2 + $0x18] sm:$0xff]
        %v659 = vld [vmem:[#allocation2 + $0x20] sm:$0xff]
        %v660 = vld [vmem:[#allocation2 + $0x28] sm:$0xff]
        %v661 = vld [vmem:[#allocation2 + $0x30] sm:$0xff]
        %v662 = vld [vmem:[#allocation2 + $0x38] sm:$0xff]
        %v663 = vld [vmem:[%s635] sm:$0xff]
        %v664 = vld [vmem:[%s635 + $0x8] sm:$0xff]
        %v665 = vpack.c.bf16 %v663, %v663
        %v666 = vpack.c.bf16 %v664, %v664
        %v667 = vld [vmem:[%s536] sm:$0xff]
        %v668 = vld [vmem:[%s536 + $0x8] sm:$0xff]
        %v669 = vld [vmem:[%s536 + $0x10] sm:$0xff]
        %v670 = vld [vmem:[%s536 + $0x18] sm:$0xff]
        %v671 = vld [vmem:[%s536 + $0x20] sm:$0xff]
        %v672 = vld [vmem:[%s536 + $0x28] sm:$0xff]
        %v673 = vld [vmem:[%s536 + $0x30] sm:$0xff]
        %v674 = vld [vmem:[%s536 + $0x38] sm:$0xff]
        %v675 = vld [vmem:[%s536 + $0x40] sm:$0xff]
        %v676 = vld [vmem:[%s536 + $0x48] sm:$0xff]
        %v677 = vld [vmem:[%s536 + $0x50] sm:$0xff]
        %v678 = vld [vmem:[%s536 + $0x58] sm:$0xff]
        %v679 = vld [vmem:[%s536 + $0x60] sm:$0xff]
        %v680 = vld [vmem:[%s536 + $0x68] sm:$0xff]
        %v681 = vld [vmem:[%s536 + $0x70] sm:$0xff]
        %v682 = vld [vmem:[%s536 + $0x78] sm:$0xff]
        %v683 = vld [vmem:[%s536 + $0x80] sm:$0xff]
        %v684 = vld [vmem:[%s536 + $0x88] sm:$0xff]
        %v685 = vld [vmem:[%s536 + $0x90] sm:$0xff]
        %v686 = vld [vmem:[%s536 + $0x98] sm:$0xff]
        %v687 = vld [vmem:[%s536 + $0xa0] sm:$0xff]
        %v688 = vld [vmem:[%s536 + $0xa8] sm:$0xff]
        %v689 = vld [vmem:[%s536 + $0xb0] sm:$0xff]
        %v690 = vld [vmem:[%s536 + $0xb8] sm:$0xff]
        %v691 = vld [vmem:[%s536 + $0xc0] sm:$0xff]
        %v692 = vld [vmem:[%s536 + $0xc8] sm:$0xff]
        %v693 = vld [vmem:[%s536 + $0xd0] sm:$0xff]
        %v694 = vld [vmem:[%s536 + $0xd8] sm:$0xff]
        %v695 = vld [vmem:[%s536 + $0xe0] sm:$0xff]
        %v696 = vld [vmem:[%s536 + $0xe8] sm:$0xff]
        %v697 = vld [vmem:[%s536 + $0xf0] sm:$0xff]
        %v698 = vld [vmem:[%s536 + $0xf8] sm:$0xff]
        %v699 = vld [vmem:[%s536 + $0x100] sm:$0xff]
        %v700 = vld [vmem:[%s536 + $0x108] sm:$0xff]
        %v701 = vld [vmem:[%s536 + $0x110] sm:$0xff]
        %v702 = vld [vmem:[%s536 + $0x118] sm:$0xff]
        %v703 = vld [vmem:[%s536 + $0x120] sm:$0xff]
        %v704 = vld [vmem:[%s536 + $0x128] sm:$0xff]
        %v705 = vld [vmem:[%s536 + $0x130] sm:$0xff]
        %v706 = vld [vmem:[%s536 + $0x138] sm:$0xff]
        %v707 = vld [vmem:[%s536 + $0x140] sm:$0xff]
        %v708 = vld [vmem:[%s536 + $0x148] sm:$0xff]
        %v709 = vld [vmem:[%s536 + $0x150] sm:$0xff]
        %v710 = vld [vmem:[%s536 + $0x158] sm:$0xff]
        %v711 = vld [vmem:[%s536 + $0x160] sm:$0xff]
        %v712 = vld [vmem:[%s536 + $0x168] sm:$0xff]
        %v713 = vld [vmem:[%s536 + $0x170] sm:$0xff]
        %v714 = vld [vmem:[%s536 + $0x178] sm:$0xff]
        %v715 = vld [vmem:[%s536 + $0x180] sm:$0xff]
        %v716 = vld [vmem:[%s536 + $0x188] sm:$0xff]
        %v717 = vld [vmem:[%s536 + $0x190] sm:$0xff]
        %v718 = vld [vmem:[%s536 + $0x198] sm:$0xff]
        %v719 = vld [vmem:[%s536 + $0x1a0] sm:$0xff]
        %v720 = vld [vmem:[%s536 + $0x1a8] sm:$0xff]
        %v721 = vld [vmem:[%s536 + $0x1b0] sm:$0xff]
        %v722 = vld [vmem:[%s536 + $0x1b8] sm:$0xff]
        %v723 = vld [vmem:[%s536 + $0x1c0] sm:$0xff]
        %v724 = vld [vmem:[%s536 + $0x1c8] sm:$0xff]
        %v725 = vld [vmem:[%s536 + $0x1d0] sm:$0xff]
        %v726 = vld [vmem:[%s536 + $0x1d8] sm:$0xff]
        %v727 = vld [vmem:[%s536 + $0x1e0] sm:$0xff]
        %v728 = vld [vmem:[%s536 + $0x1e8] sm:$0xff]
        %v729 = vld [vmem:[%s536 + $0x1f0] sm:$0xff]
        %v730 = vld [vmem:[%s536 + $0x1f8] sm:$0xff]
        %v731 = vld [vmem:[%s536 + $0x200] sm:$0xff]
        %v732 = vld [vmem:[%s536 + $0x208] sm:$0xff]
        %v733 = vld [vmem:[%s536 + $0x210] sm:$0xff]
        %v734 = vld [vmem:[%s536 + $0x218] sm:$0xff]
        %v735 = vld [vmem:[%s536 + $0x220] sm:$0xff]
        %v736 = vld [vmem:[%s536 + $0x228] sm:$0xff]
        %v737 = vld [vmem:[%s536 + $0x230] sm:$0xff]
        %v738 = vld [vmem:[%s536 + $0x238] sm:$0xff]
        %v739 = vld [vmem:[%s536 + $0x240] sm:$0xff]
        %v740 = vld [vmem:[%s536 + $0x248] sm:$0xff]
        %v741 = vld [vmem:[%s536 + $0x250] sm:$0xff]
        %v742 = vld [vmem:[%s536 + $0x258] sm:$0xff]
        %v743 = vld [vmem:[%s536 + $0x260] sm:$0xff]
        %v744 = vld [vmem:[%s536 + $0x268] sm:$0xff]
        %v745 = vld [vmem:[%s536 + $0x270] sm:$0xff]
        %v746 = vld [vmem:[%s536 + $0x278] sm:$0xff]
        %v747 = vld [vmem:[%s536 + $0x280] sm:$0xff]
        %v748 = vld [vmem:[%s536 + $0x288] sm:$0xff]
        %v749 = vld [vmem:[%s536 + $0x290] sm:$0xff]
        %v750 = vld [vmem:[%s536 + $0x298] sm:$0xff]
        %v751 = vld [vmem:[%s536 + $0x2a0] sm:$0xff]
        %v752 = vld [vmem:[%s536 + $0x2a8] sm:$0xff]
        %v753 = vld [vmem:[%s536 + $0x2b0] sm:$0xff]
        %v754 = vld [vmem:[%s536 + $0x2b8] sm:$0xff]
        %v755 = vld [vmem:[%s536 + $0x2c0] sm:$0xff]
        %v756 = vld [vmem:[%s536 + $0x2c8] sm:$0xff]
        %v757 = vld [vmem:[%s536 + $0x2d0] sm:$0xff]
        %v758 = vld [vmem:[%s536 + $0x2d8] sm:$0xff]
        %v759 = vld [vmem:[%s536 + $0x2e0] sm:$0xff]
        %v760 = vld [vmem:[%s536 + $0x2e8] sm:$0xff]
        %v761 = vld [vmem:[%s536 + $0x2f0] sm:$0xff]
        %v762 = vld [vmem:[%s536 + $0x2f8] sm:$0xff]
        %v763 = vld [vmem:[%s536 + $0x300] sm:$0xff]
        %v764 = vld [vmem:[%s536 + $0x308] sm:$0xff]
        %v765 = vld [vmem:[%s536 + $0x310] sm:$0xff]
        %v766 = vld [vmem:[%s536 + $0x318] sm:$0xff]
        %v767 = vld [vmem:[%s536 + $0x320] sm:$0xff]
        %v768 = vld [vmem:[%s536 + $0x328] sm:$0xff]
        %v769 = vld [vmem:[%s536 + $0x330] sm:$0xff]
        %v770 = vld [vmem:[%s536 + $0x338] sm:$0xff]
        %v771 = vld [vmem:[%s536 + $0x340] sm:$0xff]
        %v772 = vld [vmem:[%s536 + $0x348] sm:$0xff]
        %v773 = vld [vmem:[%s536 + $0x350] sm:$0xff]
        %v774 = vld [vmem:[%s536 + $0x358] sm:$0xff]
        %v775 = vld [vmem:[%s536 + $0x360] sm:$0xff]
        %v776 = vld [vmem:[%s536 + $0x368] sm:$0xff]
        %v777 = vld [vmem:[%s536 + $0x370] sm:$0xff]
        %v778 = vld [vmem:[%s536 + $0x378] sm:$0xff]
        %v779 = vld [vmem:[%s536 + $0x380] sm:$0xff]
        %v780 = vld [vmem:[%s536 + $0x388] sm:$0xff]
        %v781 = vld [vmem:[%s536 + $0x390] sm:$0xff]
        %v782 = vld [vmem:[%s536 + $0x398] sm:$0xff]
        %v783 = vld [vmem:[%s536 + $0x3a0] sm:$0xff]
        %v784 = vld [vmem:[%s536 + $0x3a8] sm:$0xff]
        %v785 = vld [vmem:[%s536 + $0x3b0] sm:$0xff]
        %v786 = vld [vmem:[%s536 + $0x3b8] sm:$0xff]
        %v787 = vld [vmem:[%s536 + $0x3c0] sm:$0xff]
        %v788 = vld [vmem:[%s536 + $0x3c8] sm:$0xff]
        %v789 = vld [vmem:[%s536 + $0x3d0] sm:$0xff]
        %v790 = vld [vmem:[%s536 + $0x3d8] sm:$0xff]
        %v791 = vld [vmem:[%s536 + $0x3e0] sm:$0xff]
        %v792 = vld [vmem:[%s536 + $0x3e8] sm:$0xff]
        %v793 = vld [vmem:[%s536 + $0x3f0] sm:$0xff]
        %v794 = vld [vmem:[%s536 + $0x3f8] sm:$0xff]
        %v923 = vunpack.c.l.b16 %v667
        %v924 = vunpack.c.h.b16 %v667
        %v925 = vunpack.c.l.b16 %v668
        %v926 = vunpack.c.h.b16 %v668
        %v927 = vunpack.c.l.b16 %v669
        %v928 = vunpack.c.h.b16 %v669
        %v929 = vunpack.c.l.b16 %v670
        %v930 = vunpack.c.h.b16 %v670
        %v931 = vunpack.c.l.b16 %v671
        %v932 = vunpack.c.h.b16 %v671
        %v933 = vunpack.c.l.b16 %v672
        %v934 = vunpack.c.h.b16 %v672
        %v935 = vunpack.c.l.b16 %v673
        %v936 = vunpack.c.h.b16 %v673
        %v937 = vunpack.c.l.b16 %v674
        %v938 = vunpack.c.h.b16 %v674
        %v939 = vunpack.c.l.b16 %v675
        %v940 = vunpack.c.h.b16 %v675
        %v941 = vunpack.c.l.b16 %v676
        %v942 = vunpack.c.h.b16 %v676
        %v943 = vunpack.c.l.b16 %v677
        %v944 = vunpack.c.h.b16 %v677
        %v945 = vunpack.c.l.b16 %v678
        %v946 = vunpack.c.h.b16 %v678
        %v947 = vunpack.c.l.b16 %v679
        %v948 = vunpack.c.h.b16 %v679
        %v949 = vunpack.c.l.b16 %v680
        %v950 = vunpack.c.h.b16 %v680
        %v951 = vunpack.c.l.b16 %v681
        %v952 = vunpack.c.h.b16 %v681
        %v953 = vunpack.c.l.b16 %v682
        %v954 = vunpack.c.h.b16 %v682
        %v955 = vunpack.c.l.b16 %v683
        %v956 = vunpack.c.h.b16 %v683
        %v957 = vunpack.c.l.b16 %v684
        %v958 = vunpack.c.h.b16 %v684
        %v959 = vunpack.c.l.b16 %v685
        %v960 = vunpack.c.h.b16 %v685
        %v961 = vunpack.c.l.b16 %v686
        %v962 = vunpack.c.h.b16 %v686
        %v963 = vunpack.c.l.b16 %v687
        %v964 = vunpack.c.h.b16 %v687
        %v965 = vunpack.c.l.b16 %v688
        %v966 = vunpack.c.h.b16 %v688
        %v967 = vunpack.c.l.b16 %v689
        %v968 = vunpack.c.h.b16 %v689
        %v969 = vunpack.c.l.b16 %v690
        %v970 = vunpack.c.h.b16 %v690
        %v971 = vunpack.c.l.b16 %v691
        %v972 = vunpack.c.h.b16 %v691
        %v973 = vunpack.c.l.b16 %v692
        %v974 = vunpack.c.h.b16 %v692
        %v975 = vunpack.c.l.b16 %v693
        %v976 = vunpack.c.h.b16 %v693
        %v977 = vunpack.c.l.b16 %v694
        %v978 = vunpack.c.h.b16 %v694
        %v979 = vunpack.c.l.b16 %v695
        %v980 = vunpack.c.h.b16 %v695
        %v981 = vunpack.c.l.b16 %v696
        %v982 = vunpack.c.h.b16 %v696
        %v983 = vunpack.c.l.b16 %v697
        %v984 = vunpack.c.h.b16 %v697
        %v985 = vunpack.c.l.b16 %v698
        %v986 = vunpack.c.h.b16 %v698
        %v987 = vunpack.c.l.b16 %v699
        %v988 = vunpack.c.h.b16 %v699
        %v989 = vunpack.c.l.b16 %v700
        %v990 = vunpack.c.h.b16 %v700
        %v991 = vunpack.c.l.b16 %v701
        %v992 = vunpack.c.h.b16 %v701
        %v993 = vunpack.c.l.b16 %v702
        %v994 = vunpack.c.h.b16 %v702
        %v995 = vunpack.c.l.b16 %v703
        %v996 = vunpack.c.h.b16 %v703
        %v997 = vunpack.c.l.b16 %v704
        %v998 = vunpack.c.h.b16 %v704
        %v999 = vunpack.c.l.b16 %v705
        %v1000 = vunpack.c.h.b16 %v705
        %v1001 = vunpack.c.l.b16 %v706
        %v1002 = vunpack.c.h.b16 %v706
        %v1003 = vunpack.c.l.b16 %v707
        %v1004 = vunpack.c.h.b16 %v707
        %v1005 = vunpack.c.l.b16 %v708
        %v1006 = vunpack.c.h.b16 %v708
        %v1007 = vunpack.c.l.b16 %v709
        %v1008 = vunpack.c.h.b16 %v709
        %v1009 = vunpack.c.l.b16 %v710
        %v1010 = vunpack.c.h.b16 %v710
        %v1011 = vunpack.c.l.b16 %v711
        %v1012 = vunpack.c.h.b16 %v711
        %v1013 = vunpack.c.l.b16 %v712
        %v1014 = vunpack.c.h.b16 %v712
        %v1015 = vunpack.c.l.b16 %v713
        %v1016 = vunpack.c.h.b16 %v713
        %v1017 = vunpack.c.l.b16 %v714
        %v1018 = vunpack.c.h.b16 %v714
        %v1019 = vunpack.c.l.b16 %v715
        %v1020 = vunpack.c.h.b16 %v715
        %v1021 = vunpack.c.l.b16 %v716
        %v1022 = vunpack.c.h.b16 %v716
        %v1023 = vunpack.c.l.b16 %v717
        %v1024 = vunpack.c.h.b16 %v717
        %v1025 = vunpack.c.l.b16 %v718
        %v1026 = vunpack.c.h.b16 %v718
        %v1027 = vunpack.c.l.b16 %v719
        %v1028 = vunpack.c.h.b16 %v719
        %v1029 = vunpack.c.l.b16 %v720
        %v1030 = vunpack.c.h.b16 %v720
        %v1031 = vunpack.c.l.b16 %v721
        %v1032 = vunpack.c.h.b16 %v721
        %v1033 = vunpack.c.l.b16 %v722
        %v1034 = vunpack.c.h.b16 %v722
        %v1035 = vunpack.c.l.b16 %v723
        %v1036 = vunpack.c.h.b16 %v723
        %v1037 = vunpack.c.l.b16 %v724
        %v1038 = vunpack.c.h.b16 %v724
        %v1039 = vunpack.c.l.b16 %v725
        %v1040 = vunpack.c.h.b16 %v725
        %v1041 = vunpack.c.l.b16 %v726
        %v1042 = vunpack.c.h.b16 %v726
        %v1043 = vunpack.c.l.b16 %v727
        %v1044 = vunpack.c.h.b16 %v727
        %v1045 = vunpack.c.l.b16 %v728
        %v1046 = vunpack.c.h.b16 %v728
        %v1047 = vunpack.c.l.b16 %v729
        %v1048 = vunpack.c.h.b16 %v729
        %v1049 = vunpack.c.l.b16 %v730
        %v1050 = vunpack.c.h.b16 %v730
        %v1051 = vunpack.c.l.b16 %v731
        %v1052 = vunpack.c.h.b16 %v731
        %v1053 = vunpack.c.l.b16 %v732
        %v1054 = vunpack.c.h.b16 %v732
        %v1055 = vunpack.c.l.b16 %v733
        %v1056 = vunpack.c.h.b16 %v733
        %v1057 = vunpack.c.l.b16 %v734
        %v1058 = vunpack.c.h.b16 %v734
        %v1059 = vunpack.c.l.b16 %v735
        %v1060 = vunpack.c.h.b16 %v735
        %v1061 = vunpack.c.l.b16 %v736
        %v1062 = vunpack.c.h.b16 %v736
        %v1063 = vunpack.c.l.b16 %v737
        %v1064 = vunpack.c.h.b16 %v737
        %v1065 = vunpack.c.l.b16 %v738
        %v1066 = vunpack.c.h.b16 %v738
        %v1067 = vunpack.c.l.b16 %v739
        %v1068 = vunpack.c.h.b16 %v739
        %v1069 = vunpack.c.l.b16 %v740
        %v1070 = vunpack.c.h.b16 %v740
        %v1071 = vunpack.c.l.b16 %v741
        %v1072 = vunpack.c.h.b16 %v741
        %v1073 = vunpack.c.l.b16 %v742
        %v1074 = vunpack.c.h.b16 %v742
        %v1075 = vunpack.c.l.b16 %v743
        %v1076 = vunpack.c.h.b16 %v743
        %v1077 = vunpack.c.l.b16 %v744
        %v1078 = vunpack.c.h.b16 %v744
        %v1079 = vunpack.c.l.b16 %v745
        %v1080 = vunpack.c.h.b16 %v745
        %v1081 = vunpack.c.l.b16 %v746
        %v1082 = vunpack.c.h.b16 %v746
        %v1083 = vunpack.c.l.b16 %v747
        %v1084 = vunpack.c.h.b16 %v747
        %v1085 = vunpack.c.l.b16 %v748
        %v1086 = vunpack.c.h.b16 %v748
        %v1087 = vunpack.c.l.b16 %v749
        %v1088 = vunpack.c.h.b16 %v749
        %v1089 = vunpack.c.l.b16 %v750
        %v1090 = vunpack.c.h.b16 %v750
        %v1091 = vunpack.c.l.b16 %v751
        %v1092 = vunpack.c.h.b16 %v751
        %v1093 = vunpack.c.l.b16 %v752
        %v1094 = vunpack.c.h.b16 %v752
        %v1095 = vunpack.c.l.b16 %v753
        %v1096 = vunpack.c.h.b16 %v753
        %v1097 = vunpack.c.l.b16 %v754
        %v1098 = vunpack.c.h.b16 %v754
        %v1099 = vunpack.c.l.b16 %v755
        %v1100 = vunpack.c.h.b16 %v755
        %v1101 = vunpack.c.l.b16 %v756
        %v1102 = vunpack.c.h.b16 %v756
        %v1103 = vunpack.c.l.b16 %v757
        %v1104 = vunpack.c.h.b16 %v757
        %v1105 = vunpack.c.l.b16 %v758
        %v1106 = vunpack.c.h.b16 %v758
        %v1107 = vunpack.c.l.b16 %v759
        %v1108 = vunpack.c.h.b16 %v759
        %v1109 = vunpack.c.l.b16 %v760
        %v1110 = vunpack.c.h.b16 %v760
        %v1111 = vunpack.c.l.b16 %v761
        %v1112 = vunpack.c.h.b16 %v761
        %v1113 = vunpack.c.l.b16 %v762
        %v1114 = vunpack.c.h.b16 %v762
        %v1115 = vunpack.c.l.b16 %v763
        %v1116 = vunpack.c.h.b16 %v763
        %v1117 = vunpack.c.l.b16 %v764
        %v1118 = vunpack.c.h.b16 %v764
        %v1119 = vunpack.c.l.b16 %v765
        %v1120 = vunpack.c.h.b16 %v765
        %v1121 = vunpack.c.l.b16 %v766
        %v1122 = vunpack.c.h.b16 %v766
        %v1123 = vunpack.c.l.b16 %v767
        %v1124 = vunpack.c.h.b16 %v767
        %v1125 = vunpack.c.l.b16 %v768
        %v1126 = vunpack.c.h.b16 %v768
        %v1127 = vunpack.c.l.b16 %v769
        %v1128 = vunpack.c.h.b16 %v769
        %v1129 = vunpack.c.l.b16 %v770
        %v1130 = vunpack.c.h.b16 %v770
        %v1131 = vunpack.c.l.b16 %v771
        %v1132 = vunpack.c.h.b16 %v771
        %v1133 = vunpack.c.l.b16 %v772
        %v1134 = vunpack.c.h.b16 %v772
        %v1135 = vunpack.c.l.b16 %v773
        %v1136 = vunpack.c.h.b16 %v773
        %v1137 = vunpack.c.l.b16 %v774
        %v1138 = vunpack.c.h.b16 %v774
        %v1139 = vunpack.c.l.b16 %v775
        %v1140 = vunpack.c.h.b16 %v775
        %v1141 = vunpack.c.l.b16 %v776
        %v1142 = vunpack.c.h.b16 %v776
        %v1143 = vunpack.c.l.b16 %v777
        %v1144 = vunpack.c.h.b16 %v777
        %v1145 = vunpack.c.l.b16 %v778
        %v1146 = vunpack.c.h.b16 %v778
        %v1147 = vunpack.c.l.b16 %v779
        %v1148 = vunpack.c.h.b16 %v779
        %v1149 = vunpack.c.l.b16 %v780
        %v1150 = vunpack.c.h.b16 %v780
        %v1151 = vunpack.c.l.b16 %v781
        %v1152 = vunpack.c.h.b16 %v781
        %v1153 = vunpack.c.l.b16 %v782
        %v1154 = vunpack.c.h.b16 %v782
        %v1155 = vunpack.c.l.b16 %v783
        %v1156 = vunpack.c.h.b16 %v783
        %v1157 = vunpack.c.l.b16 %v784
        %v1158 = vunpack.c.h.b16 %v784
        %v1159 = vunpack.c.l.b16 %v785
        %v1160 = vunpack.c.h.b16 %v785
        %v1161 = vunpack.c.l.b16 %v786
        %v1162 = vunpack.c.h.b16 %v786
        %v1163 = vunpack.c.l.b16 %v787
        %v1164 = vunpack.c.h.b16 %v787
        %v1165 = vunpack.c.l.b16 %v788
        %v1166 = vunpack.c.h.b16 %v788
        %v1167 = vunpack.c.l.b16 %v789
        %v1168 = vunpack.c.h.b16 %v789
        %v1169 = vunpack.c.l.b16 %v790
        %v1170 = vunpack.c.h.b16 %v790
        %v1171 = vunpack.c.l.b16 %v791
        %v1172 = vunpack.c.h.b16 %v791
        %v1173 = vunpack.c.l.b16 %v792
        %v1174 = vunpack.c.h.b16 %v792
        %v1175 = vunpack.c.l.b16 %v793
        %v1176 = vunpack.c.h.b16 %v793
        %v1177 = vunpack.c.l.b16 %v794
        %v1178 = vunpack.c.h.b16 %v794
        %v1179 = vpack.c.b16 %v931, %v923
        %v1180 = vpack.c.b16 %v932, %v924
        %v1181 = vpack.c.b16 %v933, %v925
        %v1182 = vpack.c.b16 %v934, %v926
        %v1183 = vpack.c.b16 %v935, %v927
        %v1184 = vpack.c.b16 %v936, %v928
        %v1185 = vpack.c.b16 %v937, %v929
        %v1186 = vpack.c.b16 %v938, %v930
        %v1187 = vpack.c.b16 %v947, %v939
        %v1188 = vpack.c.b16 %v948, %v940
        %v1189 = vpack.c.b16 %v949, %v941
        %v1190 = vpack.c.b16 %v950, %v942
        %v1191 = vpack.c.b16 %v951, %v943
        %v1192 = vpack.c.b16 %v952, %v944
        %v1193 = vpack.c.b16 %v953, %v945
        %v1194 = vpack.c.b16 %v954, %v946
        %v1195 = vpack.c.b16 %v963, %v955
        %v1196 = vpack.c.b16 %v964, %v956
        %v1197 = vpack.c.b16 %v965, %v957
        %v1198 = vpack.c.b16 %v966, %v958
        %v1199 = vpack.c.b16 %v967, %v959
        %v1200 = vpack.c.b16 %v968, %v960
        %v1201 = vpack.c.b16 %v969, %v961
        %v1202 = vpack.c.b16 %v970, %v962
        %v1203 = vpack.c.b16 %v979, %v971
        %v1204 = vpack.c.b16 %v980, %v972
        %v1205 = vpack.c.b16 %v981, %v973
        %v1206 = vpack.c.b16 %v982, %v974
        %v1207 = vpack.c.b16 %v983, %v975
        %v1208 = vpack.c.b16 %v984, %v976
        %v1209 = vpack.c.b16 %v985, %v977
        %v1210 = vpack.c.b16 %v986, %v978
        %v1211 = vpack.c.b16 %v995, %v987
        %v1212 = vpack.c.b16 %v996, %v988
        %v1213 = vpack.c.b16 %v997, %v989
        %v1214 = vpack.c.b16 %v998, %v990
        %v1215 = vpack.c.b16 %v999, %v991
        %v1216 = vpack.c.b16 %v1000, %v992
        %v1217 = vpack.c.b16 %v1001, %v993
        %v1218 = vpack.c.b16 %v1002, %v994
        %v1219 = vpack.c.b16 %v1011, %v1003
        %v1220 = vpack.c.b16 %v1012, %v1004
        %v1221 = vpack.c.b16 %v1013, %v1005
        %v1222 = vpack.c.b16 %v1014, %v1006
        %v1223 = vpack.c.b16 %v1015, %v1007
        %v1224 = vpack.c.b16 %v1016, %v1008
        %v1225 = vpack.c.b16 %v1017, %v1009
        %v1226 = vpack.c.b16 %v1018, %v1010
        %v1227 = vpack.c.b16 %v1027, %v1019
        %v1228 = vpack.c.b16 %v1028, %v1020
        %v1229 = vpack.c.b16 %v1029, %v1021
        %v1230 = vpack.c.b16 %v1030, %v1022
        %v1231 = vpack.c.b16 %v1031, %v1023
        %v1232 = vpack.c.b16 %v1032, %v1024
        %v1233 = vpack.c.b16 %v1033, %v1025
        %v1234 = vpack.c.b16 %v1034, %v1026
        %v1235 = vpack.c.b16 %v1043, %v1035
        %v1236 = vpack.c.b16 %v1044, %v1036
        %v1237 = vpack.c.b16 %v1045, %v1037
        %v1238 = vpack.c.b16 %v1046, %v1038
        %v1239 = vpack.c.b16 %v1047, %v1039
        %v1240 = vpack.c.b16 %v1048, %v1040
        %v1241 = vpack.c.b16 %v1049, %v1041
        %v1242 = vpack.c.b16 %v1050, %v1042
        %v1243 = vpack.c.b16 %v1059, %v1051
        %v1244 = vpack.c.b16 %v1060, %v1052
        %v1245 = vpack.c.b16 %v1061, %v1053
        %v1246 = vpack.c.b16 %v1062, %v1054
        %v1247 = vpack.c.b16 %v1063, %v1055
        %v1248 = vpack.c.b16 %v1064, %v1056
        %v1249 = vpack.c.b16 %v1065, %v1057
        %v1250 = vpack.c.b16 %v1066, %v1058
        %v1251 = vpack.c.b16 %v1075, %v1067
        %v1252 = vpack.c.b16 %v1076, %v1068
        %v1253 = vpack.c.b16 %v1077, %v1069
        %v1254 = vpack.c.b16 %v1078, %v1070
        %v1255 = vpack.c.b16 %v1079, %v1071
        %v1256 = vpack.c.b16 %v1080, %v1072
        %v1257 = vpack.c.b16 %v1081, %v1073
        %v1258 = vpack.c.b16 %v1082, %v1074
        %v1259 = vpack.c.b16 %v1091, %v1083
        %v1260 = vpack.c.b16 %v1092, %v1084
        %v1261 = vpack.c.b16 %v1093, %v1085
        %v1262 = vpack.c.b16 %v1094, %v1086
        %v1263 = vpack.c.b16 %v1095, %v1087
        %v1264 = vpack.c.b16 %v1096, %v1088
        %v1265 = vpack.c.b16 %v1097, %v1089
        %v1266 = vpack.c.b16 %v1098, %v1090
        %v1267 = vpack.c.b16 %v1107, %v1099
        %v1268 = vpack.c.b16 %v1108, %v1100
        %v1269 = vpack.c.b16 %v1109, %v1101
        %v1270 = vpack.c.b16 %v1110, %v1102
        %v1271 = vpack.c.b16 %v1111, %v1103
        %v1272 = vpack.c.b16 %v1112, %v1104
        %v1273 = vpack.c.b16 %v1113, %v1105
        %v1274 = vpack.c.b16 %v1114, %v1106
        %v1275 = vpack.c.b16 %v1123, %v1115
        %v1276 = vpack.c.b16 %v1124, %v1116
        %v1277 = vpack.c.b16 %v1125, %v1117
        %v1278 = vpack.c.b16 %v1126, %v1118
        %v1279 = vpack.c.b16 %v1127, %v1119
        %v1280 = vpack.c.b16 %v1128, %v1120
        %v1281 = vpack.c.b16 %v1129, %v1121
        %v1282 = vpack.c.b16 %v1130, %v1122
        %v1283 = vpack.c.b16 %v1139, %v1131
        %v1284 = vpack.c.b16 %v1140, %v1132
        %v1285 = vpack.c.b16 %v1141, %v1133
        %v1286 = vpack.c.b16 %v1142, %v1134
        %v1287 = vpack.c.b16 %v1143, %v1135
        %v1288 = vpack.c.b16 %v1144, %v1136
        %v1289 = vpack.c.b16 %v1145, %v1137
        %v1290 = vpack.c.b16 %v1146, %v1138
        %v1291 = vpack.c.b16 %v1155, %v1147
        %v1292 = vpack.c.b16 %v1156, %v1148
        %v1293 = vpack.c.b16 %v1157, %v1149
        %v1294 = vpack.c.b16 %v1158, %v1150
        %v1295 = vpack.c.b16 %v1159, %v1151
        %v1296 = vpack.c.b16 %v1160, %v1152
        %v1297 = vpack.c.b16 %v1161, %v1153
        %v1298 = vpack.c.b16 %v1162, %v1154
        %v1299 = vpack.c.b16 %v1171, %v1163
        %v1300 = vpack.c.b16 %v1172, %v1164
        %v1301 = vpack.c.b16 %v1173, %v1165
        %v1302 = vpack.c.b16 %v1174, %v1166
        %v1303 = vpack.c.b16 %v1175, %v1167
        %v1304 = vpack.c.b16 %v1176, %v1168
        %v1305 = vpack.c.b16 %v1177, %v1169
        %v1306 = vpack.c.b16 %v1178, %v1170
        %1435 = vmatprep.subr.bf16.mxu0 %v1180
        %1436 = vmatpush1.bf16.msra.mxu0 %v1179
        %1437 = vmatprep.subr.bf16.mxu0 %v1188
        %1438 = vmatpush1.bf16.msra.mxu0 %v1187
        %1439 = vmatprep.subr.bf16.mxu0 %v1196
        %1440 = vmatpush1.bf16.msra.mxu0 %v1195
        %1441 = vmatprep.subr.bf16.mxu0 %v1204
        %1442 = vmatpush1.bf16.msra.mxu0 %v1203
        %1443 = vmatprep.subr.bf16.mxu0 %v1212
        %1444 = vmatpush1.bf16.msra.mxu0 %v1211
        %1445 = vmatprep.subr.bf16.mxu0 %v1220
        %1446 = vmatpush1.bf16.msra.mxu0 %v1219
        %1447 = vmatprep.subr.bf16.mxu0 %v1228
        %1448 = vmatpush1.bf16.msra.mxu0 %v1227
        %1449 = vmatprep.subr.bf16.mxu0 %v1236
        %1450 = vmatpush1.bf16.msra.mxu0 %v1235
        %1451 = vmatprep.subr.bf16.mxu0 %v1244
        %1452 = vmatpush1.bf16.msra.mxu0 %v1243
        %1453 = vmatprep.subr.bf16.mxu0 %v1252
        %1454 = vmatpush1.bf16.msra.mxu0 %v1251
        %1455 = vmatprep.subr.bf16.mxu0 %v1260
        %1456 = vmatpush1.bf16.msra.mxu0 %v1259
        %1457 = vmatprep.subr.bf16.mxu0 %v1268
        %1458 = vmatpush1.bf16.msra.mxu0 %v1267
        %1459 = vmatprep.subr.bf16.mxu0 %v1276
        %1460 = vmatpush1.bf16.msra.mxu0 %v1275
        %1461 = vmatprep.subr.bf16.mxu0 %v1284
        %1462 = vmatpush1.bf16.msra.mxu0 %v1283
        %1463 = vmatprep.subr.bf16.mxu0 %v1292
        %1464 = vmatpush1.bf16.msra.mxu0 %v1291
        %1465 = vmatprep.subr.bf16.mxu0 %v1300
        %1466 = vmatpush1.bf16.msra.mxu0 %v1299
        %1467 = vmatprep.mubr.bf16.mxu0 %v666
        %1468 = vmatmul.mubr.bf16.gmra.mrb[0].mxu0 %v665
        %v1469 = vpop.f32.mrb[0].mxu0
        %v1470 = vadd.f32 0.0, %v1469
        %v1471 = vpop.f32.mrb[0].mxu0
        %v1472 = vadd.f32 0.0, %v1471
        %v1473 = vpop.f32.mrb[0].mxu0
        %v1474 = vpop.f32.mrb[0].mxu0
        %1475 = vdwg.mxu0
        %1476 = vmatprep.subr.bf16.mxu0 %v1182
        %1477 = vmatpush1.bf16.msra.mxu0 %v1181
        %1478 = vmatprep.subr.bf16.mxu0 %v1190
        %1479 = vmatpush1.bf16.msra.mxu0 %v1189
        %1480 = vmatprep.subr.bf16.mxu0 %v1198
        %1481 = vmatpush1.bf16.msra.mxu0 %v1197
        %1482 = vmatprep.subr.bf16.mxu0 %v1206
        %1483 = vmatpush1.bf16.msra.mxu0 %v1205
        %1484 = vmatprep.subr.bf16.mxu0 %v1214
        %1485 = vmatpush1.bf16.msra.mxu0 %v1213
        %1486 = vmatprep.subr.bf16.mxu0 %v1222
        %1487 = vmatpush1.bf16.msra.mxu0 %v1221
        %1488 = vmatprep.subr.bf16.mxu0 %v1230
        %1489 = vmatpush1.bf16.msra.mxu0 %v1229
        %1490 = vmatprep.subr.bf16.mxu0 %v1238
        %1491 = vmatpush1.bf16.msra.mxu0 %v1237
        %1492 = vmatprep.subr.bf16.mxu0 %v1246
        %1493 = vmatpush1.bf16.msra.mxu0 %v1245
        %1494 = vmatprep.subr.bf16.mxu0 %v1254
        %1495 = vmatpush1.bf16.msra.mxu0 %v1253
        %1496 = vmatprep.subr.bf16.mxu0 %v1262
        %1497 = vmatpush1.bf16.msra.mxu0 %v1261
        %1498 = vmatprep.subr.bf16.mxu0 %v1270
        %1499 = vmatpush1.bf16.msra.mxu0 %v1269
        %1500 = vmatprep.subr.bf16.mxu0 %v1278
        %1501 = vmatpush1.bf16.msra.mxu0 %v1277
        %1502 = vmatprep.subr.bf16.mxu0 %v1286
        %1503 = vmatpush1.bf16.msra.mxu0 %v1285
        %1504 = vmatprep.subr.bf16.mxu0 %v1294
        %1505 = vmatpush1.bf16.msra.mxu0 %v1293
        %1506 = vmatprep.subr.bf16.mxu0 %v1302
        %1507 = vmatpush1.bf16.msra.mxu0 %v1301
        %1508 = vmatprep.mubr.bf16.mxu0 %v666
        %1509 = vmatmul.mubr.bf16.gmra.mrb[0].mxu0 %v665
        %v1510 = vpop.f32.mrb[0].mxu0
        %v1511 = vadd.f32 0.0, %v1510
        %v1512 = vpop.f32.mrb[0].mxu0
        %v1513 = vadd.f32 0.0, %v1512
        %v1514 = vpop.f32.mrb[0].mxu0
        %v1515 = vpop.f32.mrb[0].mxu0
        %1516 = vdwg.mxu0
        %1517 = vmatprep.subr.bf16.mxu0 %v1184
        %1518 = vmatpush1.bf16.msra.mxu0 %v1183
        %1519 = vmatprep.subr.bf16.mxu0 %v1192
        %1520 = vmatpush1.bf16.msra.mxu0 %v1191
        %1521 = vmatprep.subr.bf16.mxu0 %v1200
        %1522 = vmatpush1.bf16.msra.mxu0 %v1199
        %1523 = vmatprep.subr.bf16.mxu0 %v1208
        %1524 = vmatpush1.bf16.msra.mxu0 %v1207
        %1525 = vmatprep.subr.bf16.mxu0 %v1216
        %1526 = vmatpush1.bf16.msra.mxu0 %v1215
        %1527 = vmatprep.subr.bf16.mxu0 %v1224
        %1528 = vmatpush1.bf16.msra.mxu0 %v1223
        %1529 = vmatprep.subr.bf16.mxu0 %v1232
        %1530 = vmatpush1.bf16.msra.mxu0 %v1231
        %1531 = vmatprep.subr.bf16.mxu0 %v1240
        %1532 = vmatpush1.bf16.msra.mxu0 %v1239
        %1533 = vmatprep.subr.bf16.mxu0 %v1248
        %1534 = vmatpush1.bf16.msra.mxu0 %v1247
        %1535 = vmatprep.subr.bf16.mxu0 %v1256
        %1536 = vmatpush1.bf16.msra.mxu0 %v1255
        %1537 = vmatprep.subr.bf16.mxu0 %v1264
        %1538 = vmatpush1.bf16.msra.mxu0 %v1263
        %1539 = vmatprep.subr.bf16.mxu0 %v1272
        %1540 = vmatpush1.bf16.msra.mxu0 %v1271
        %1541 = vmatprep.subr.bf16.mxu0 %v1280
        %1542 = vmatpush1.bf16.msra.mxu0 %v1279
        %1543 = vmatprep.subr.bf16.mxu0 %v1288
        %1544 = vmatpush1.bf16.msra.mxu0 %v1287
        %1545 = vmatprep.subr.bf16.mxu0 %v1296
        %1546 = vmatpush1.bf16.msra.mxu0 %v1295
        %1547 = vmatprep.subr.bf16.mxu0 %v1304
        %1548 = vmatpush1.bf16.msra.mxu0 %v1303
        %1549 = vmatprep.mubr.bf16.mxu0 %v666
        %1550 = vmatmul.mubr.bf16.gmra.mrb[0].mxu0 %v665
        %v1551 = vpop.f32.mrb[0].mxu0
        %v1552 = vadd.f32 0.0, %v1551
        %v1553 = vpop.f32.mrb[0].mxu0
        %v1554 = vadd.f32 0.0, %v1553
        %v1555 = vpop.f32.mrb[0].mxu0
        %v1556 = vpop.f32.mrb[0].mxu0
        %1557 = vdwg.mxu0
        %1558 = vmatprep.subr.bf16.mxu0 %v1186
        %1559 = vmatpush1.bf16.msra.mxu0 %v1185
        %1560 = vmatprep.subr.bf16.mxu0 %v1194
        %1561 = vmatpush1.bf16.msra.mxu0 %v1193
        %1562 = vmatprep.subr.bf16.mxu0 %v1202
        %1563 = vmatpush1.bf16.msra.mxu0 %v1201
        %1564 = vmatprep.subr.bf16.mxu0 %v1210
        %1565 = vmatpush1.bf16.msra.mxu0 %v1209
        %1566 = vmatprep.subr.bf16.mxu0 %v1218
        %1567 = vmatpush1.bf16.msra.mxu0 %v1217
        %1568 = vmatprep.subr.bf16.mxu0 %v1226
        %1569 = vmatpush1.bf16.msra.mxu0 %v1225
        %1570 = vmatprep.subr.bf16.mxu0 %v1234
        %1571 = vmatpush1.bf16.msra.mxu0 %v1233
        %1572 = vmatprep.subr.bf16.mxu0 %v1242
        %1573 = vmatpush1.bf16.msra.mxu0 %v1241
        %1574 = vmatprep.subr.bf16.mxu0 %v1250
        %1575 = vmatpush1.bf16.msra.mxu0 %v1249
        %1576 = vmatprep.subr.bf16.mxu0 %v1258
        %1577 = vmatpush1.bf16.msra.mxu0 %v1257
        %1578 = vmatprep.subr.bf16.mxu0 %v1266
        %1579 = vmatpush1.bf16.msra.mxu0 %v1265
        %1580 = vmatprep.subr.bf16.mxu0 %v1274
        %1581 = vmatpush1.bf16.msra.mxu0 %v1273
        %1582 = vmatprep.subr.bf16.mxu0 %v1282
        %1583 = vmatpush1.bf16.msra.mxu0 %v1281
        %1584 = vmatprep.subr.bf16.mxu0 %v1290
        %1585 = vmatpush1.bf16.msra.mxu0 %v1289
        %1586 = vmatprep.subr.bf16.mxu0 %v1298
        %1587 = vmatpush1.bf16.msra.mxu0 %v1297
        %1588 = vmatprep.subr.bf16.mxu0 %v1306
        %1589 = vmatpush1.bf16.msra.mxu0 %v1305
        %1590 = vmatprep.mubr.bf16.mxu0 %v666
        %1591 = vmatmul.mubr.bf16.gmra.mrb[0].mxu0 %v665
        %v1592 = vpop.f32.mrb[0].mxu0
        %v1593 = vadd.f32 0.0, %v1592
        %v1594 = vpop.f32.mrb[0].mxu0
        %v1595 = vadd.f32 0.0, %v1594
        %v1596 = vpop.f32.mrb[0].mxu0
        %v1597 = vpop.f32.mrb[0].mxu0
        %1598 = vdwg.mxu0
        %v1599 = vadd.f32 %v655, %v1470
        %v1600 = vadd.f32 %v656, %v1472
        %v1601 = vadd.f32 %v657, %v1511
        %v1602 = vadd.f32 %v658, %v1513
        %v1603 = vadd.f32 %v659, %v1552
        %v1604 = vadd.f32 %v660, %v1554
        %v1605 = vadd.f32 %v661, %v1593
        %v1606 = vadd.f32 %v662, %v1595
        %1607 = vst [vmem:[#allocation2] sm:$0xff] %v1599
        %1608 = vst [vmem:[#allocation2 + $0x8] sm:$0xff] %v1600
        %1609 = vst [vmem:[#allocation2 + $0x10] sm:$0xff] %v1601
        %1610 = vst [vmem:[#allocation2 + $0x18] sm:$0xff] %v1602
        %1611 = vst [vmem:[#allocation2 + $0x20] sm:$0xff] %v1603
        %1612 = vst [vmem:[#allocation2 + $0x28] sm:$0xff] %v1604
        %1613 = vst [vmem:[#allocation2 + $0x30] sm:$0xff] %v1605
        %1614 = vst [vmem:[#allocation2 + $0x38] sm:$0xff] %v1606
        %p1615 = scmp.eq.s32.totalorder %s37, 2
        // Predicated region
        $region121: #{simple_nn_forward.1} parent=71 // pred_check
          %p1616 = pneg %p1615
        $region122: #{simple_nn_forward.1} parent=71 // pred_check_branch
          %1618 = sbr.rel (%p1616) target = $region124
        $region123: #{simple_nn_forward.1} parent=71 // pred_region
          %v1619 = vld [vmem:[#allocation2] sm:$0xff]
          %v1620 = vld [vmem:[#allocation2 + $0x8] sm:$0xff]
          %v1621 = vld [vmem:[#allocation2 + $0x10] sm:$0xff]
          %v1622 = vld [vmem:[#allocation2 + $0x18] sm:$0xff]
          %v1623 = vld [vmem:[#allocation2 + $0x20] sm:$0xff]
          %v1624 = vld [vmem:[#allocation2 + $0x28] sm:$0xff]
          %v1625 = vld [vmem:[#allocation2 + $0x30] sm:$0xff]
          %v1626 = vld [vmem:[#allocation2 + $0x38] sm:$0xff]
          %v1627 = vld [vmem:[#allocation5] sm:$0xff]
          %v1629 = vlaneseq
          %v1630 = vshrl.u32 %v1629, 7
          %v1631 = vsub.s32 0, %v1630
          %v1632 = vrot.slane %v1627, %v1631
          %v1633 = vlaneseq
          %v1634 = vshrl.u32 %v1633, 7
          %v1635 = vsub.s32 1, %v1634
          %v1636 = vrot.slane %v1627, %v1635
          %v1637 = vlaneseq
          %v1638 = vshrl.u32 %v1637, 7
          %v1639 = vsub.s32 2, %v1638
          %v1640 = vrot.slane %v1627, %v1639
          %v1641 = vlaneseq
          %v1642 = vshrl.u32 %v1641, 7
          %v1643 = vsub.s32 3, %v1642
          %v1644 = vrot.slane %v1627, %v1643
          %v1645 = vlaneseq
          %v1646 = vshrl.u32 %v1645, 7
          %v1647 = vsub.s32 4, %v1646
          %v1648 = vrot.slane %v1627, %v1647
          %v1649 = vlaneseq
          %v1650 = vshrl.u32 %v1649, 7
          %v1651 = vsub.s32 5, %v1650
          %v1652 = vrot.slane %v1627, %v1651
          %v1653 = vlaneseq
          %v1654 = vshrl.u32 %v1653, 7
          %v1655 = vsub.s32 6, %v1654
          %v1656 = vrot.slane %v1627, %v1655
          %v1657 = vlaneseq
          %v1658 = vshrl.u32 %v1657, 7
          %v1659 = vsub.s32 7, %v1658
          %v1660 = vrot.slane %v1627, %v1659
          %v1669 = vadd.f32 %v1619, %v1632
          %v1670 = vadd.f32 %v1620, %v1636
          %v1671 = vadd.f32 %v1621, %v1640
          %v1672 = vadd.f32 %v1622, %v1644
          %v1673 = vadd.f32 %v1623, %v1648
          %v1674 = vadd.f32 %v1624, %v1652
          %v1675 = vadd.f32 %v1625, %v1656
          %v1676 = vadd.f32 %v1626, %v1660
          %v1677 = vmax.f32 %v1669, 0.0
          %v1678 = vmax.f32 %v1670, 0.0
          %v1679 = vmax.f32 %v1671, 0.0
          %v1680 = vmax.f32 %v1672, 0.0
          %v1681 = vmax.f32 %v1673, 0.0
          %v1682 = vmax.f32 %v1674, 0.0
          %v1683 = vmax.f32 %v1675, 0.0
          %v1684 = vmax.f32 %v1676, 0.0
          %v1685 = vpack.c.bf16 %v1677, %v1677
          %v1686 = vpack.c.bf16 %v1678, %v1678
          %v1687 = vpack.c.bf16 %v1679, %v1679
          %v1688 = vpack.c.bf16 %v1680, %v1680
          %v1689 = vpack.c.bf16 %v1681, %v1681
          %v1690 = vpack.c.bf16 %v1682, %v1682
          %v1691 = vpack.c.bf16 %v1683, %v1683
          %v1692 = vpack.c.bf16 %v1684, %v1684
          %v1693 = vld [vmem:[#allocation7] sm:$0xff]
          %v1694 = vld [vmem:[#allocation7 + $0x8] sm:$0xff]
          %v1695 = vld [vmem:[#allocation7 + $0x10] sm:$0xff]
          %v1696 = vld [vmem:[#allocation7 + $0x18] sm:$0xff]
          %v1697 = vld [vmem:[#allocation7 + $0x20] sm:$0xff]
          %v1698 = vld [vmem:[#allocation7 + $0x28] sm:$0xff]
          %v1699 = vld [vmem:[#allocation7 + $0x30] sm:$0xff]
          %v1700 = vld [vmem:[#allocation7 + $0x38] sm:$0xff]
          %v1701 = vld [vmem:[#allocation7 + $0x40] sm:$0xff]
          %v1702 = vld [vmem:[#allocation7 + $0x48] sm:$0xff]
          %v1703 = vld [vmem:[#allocation7 + $0x50] sm:$0xff]
          %v1704 = vld [vmem:[#allocation7 + $0x58] sm:$0xff]
          %v1705 = vld [vmem:[#allocation7 + $0x60] sm:$0xff]
          %v1706 = vld [vmem:[#allocation7 + $0x68] sm:$0xff]
          %v1707 = vld [vmem:[#allocation7 + $0x70] sm:$0xff]
          %v1708 = vld [vmem:[#allocation7 + $0x78] sm:$0xff]
          %v1709 = vld [vmem:[#allocation7 + $0x80] sm:$0xff]
          %v1710 = vld [vmem:[#allocation7 + $0x88] sm:$0xff]
          %v1711 = vld [vmem:[#allocation7 + $0x90] sm:$0xff]
          %v1712 = vld [vmem:[#allocation7 + $0x98] sm:$0xff]
          %v1713 = vld [vmem:[#allocation7 + $0xa0] sm:$0xff]
          %v1714 = vld [vmem:[#allocation7 + $0xa8] sm:$0xff]
          %v1715 = vld [vmem:[#allocation7 + $0xb0] sm:$0xff]
          %v1716 = vld [vmem:[#allocation7 + $0xb8] sm:$0xff]
          %v1717 = vld [vmem:[#allocation7 + $0xc0] sm:$0xff]
          %v1718 = vld [vmem:[#allocation7 + $0xc8] sm:$0xff]
          %v1719 = vld [vmem:[#allocation7 + $0xd0] sm:$0xff]
          %v1720 = vld [vmem:[#allocation7 + $0xd8] sm:$0xff]
          %v1721 = vld [vmem:[#allocation7 + $0xe0] sm:$0xff]
          %v1722 = vld [vmem:[#allocation7 + $0xe8] sm:$0xff]
          %v1723 = vld [vmem:[#allocation7 + $0xf0] sm:$0xff]
          %v1724 = vld [vmem:[#allocation7 + $0xf8] sm:$0xff]
          %v1725 = vld [vmem:[#allocation7 + $0x100] sm:$0xff]
          %v1726 = vld [vmem:[#allocation7 + $0x108] sm:$0xff]
          %v1727 = vld [vmem:[#allocation7 + $0x110] sm:$0xff]
          %v1728 = vld [vmem:[#allocation7 + $0x118] sm:$0xff]
          %v1729 = vld [vmem:[#allocation7 + $0x120] sm:$0xff]
          %v1730 = vld [vmem:[#allocation7 + $0x128] sm:$0xff]
          %v1731 = vld [vmem:[#allocation7 + $0x130] sm:$0xff]
          %v1732 = vld [vmem:[#allocation7 + $0x138] sm:$0xff]
          %v1733 = vld [vmem:[#allocation7 + $0x140] sm:$0xff]
          %v1734 = vld [vmem:[#allocation7 + $0x148] sm:$0xff]
          %v1735 = vld [vmem:[#allocation7 + $0x150] sm:$0xff]
          %v1736 = vld [vmem:[#allocation7 + $0x158] sm:$0xff]
          %v1737 = vld [vmem:[#allocation7 + $0x160] sm:$0xff]
          %v1738 = vld [vmem:[#allocation7 + $0x168] sm:$0xff]
          %v1739 = vld [vmem:[#allocation7 + $0x170] sm:$0xff]
          %v1740 = vld [vmem:[#allocation7 + $0x178] sm:$0xff]
          %v1741 = vld [vmem:[#allocation7 + $0x180] sm:$0xff]
          %v1742 = vld [vmem:[#allocation7 + $0x188] sm:$0xff]
          %v1743 = vld [vmem:[#allocation7 + $0x190] sm:$0xff]
          %v1744 = vld [vmem:[#allocation7 + $0x198] sm:$0xff]
          %v1745 = vld [vmem:[#allocation7 + $0x1a0] sm:$0xff]
          %v1746 = vld [vmem:[#allocation7 + $0x1a8] sm:$0xff]
          %v1747 = vld [vmem:[#allocation7 + $0x1b0] sm:$0xff]
          %v1748 = vld [vmem:[#allocation7 + $0x1b8] sm:$0xff]
          %v1749 = vld [vmem:[#allocation7 + $0x1c0] sm:$0xff]
          %v1750 = vld [vmem:[#allocation7 + $0x1c8] sm:$0xff]
          %v1751 = vld [vmem:[#allocation7 + $0x1d0] sm:$0xff]
          %v1752 = vld [vmem:[#allocation7 + $0x1d8] sm:$0xff]
          %v1753 = vld [vmem:[#allocation7 + $0x1e0] sm:$0xff]
          %v1754 = vld [vmem:[#allocation7 + $0x1e8] sm:$0xff]
          %v1755 = vld [vmem:[#allocation7 + $0x1f0] sm:$0xff]
          %v1756 = vld [vmem:[#allocation7 + $0x1f8] sm:$0xff]
          %v1757 = vld [vmem:[#allocation7 + $0x200] sm:$0xff]
          %v1758 = vld [vmem:[#allocation7 + $0x208] sm:$0xff]
          %v1759 = vld [vmem:[#allocation7 + $0x210] sm:$0xff]
          %v1760 = vld [vmem:[#allocation7 + $0x218] sm:$0xff]
          %v1761 = vld [vmem:[#allocation7 + $0x220] sm:$0xff]
          %v1762 = vld [vmem:[#allocation7 + $0x228] sm:$0xff]
          %v1763 = vld [vmem:[#allocation7 + $0x230] sm:$0xff]
          %v1764 = vld [vmem:[#allocation7 + $0x238] sm:$0xff]
          %v1765 = vld [vmem:[#allocation7 + $0x240] sm:$0xff]
          %v1766 = vld [vmem:[#allocation7 + $0x248] sm:$0xff]
          %v1767 = vld [vmem:[#allocation7 + $0x250] sm:$0xff]
          %v1768 = vld [vmem:[#allocation7 + $0x258] sm:$0xff]
          %v1769 = vld [vmem:[#allocation7 + $0x260] sm:$0xff]
          %v1770 = vld [vmem:[#allocation7 + $0x268] sm:$0xff]
          %v1771 = vld [vmem:[#allocation7 + $0x270] sm:$0xff]
          %v1772 = vld [vmem:[#allocation7 + $0x278] sm:$0xff]
          %v1773 = vld [vmem:[#allocation7 + $0x280] sm:$0xff]
          %v1774 = vld [vmem:[#allocation7 + $0x288] sm:$0xff]
          %v1775 = vld [vmem:[#allocation7 + $0x290] sm:$0xff]
          %v1776 = vld [vmem:[#allocation7 + $0x298] sm:$0xff]
          %v1777 = vld [vmem:[#allocation7 + $0x2a0] sm:$0xff]
          %v1778 = vld [vmem:[#allocation7 + $0x2a8] sm:$0xff]
          %v1779 = vld [vmem:[#allocation7 + $0x2b0] sm:$0xff]
          %v1780 = vld [vmem:[#allocation7 + $0x2b8] sm:$0xff]
          %v1781 = vld [vmem:[#allocation7 + $0x2c0] sm:$0xff]
          %v1782 = vld [vmem:[#allocation7 + $0x2c8] sm:$0xff]
          %v1783 = vld [vmem:[#allocation7 + $0x2d0] sm:$0xff]
          %v1784 = vld [vmem:[#allocation7 + $0x2d8] sm:$0xff]
          %v1785 = vld [vmem:[#allocation7 + $0x2e0] sm:$0xff]
          %v1786 = vld [vmem:[#allocation7 + $0x2e8] sm:$0xff]
          %v1787 = vld [vmem:[#allocation7 + $0x2f0] sm:$0xff]
          %v1788 = vld [vmem:[#allocation7 + $0x2f8] sm:$0xff]
          %v1789 = vld [vmem:[#allocation7 + $0x300] sm:$0xff]
          %v1790 = vld [vmem:[#allocation7 + $0x308] sm:$0xff]
          %v1791 = vld [vmem:[#allocation7 + $0x310] sm:$0xff]
          %v1792 = vld [vmem:[#allocation7 + $0x318] sm:$0xff]
          %v1793 = vld [vmem:[#allocation7 + $0x320] sm:$0xff]
          %v1794 = vld [vmem:[#allocation7 + $0x328] sm:$0xff]
          %v1795 = vld [vmem:[#allocation7 + $0x330] sm:$0xff]
          %v1796 = vld [vmem:[#allocation7 + $0x338] sm:$0xff]
          %v1797 = vld [vmem:[#allocation7 + $0x340] sm:$0xff]
          %v1798 = vld [vmem:[#allocation7 + $0x348] sm:$0xff]
          %v1799 = vld [vmem:[#allocation7 + $0x350] sm:$0xff]
          %v1800 = vld [vmem:[#allocation7 + $0x358] sm:$0xff]
          %v1801 = vld [vmem:[#allocation7 + $0x360] sm:$0xff]
          %v1802 = vld [vmem:[#allocation7 + $0x368] sm:$0xff]
          %v1803 = vld [vmem:[#allocation7 + $0x370] sm:$0xff]
          %v1804 = vld [vmem:[#allocation7 + $0x378] sm:$0xff]
          %v1805 = vld [vmem:[#allocation7 + $0x380] sm:$0xff]
          %v1806 = vld [vmem:[#allocation7 + $0x388] sm:$0xff]
          %v1807 = vld [vmem:[#allocation7 + $0x390] sm:$0xff]
          %v1808 = vld [vmem:[#allocation7 + $0x398] sm:$0xff]
          %v1809 = vld [vmem:[#allocation7 + $0x3a0] sm:$0xff]
          %v1810 = vld [vmem:[#allocation7 + $0x3a8] sm:$0xff]
          %v1811 = vld [vmem:[#allocation7 + $0x3b0] sm:$0xff]
          %v1812 = vld [vmem:[#allocation7 + $0x3b8] sm:$0xff]
          %v1813 = vld [vmem:[#allocation7 + $0x3c0] sm:$0xff]
          %v1814 = vld [vmem:[#allocation7 + $0x3c8] sm:$0xff]
          %v1815 = vld [vmem:[#allocation7 + $0x3d0] sm:$0xff]
          %v1816 = vld [vmem:[#allocation7 + $0x3d8] sm:$0xff]
          %v1817 = vld [vmem:[#allocation7 + $0x3e0] sm:$0xff]
          %v1818 = vld [vmem:[#allocation7 + $0x3e8] sm:$0xff]
          %v1819 = vld [vmem:[#allocation7 + $0x3f0] sm:$0xff]
          %v1820 = vld [vmem:[#allocation7 + $0x3f8] sm:$0xff]
          %v1821 = vld [vmem:[#allocation7 + $0x400] sm:$0xff]
          %v1822 = vld [vmem:[#allocation7 + $0x408] sm:$0xff]
          %v1823 = vld [vmem:[#allocation7 + $0x410] sm:$0xff]
          %v1824 = vld [vmem:[#allocation7 + $0x418] sm:$0xff]
          %v1825 = vld [vmem:[#allocation7 + $0x420] sm:$0xff]
          %v1826 = vld [vmem:[#allocation7 + $0x428] sm:$0xff]
          %v1827 = vld [vmem:[#allocation7 + $0x430] sm:$0xff]
          %v1828 = vld [vmem:[#allocation7 + $0x438] sm:$0xff]
          %v1829 = vld [vmem:[#allocation7 + $0x440] sm:$0xff]
          %v1830 = vld [vmem:[#allocation7 + $0x448] sm:$0xff]
          %v1831 = vld [vmem:[#allocation7 + $0x450] sm:$0xff]
          %v1832 = vld [vmem:[#allocation7 + $0x458] sm:$0xff]
          %v1833 = vld [vmem:[#allocation7 + $0x460] sm:$0xff]
          %v1834 = vld [vmem:[#allocation7 + $0x468] sm:$0xff]
          %v1835 = vld [vmem:[#allocation7 + $0x470] sm:$0xff]
          %v1836 = vld [vmem:[#allocation7 + $0x478] sm:$0xff]
          %v1837 = vld [vmem:[#allocation7 + $0x480] sm:$0xff]
          %v1838 = vld [vmem:[#allocation7 + $0x488] sm:$0xff]
          %v1839 = vld [vmem:[#allocation7 + $0x490] sm:$0xff]
          %v1840 = vld [vmem:[#allocation7 + $0x498] sm:$0xff]
          %v1841 = vld [vmem:[#allocation7 + $0x4a0] sm:$0xff]
          %v1842 = vld [vmem:[#allocation7 + $0x4a8] sm:$0xff]
          %v1843 = vld [vmem:[#allocation7 + $0x4b0] sm:$0xff]
          %v1844 = vld [vmem:[#allocation7 + $0x4b8] sm:$0xff]
          %v1845 = vld [vmem:[#allocation7 + $0x4c0] sm:$0xff]
          %v1846 = vld [vmem:[#allocation7 + $0x4c8] sm:$0xff]
          %v1847 = vld [vmem:[#allocation7 + $0x4d0] sm:$0xff]
          %v1848 = vld [vmem:[#allocation7 + $0x4d8] sm:$0xff]
          %v1849 = vld [vmem:[#allocation7 + $0x4e0] sm:$0xff]
          %v1850 = vld [vmem:[#allocation7 + $0x4e8] sm:$0xff]
          %v1851 = vld [vmem:[#allocation7 + $0x4f0] sm:$0xff]
          %v1852 = vld [vmem:[#allocation7 + $0x4f8] sm:$0xff]
          %v1853 = vld [vmem:[#allocation7 + $0x500] sm:$0xff]
          %v1854 = vld [vmem:[#allocation7 + $0x508] sm:$0xff]
          %v1855 = vld [vmem:[#allocation7 + $0x510] sm:$0xff]
          %v1856 = vld [vmem:[#allocation7 + $0x518] sm:$0xff]
          %v1857 = vld [vmem:[#allocation7 + $0x520] sm:$0xff]
          %v1858 = vld [vmem:[#allocation7 + $0x528] sm:$0xff]
          %v1859 = vld [vmem:[#allocation7 + $0x530] sm:$0xff]
          %v1860 = vld [vmem:[#allocation7 + $0x538] sm:$0xff]
          %v1861 = vld [vmem:[#allocation7 + $0x540] sm:$0xff]
          %v1862 = vld [vmem:[#allocation7 + $0x548] sm:$0xff]
          %v1863 = vld [vmem:[#allocation7 + $0x550] sm:$0xff]
          %v1864 = vld [vmem:[#allocation7 + $0x558] sm:$0xff]
          %v1865 = vld [vmem:[#allocation7 + $0x560] sm:$0xff]
          %v1866 = vld [vmem:[#allocation7 + $0x568] sm:$0xff]
          %v1867 = vld [vmem:[#allocation7 + $0x570] sm:$0xff]
          %v1868 = vld [vmem:[#allocation7 + $0x578] sm:$0xff]
          %v1869 = vld [vmem:[#allocation7 + $0x580] sm:$0xff]
          %v1870 = vld [vmem:[#allocation7 + $0x588] sm:$0xff]
          %v1871 = vld [vmem:[#allocation7 + $0x590] sm:$0xff]
          %v1872 = vld [vmem:[#allocation7 + $0x598] sm:$0xff]
          %v1873 = vld [vmem:[#allocation7 + $0x5a0] sm:$0xff]
          %v1874 = vld [vmem:[#allocation7 + $0x5a8] sm:$0xff]
          %v1875 = vld [vmem:[#allocation7 + $0x5b0] sm:$0xff]
          %v1876 = vld [vmem:[#allocation7 + $0x5b8] sm:$0xff]
          %v1877 = vld [vmem:[#allocation7 + $0x5c0] sm:$0xff]
          %v1878 = vld [vmem:[#allocation7 + $0x5c8] sm:$0xff]
          %v1879 = vld [vmem:[#allocation7 + $0x5d0] sm:$0xff]
          %v1880 = vld [vmem:[#allocation7 + $0x5d8] sm:$0xff]
          %v1881 = vld [vmem:[#allocation7 + $0x5e0] sm:$0xff]
          %v1882 = vld [vmem:[#allocation7 + $0x5e8] sm:$0xff]
          %v1883 = vld [vmem:[#allocation7 + $0x5f0] sm:$0xff]
          %v1884 = vld [vmem:[#allocation7 + $0x5f8] sm:$0xff]
          %v1885 = vld [vmem:[#allocation7 + $0x600] sm:$0xff]
          %v1886 = vld [vmem:[#allocation7 + $0x608] sm:$0xff]
          %v1887 = vld [vmem:[#allocation7 + $0x610] sm:$0xff]
          %v1888 = vld [vmem:[#allocation7 + $0x618] sm:$0xff]
          %v1889 = vld [vmem:[#allocation7 + $0x620] sm:$0xff]
          %v1890 = vld [vmem:[#allocation7 + $0x628] sm:$0xff]
          %v1891 = vld [vmem:[#allocation7 + $0x630] sm:$0xff]
          %v1892 = vld [vmem:[#allocation7 + $0x638] sm:$0xff]
          %v1893 = vld [vmem:[#allocation7 + $0x640] sm:$0xff]
          %v1894 = vld [vmem:[#allocation7 + $0x648] sm:$0xff]
          %v1895 = vld [vmem:[#allocation7 + $0x650] sm:$0xff]
          %v1896 = vld [vmem:[#allocation7 + $0x658] sm:$0xff]
          %v1897 = vld [vmem:[#allocation7 + $0x660] sm:$0xff]
          %v1898 = vld [vmem:[#allocation7 + $0x668] sm:$0xff]
          %v1899 = vld [vmem:[#allocation7 + $0x670] sm:$0xff]
          %v1900 = vld [vmem:[#allocation7 + $0x678] sm:$0xff]
          %v1901 = vld [vmem:[#allocation7 + $0x680] sm:$0xff]
          %v1902 = vld [vmem:[#allocation7 + $0x688] sm:$0xff]
          %v1903 = vld [vmem:[#allocation7 + $0x690] sm:$0xff]
          %v1904 = vld [vmem:[#allocation7 + $0x698] sm:$0xff]
          %v1905 = vld [vmem:[#allocation7 + $0x6a0] sm:$0xff]
          %v1906 = vld [vmem:[#allocation7 + $0x6a8] sm:$0xff]
          %v1907 = vld [vmem:[#allocation7 + $0x6b0] sm:$0xff]
          %v1908 = vld [vmem:[#allocation7 + $0x6b8] sm:$0xff]
          %v1909 = vld [vmem:[#allocation7 + $0x6c0] sm:$0xff]
          %v1910 = vld [vmem:[#allocation7 + $0x6c8] sm:$0xff]
          %v1911 = vld [vmem:[#allocation7 + $0x6d0] sm:$0xff]
          %v1912 = vld [vmem:[#allocation7 + $0x6d8] sm:$0xff]
          %v1913 = vld [vmem:[#allocation7 + $0x6e0] sm:$0xff]
          %v1914 = vld [vmem:[#allocation7 + $0x6e8] sm:$0xff]
          %v1915 = vld [vmem:[#allocation7 + $0x6f0] sm:$0xff]
          %v1916 = vld [vmem:[#allocation7 + $0x6f8] sm:$0xff]
          %v1917 = vld [vmem:[#allocation7 + $0x700] sm:$0xff]
          %v1918 = vld [vmem:[#allocation7 + $0x708] sm:$0xff]
          %v1919 = vld [vmem:[#allocation7 + $0x710] sm:$0xff]
          %v1920 = vld [vmem:[#allocation7 + $0x718] sm:$0xff]
          %v1921 = vld [vmem:[#allocation7 + $0x720] sm:$0xff]
          %v1922 = vld [vmem:[#allocation7 + $0x728] sm:$0xff]
          %v1923 = vld [vmem:[#allocation7 + $0x730] sm:$0xff]
          %v1924 = vld [vmem:[#allocation7 + $0x738] sm:$0xff]
          %v1925 = vld [vmem:[#allocation7 + $0x740] sm:$0xff]
          %v1926 = vld [vmem:[#allocation7 + $0x748] sm:$0xff]
          %v1927 = vld [vmem:[#allocation7 + $0x750] sm:$0xff]
          %v1928 = vld [vmem:[#allocation7 + $0x758] sm:$0xff]
          %v1929 = vld [vmem:[#allocation7 + $0x760] sm:$0xff]
          %v1930 = vld [vmem:[#allocation7 + $0x768] sm:$0xff]
          %v1931 = vld [vmem:[#allocation7 + $0x770] sm:$0xff]
          %v1932 = vld [vmem:[#allocation7 + $0x778] sm:$0xff]
          %v1933 = vld [vmem:[#allocation7 + $0x780] sm:$0xff]
          %v1934 = vld [vmem:[#allocation7 + $0x788] sm:$0xff]
          %v1935 = vld [vmem:[#allocation7 + $0x790] sm:$0xff]
          %v1936 = vld [vmem:[#allocation7 + $0x798] sm:$0xff]
          %v1937 = vld [vmem:[#allocation7 + $0x7a0] sm:$0xff]
          %v1938 = vld [vmem:[#allocation7 + $0x7a8] sm:$0xff]
          %v1939 = vld [vmem:[#allocation7 + $0x7b0] sm:$0xff]
          %v1940 = vld [vmem:[#allocation7 + $0x7b8] sm:$0xff]
          %v1941 = vld [vmem:[#allocation7 + $0x7c0] sm:$0xff]
          %v1942 = vld [vmem:[#allocation7 + $0x7c8] sm:$0xff]
          %v1943 = vld [vmem:[#allocation7 + $0x7d0] sm:$0xff]
          %v1944 = vld [vmem:[#allocation7 + $0x7d8] sm:$0xff]
          %v1945 = vld [vmem:[#allocation7 + $0x7e0] sm:$0xff]
          %v1946 = vld [vmem:[#allocation7 + $0x7e8] sm:$0xff]
          %v1947 = vld [vmem:[#allocation7 + $0x7f0] sm:$0xff]
          %v1948 = vld [vmem:[#allocation7 + $0x7f8] sm:$0xff]
          %v1949 = vld [vmem:[#allocation8] sm:$0xf]
          %v1951 = vlaneseq
          %v1952 = vshrl.u32 %v1951, 7
          %v1953 = vsub.s32 0, %v1952
          %v1954 = vrot.slane %v1949, %v1953
          %v1955 = vlaneseq
          %v1956 = vshrl.u32 %v1955, 7
          %v1957 = vsub.s32 1, %v1956
          %v1958 = vrot.slane %v1949, %v1957
          %v1959 = vlaneseq
          %v1960 = vshrl.u32 %v1959, 7
          %v1961 = vsub.s32 2, %v1960
          %v1962 = vrot.slane %v1949, %v1961
          %v1963 = vlaneseq
          %v1964 = vshrl.u32 %v1963, 7
          %v1965 = vsub.s32 3, %v1964
          %v1966 = vrot.slane %v1949, %v1965
          %v2227 = vunpack.c.l.b16 %v1693
          %v2228 = vunpack.c.h.b16 %v1693
          %v2229 = vunpack.c.l.b16 %v1694
          %v2230 = vunpack.c.h.b16 %v1694
          %v2231 = vunpack.c.l.b16 %v1695
          %v2232 = vunpack.c.h.b16 %v1695
          %v2233 = vunpack.c.l.b16 %v1696
          %v2234 = vunpack.c.h.b16 %v1696
          %v2235 = vunpack.c.l.b16 %v1697
          %v2236 = vunpack.c.h.b16 %v1697
          %v2237 = vunpack.c.l.b16 %v1698
          %v2238 = vunpack.c.h.b16 %v1698
          %v2239 = vunpack.c.l.b16 %v1699
          %v2240 = vunpack.c.h.b16 %v1699
          %v2241 = vunpack.c.l.b16 %v1700
          %v2242 = vunpack.c.h.b16 %v1700
          %v2243 = vunpack.c.l.b16 %v1701
          %v2244 = vunpack.c.h.b16 %v1701
          %v2245 = vunpack.c.l.b16 %v1702
          %v2246 = vunpack.c.h.b16 %v1702
          %v2247 = vunpack.c.l.b16 %v1703
          %v2248 = vunpack.c.h.b16 %v1703
          %v2249 = vunpack.c.l.b16 %v1704
          %v2250 = vunpack.c.h.b16 %v1704
          %v2251 = vunpack.c.l.b16 %v1705
          %v2252 = vunpack.c.h.b16 %v1705
          %v2253 = vunpack.c.l.b16 %v1706
          %v2254 = vunpack.c.h.b16 %v1706
          %v2255 = vunpack.c.l.b16 %v1707
          %v2256 = vunpack.c.h.b16 %v1707
          %v2257 = vunpack.c.l.b16 %v1708
          %v2258 = vunpack.c.h.b16 %v1708
          %v2259 = vunpack.c.l.b16 %v1709
          %v2260 = vunpack.c.h.b16 %v1709
          %v2261 = vunpack.c.l.b16 %v1710
          %v2262 = vunpack.c.h.b16 %v1710
          %v2263 = vunpack.c.l.b16 %v1711
          %v2264 = vunpack.c.h.b16 %v1711
          %v2265 = vunpack.c.l.b16 %v1712
          %v2266 = vunpack.c.h.b16 %v1712
          %v2267 = vunpack.c.l.b16 %v1713
          %v2268 = vunpack.c.h.b16 %v1713
          %v2269 = vunpack.c.l.b16 %v1714
          %v2270 = vunpack.c.h.b16 %v1714
          %v2271 = vunpack.c.l.b16 %v1715
          %v2272 = vunpack.c.h.b16 %v1715
          %v2273 = vunpack.c.l.b16 %v1716
          %v2274 = vunpack.c.h.b16 %v1716
          %v2275 = vunpack.c.l.b16 %v1717
          %v2276 = vunpack.c.h.b16 %v1717
          %v2277 = vunpack.c.l.b16 %v1718
          %v2278 = vunpack.c.h.b16 %v1718
          %v2279 = vunpack.c.l.b16 %v1719
          %v2280 = vunpack.c.h.b16 %v1719
          %v2281 = vunpack.c.l.b16 %v1720
          %v2282 = vunpack.c.h.b16 %v1720
          %v2283 = vunpack.c.l.b16 %v1721
          %v2284 = vunpack.c.h.b16 %v1721
          %v2285 = vunpack.c.l.b16 %v1722
          %v2286 = vunpack.c.h.b16 %v1722
          %v2287 = vunpack.c.l.b16 %v1723
          %v2288 = vunpack.c.h.b16 %v1723
          %v2289 = vunpack.c.l.b16 %v1724
          %v2290 = vunpack.c.h.b16 %v1724
          %v2291 = vunpack.c.l.b16 %v1725
          %v2292 = vunpack.c.h.b16 %v1725
          %v2293 = vunpack.c.l.b16 %v1726
          %v2294 = vunpack.c.h.b16 %v1726
          %v2295 = vunpack.c.l.b16 %v1727
          %v2296 = vunpack.c.h.b16 %v1727
          %v2297 = vunpack.c.l.b16 %v1728
          %v2298 = vunpack.c.h.b16 %v1728
          %v2299 = vunpack.c.l.b16 %v1729
          %v2300 = vunpack.c.h.b16 %v1729
          %v2301 = vunpack.c.l.b16 %v1730
          %v2302 = vunpack.c.h.b16 %v1730
          %v2303 = vunpack.c.l.b16 %v1731
          %v2304 = vunpack.c.h.b16 %v1731
          %v2305 = vunpack.c.l.b16 %v1732
          %v2306 = vunpack.c.h.b16 %v1732
          %v2307 = vunpack.c.l.b16 %v1733
          %v2308 = vunpack.c.h.b16 %v1733
          %v2309 = vunpack.c.l.b16 %v1734
          %v2310 = vunpack.c.h.b16 %v1734
          %v2311 = vunpack.c.l.b16 %v1735
          %v2312 = vunpack.c.h.b16 %v1735
          %v2313 = vunpack.c.l.b16 %v1736
          %v2314 = vunpack.c.h.b16 %v1736
          %v2315 = vunpack.c.l.b16 %v1737
          %v2316 = vunpack.c.h.b16 %v1737
          %v2317 = vunpack.c.l.b16 %v1738
          %v2318 = vunpack.c.h.b16 %v1738
          %v2319 = vunpack.c.l.b16 %v1739
          %v2320 = vunpack.c.h.b16 %v1739
          %v2321 = vunpack.c.l.b16 %v1740
          %v2322 = vunpack.c.h.b16 %v1740
          %v2323 = vunpack.c.l.b16 %v1741
          %v2324 = vunpack.c.h.b16 %v1741
          %v2325 = vunpack.c.l.b16 %v1742
          %v2326 = vunpack.c.h.b16 %v1742
          %v2327 = vunpack.c.l.b16 %v1743
          %v2328 = vunpack.c.h.b16 %v1743
          %v2329 = vunpack.c.l.b16 %v1744
          %v2330 = vunpack.c.h.b16 %v1744
          %v2331 = vunpack.c.l.b16 %v1745
          %v2332 = vunpack.c.h.b16 %v1745
          %v2333 = vunpack.c.l.b16 %v1746
          %v2334 = vunpack.c.h.b16 %v1746
          %v2335 = vunpack.c.l.b16 %v1747
          %v2336 = vunpack.c.h.b16 %v1747
          %v2337 = vunpack.c.l.b16 %v1748
          %v2338 = vunpack.c.h.b16 %v1748
          %v2339 = vunpack.c.l.b16 %v1749
          %v2340 = vunpack.c.h.b16 %v1749
          %v2341 = vunpack.c.l.b16 %v1750
          %v2342 = vunpack.c.h.b16 %v1750
          %v2343 = vunpack.c.l.b16 %v1751
          %v2344 = vunpack.c.h.b16 %v1751
          %v2345 = vunpack.c.l.b16 %v1752
          %v2346 = vunpack.c.h.b16 %v1752
          %v2347 = vunpack.c.l.b16 %v1753
          %v2348 = vunpack.c.h.b16 %v1753
          %v2349 = vunpack.c.l.b16 %v1754
          %v2350 = vunpack.c.h.b16 %v1754
          %v2351 = vunpack.c.l.b16 %v1755
          %v2352 = vunpack.c.h.b16 %v1755
          %v2353 = vunpack.c.l.b16 %v1756
          %v2354 = vunpack.c.h.b16 %v1756
          %v2355 = vunpack.c.l.b16 %v1757
          %v2356 = vunpack.c.h.b16 %v1757
          %v2357 = vunpack.c.l.b16 %v1758
          %v2358 = vunpack.c.h.b16 %v1758
          %v2359 = vunpack.c.l.b16 %v1759
          %v2360 = vunpack.c.h.b16 %v1759
          %v2361 = vunpack.c.l.b16 %v1760
          %v2362 = vunpack.c.h.b16 %v1760
          %v2363 = vunpack.c.l.b16 %v1761
          %v2364 = vunpack.c.h.b16 %v1761
          %v2365 = vunpack.c.l.b16 %v1762
          %v2366 = vunpack.c.h.b16 %v1762
          %v2367 = vunpack.c.l.b16 %v1763
          %v2368 = vunpack.c.h.b16 %v1763
          %v2369 = vunpack.c.l.b16 %v1764
          %v2370 = vunpack.c.h.b16 %v1764
          %v2371 = vunpack.c.l.b16 %v1765
          %v2372 = vunpack.c.h.b16 %v1765
          %v2373 = vunpack.c.l.b16 %v1766
          %v2374 = vunpack.c.h.b16 %v1766
          %v2375 = vunpack.c.l.b16 %v1767
          %v2376 = vunpack.c.h.b16 %v1767
          %v2377 = vunpack.c.l.b16 %v1768
          %v2378 = vunpack.c.h.b16 %v1768
          %v2379 = vunpack.c.l.b16 %v1769
          %v2380 = vunpack.c.h.b16 %v1769
          %v2381 = vunpack.c.l.b16 %v1770
          %v2382 = vunpack.c.h.b16 %v1770
          %v2383 = vunpack.c.l.b16 %v1771
          %v2384 = vunpack.c.h.b16 %v1771
          %v2385 = vunpack.c.l.b16 %v1772
          %v2386 = vunpack.c.h.b16 %v1772
          %v2387 = vunpack.c.l.b16 %v1773
          %v2388 = vunpack.c.h.b16 %v1773
          %v2389 = vunpack.c.l.b16 %v1774
          %v2390 = vunpack.c.h.b16 %v1774
          %v2391 = vunpack.c.l.b16 %v1775
          %v2392 = vunpack.c.h.b16 %v1775
          %v2393 = vunpack.c.l.b16 %v1776
          %v2394 = vunpack.c.h.b16 %v1776
          %v2395 = vunpack.c.l.b16 %v1777
          %v2396 = vunpack.c.h.b16 %v1777
          %v2397 = vunpack.c.l.b16 %v1778
          %v2398 = vunpack.c.h.b16 %v1778
          %v2399 = vunpack.c.l.b16 %v1779
          %v2400 = vunpack.c.h.b16 %v1779
          %v2401 = vunpack.c.l.b16 %v1780
          %v2402 = vunpack.c.h.b16 %v1780
          %v2403 = vunpack.c.l.b16 %v1781
          %v2404 = vunpack.c.h.b16 %v1781
          %v2405 = vunpack.c.l.b16 %v1782
          %v2406 = vunpack.c.h.b16 %v1782
          %v2407 = vunpack.c.l.b16 %v1783
          %v2408 = vunpack.c.h.b16 %v1783
          %v2409 = vunpack.c.l.b16 %v1784
          %v2410 = vunpack.c.h.b16 %v1784
          %v2411 = vunpack.c.l.b16 %v1785
          %v2412 = vunpack.c.h.b16 %v1785
          %v2413 = vunpack.c.l.b16 %v1786
          %v2414 = vunpack.c.h.b16 %v1786
          %v2415 = vunpack.c.l.b16 %v1787
          %v2416 = vunpack.c.h.b16 %v1787
          %v2417 = vunpack.c.l.b16 %v1788
          %v2418 = vunpack.c.h.b16 %v1788
          %v2419 = vunpack.c.l.b16 %v1789
          %v2420 = vunpack.c.h.b16 %v1789
          %v2421 = vunpack.c.l.b16 %v1790
          %v2422 = vunpack.c.h.b16 %v1790
          %v2423 = vunpack.c.l.b16 %v1791
          %v2424 = vunpack.c.h.b16 %v1791
          %v2425 = vunpack.c.l.b16 %v1792
          %v2426 = vunpack.c.h.b16 %v1792
          %v2427 = vunpack.c.l.b16 %v1793
          %v2428 = vunpack.c.h.b16 %v1793
          %v2429 = vunpack.c.l.b16 %v1794
          %v2430 = vunpack.c.h.b16 %v1794
          %v2431 = vunpack.c.l.b16 %v1795
          %v2432 = vunpack.c.h.b16 %v1795
          %v2433 = vunpack.c.l.b16 %v1796
          %v2434 = vunpack.c.h.b16 %v1796
          %v2435 = vunpack.c.l.b16 %v1797
          %v2436 = vunpack.c.h.b16 %v1797
          %v2437 = vunpack.c.l.b16 %v1798
          %v2438 = vunpack.c.h.b16 %v1798
          %v2439 = vunpack.c.l.b16 %v1799
          %v2440 = vunpack.c.h.b16 %v1799
          %v2441 = vunpack.c.l.b16 %v1800
          %v2442 = vunpack.c.h.b16 %v1800
          %v2443 = vunpack.c.l.b16 %v1801
          %v2444 = vunpack.c.h.b16 %v1801
          %v2445 = vunpack.c.l.b16 %v1802
          %v2446 = vunpack.c.h.b16 %v1802
          %v2447 = vunpack.c.l.b16 %v1803
          %v2448 = vunpack.c.h.b16 %v1803
          %v2449 = vunpack.c.l.b16 %v1804
          %v2450 = vunpack.c.h.b16 %v1804
          %v2451 = vunpack.c.l.b16 %v1805
          %v2452 = vunpack.c.h.b16 %v1805
          %v2453 = vunpack.c.l.b16 %v1806
          %v2454 = vunpack.c.h.b16 %v1806
          %v2455 = vunpack.c.l.b16 %v1807
          %v2456 = vunpack.c.h.b16 %v1807
          %v2457 = vunpack.c.l.b16 %v1808
          %v2458 = vunpack.c.h.b16 %v1808
          %v2459 = vunpack.c.l.b16 %v1809
          %v2460 = vunpack.c.h.b16 %v1809
          %v2461 = vunpack.c.l.b16 %v1810
          %v2462 = vunpack.c.h.b16 %v1810
          %v2463 = vunpack.c.l.b16 %v1811
          %v2464 = vunpack.c.h.b16 %v1811
          %v2465 = vunpack.c.l.b16 %v1812
          %v2466 = vunpack.c.h.b16 %v1812
          %v2467 = vunpack.c.l.b16 %v1813
          %v2468 = vunpack.c.h.b16 %v1813
          %v2469 = vunpack.c.l.b16 %v1814
          %v2470 = vunpack.c.h.b16 %v1814
          %v2471 = vunpack.c.l.b16 %v1815
          %v2472 = vunpack.c.h.b16 %v1815
          %v2473 = vunpack.c.l.b16 %v1816
          %v2474 = vunpack.c.h.b16 %v1816
          %v2475 = vunpack.c.l.b16 %v1817
          %v2476 = vunpack.c.h.b16 %v1817
          %v2477 = vunpack.c.l.b16 %v1818
          %v2478 = vunpack.c.h.b16 %v1818
          %v2479 = vunpack.c.l.b16 %v1819
          %v2480 = vunpack.c.h.b16 %v1819
          %v2481 = vunpack.c.l.b16 %v1820
          %v2482 = vunpack.c.h.b16 %v1820
          %v2483 = vunpack.c.l.b16 %v1821
          %v2484 = vunpack.c.h.b16 %v1821
          %v2485 = vunpack.c.l.b16 %v1822
          %v2486 = vunpack.c.h.b16 %v1822
          %v2487 = vunpack.c.l.b16 %v1823
          %v2488 = vunpack.c.h.b16 %v1823
          %v2489 = vunpack.c.l.b16 %v1824
          %v2490 = vunpack.c.h.b16 %v1824
          %v2491 = vunpack.c.l.b16 %v1825
          %v2492 = vunpack.c.h.b16 %v1825
          %v2493 = vunpack.c.l.b16 %v1826
          %v2494 = vunpack.c.h.b16 %v1826
          %v2495 = vunpack.c.l.b16 %v1827
          %v2496 = vunpack.c.h.b16 %v1827
          %v2497 = vunpack.c.l.b16 %v1828
          %v2498 = vunpack.c.h.b16 %v1828
          %v2499 = vunpack.c.l.b16 %v1829
          %v2500 = vunpack.c.h.b16 %v1829
          %v2501 = vunpack.c.l.b16 %v1830
          %v2502 = vunpack.c.h.b16 %v1830
          %v2503 = vunpack.c.l.b16 %v1831
          %v2504 = vunpack.c.h.b16 %v1831
          %v2505 = vunpack.c.l.b16 %v1832
          %v2506 = vunpack.c.h.b16 %v1832
          %v2507 = vunpack.c.l.b16 %v1833
          %v2508 = vunpack.c.h.b16 %v1833
          %v2509 = vunpack.c.l.b16 %v1834
          %v2510 = vunpack.c.h.b16 %v1834
          %v2511 = vunpack.c.l.b16 %v1835
          %v2512 = vunpack.c.h.b16 %v1835
          %v2513 = vunpack.c.l.b16 %v1836
          %v2514 = vunpack.c.h.b16 %v1836
          %v2515 = vunpack.c.l.b16 %v1837
          %v2516 = vunpack.c.h.b16 %v1837
          %v2517 = vunpack.c.l.b16 %v1838
          %v2518 = vunpack.c.h.b16 %v1838
          %v2519 = vunpack.c.l.b16 %v1839
          %v2520 = vunpack.c.h.b16 %v1839
          %v2521 = vunpack.c.l.b16 %v1840
          %v2522 = vunpack.c.h.b16 %v1840
          %v2523 = vunpack.c.l.b16 %v1841
          %v2524 = vunpack.c.h.b16 %v1841
          %v2525 = vunpack.c.l.b16 %v1842
          %v2526 = vunpack.c.h.b16 %v1842
          %v2527 = vunpack.c.l.b16 %v1843
          %v2528 = vunpack.c.h.b16 %v1843
          %v2529 = vunpack.c.l.b16 %v1844
          %v2530 = vunpack.c.h.b16 %v1844
          %v2531 = vunpack.c.l.b16 %v1845
          %v2532 = vunpack.c.h.b16 %v1845
          %v2533 = vunpack.c.l.b16 %v1846
          %v2534 = vunpack.c.h.b16 %v1846
          %v2535 = vunpack.c.l.b16 %v1847
          %v2536 = vunpack.c.h.b16 %v1847
          %v2537 = vunpack.c.l.b16 %v1848
          %v2538 = vunpack.c.h.b16 %v1848
          %v2539 = vunpack.c.l.b16 %v1849
          %v2540 = vunpack.c.h.b16 %v1849
          %v2541 = vunpack.c.l.b16 %v1850
          %v2542 = vunpack.c.h.b16 %v1850
          %v2543 = vunpack.c.l.b16 %v1851
          %v2544 = vunpack.c.h.b16 %v1851
          %v2545 = vunpack.c.l.b16 %v1852
          %v2546 = vunpack.c.h.b16 %v1852
          %v2547 = vunpack.c.l.b16 %v1853
          %v2548 = vunpack.c.h.b16 %v1853
          %v2549 = vunpack.c.l.b16 %v1854
          %v2550 = vunpack.c.h.b16 %v1854
          %v2551 = vunpack.c.l.b16 %v1855
          %v2552 = vunpack.c.h.b16 %v1855
          %v2553 = vunpack.c.l.b16 %v1856
          %v2554 = vunpack.c.h.b16 %v1856
          %v2555 = vunpack.c.l.b16 %v1857
          %v2556 = vunpack.c.h.b16 %v1857
          %v2557 = vunpack.c.l.b16 %v1858
          %v2558 = vunpack.c.h.b16 %v1858
          %v2559 = vunpack.c.l.b16 %v1859
          %v2560 = vunpack.c.h.b16 %v1859
          %v2561 = vunpack.c.l.b16 %v1860
          %v2562 = vunpack.c.h.b16 %v1860
          %v2563 = vunpack.c.l.b16 %v1861
          %v2564 = vunpack.c.h.b16 %v1861
          %v2565 = vunpack.c.l.b16 %v1862
          %v2566 = vunpack.c.h.b16 %v1862
          %v2567 = vunpack.c.l.b16 %v1863
          %v2568 = vunpack.c.h.b16 %v1863
          %v2569 = vunpack.c.l.b16 %v1864
          %v2570 = vunpack.c.h.b16 %v1864
          %v2571 = vunpack.c.l.b16 %v1865
          %v2572 = vunpack.c.h.b16 %v1865
          %v2573 = vunpack.c.l.b16 %v1866
          %v2574 = vunpack.c.h.b16 %v1866
          %v2575 = vunpack.c.l.b16 %v1867
          %v2576 = vunpack.c.h.b16 %v1867
          %v2577 = vunpack.c.l.b16 %v1868
          %v2578 = vunpack.c.h.b16 %v1868
          %v2579 = vunpack.c.l.b16 %v1869
          %v2580 = vunpack.c.h.b16 %v1869
          %v2581 = vunpack.c.l.b16 %v1870
          %v2582 = vunpack.c.h.b16 %v1870
          %v2583 = vunpack.c.l.b16 %v1871
          %v2584 = vunpack.c.h.b16 %v1871
          %v2585 = vunpack.c.l.b16 %v1872
          %v2586 = vunpack.c.h.b16 %v1872
          %v2587 = vunpack.c.l.b16 %v1873
          %v2588 = vunpack.c.h.b16 %v1873
          %v2589 = vunpack.c.l.b16 %v1874
          %v2590 = vunpack.c.h.b16 %v1874
          %v2591 = vunpack.c.l.b16 %v1875
          %v2592 = vunpack.c.h.b16 %v1875
          %v2593 = vunpack.c.l.b16 %v1876
          %v2594 = vunpack.c.h.b16 %v1876
          %v2595 = vunpack.c.l.b16 %v1877
          %v2596 = vunpack.c.h.b16 %v1877
          %v2597 = vunpack.c.l.b16 %v1878
          %v2598 = vunpack.c.h.b16 %v1878
          %v2599 = vunpack.c.l.b16 %v1879
          %v2600 = vunpack.c.h.b16 %v1879
          %v2601 = vunpack.c.l.b16 %v1880
          %v2602 = vunpack.c.h.b16 %v1880
          %v2603 = vunpack.c.l.b16 %v1881
          %v2604 = vunpack.c.h.b16 %v1881
          %v2605 = vunpack.c.l.b16 %v1882
          %v2606 = vunpack.c.h.b16 %v1882
          %v2607 = vunpack.c.l.b16 %v1883
          %v2608 = vunpack.c.h.b16 %v1883
          %v2609 = vunpack.c.l.b16 %v1884
          %v2610 = vunpack.c.h.b16 %v1884
          %v2611 = vunpack.c.l.b16 %v1885
          %v2612 = vunpack.c.h.b16 %v1885
          %v2613 = vunpack.c.l.b16 %v1886
          %v2614 = vunpack.c.h.b16 %v1886
          %v2615 = vunpack.c.l.b16 %v1887
          %v2616 = vunpack.c.h.b16 %v1887
          %v2617 = vunpack.c.l.b16 %v1888
          %v2618 = vunpack.c.h.b16 %v1888
          %v2619 = vunpack.c.l.b16 %v1889
          %v2620 = vunpack.c.h.b16 %v1889
          %v2621 = vunpack.c.l.b16 %v1890
          %v2622 = vunpack.c.h.b16 %v1890
          %v2623 = vunpack.c.l.b16 %v1891
          %v2624 = vunpack.c.h.b16 %v1891
          %v2625 = vunpack.c.l.b16 %v1892
          %v2626 = vunpack.c.h.b16 %v1892
          %v2627 = vunpack.c.l.b16 %v1893
          %v2628 = vunpack.c.h.b16 %v1893
          %v2629 = vunpack.c.l.b16 %v1894
          %v2630 = vunpack.c.h.b16 %v1894
          %v2631 = vunpack.c.l.b16 %v1895
          %v2632 = vunpack.c.h.b16 %v1895
          %v2633 = vunpack.c.l.b16 %v1896
          %v2634 = vunpack.c.h.b16 %v1896
          %v2635 = vunpack.c.l.b16 %v1897
          %v2636 = vunpack.c.h.b16 %v1897
          %v2637 = vunpack.c.l.b16 %v1898
          %v2638 = vunpack.c.h.b16 %v1898
          %v2639 = vunpack.c.l.b16 %v1899
          %v2640 = vunpack.c.h.b16 %v1899
          %v2641 = vunpack.c.l.b16 %v1900
          %v2642 = vunpack.c.h.b16 %v1900
          %v2643 = vunpack.c.l.b16 %v1901
          %v2644 = vunpack.c.h.b16 %v1901
          %v2645 = vunpack.c.l.b16 %v1902
          %v2646 = vunpack.c.h.b16 %v1902
          %v2647 = vunpack.c.l.b16 %v1903
          %v2648 = vunpack.c.h.b16 %v1903
          %v2649 = vunpack.c.l.b16 %v1904
          %v2650 = vunpack.c.h.b16 %v1904
          %v2651 = vunpack.c.l.b16 %v1905
          %v2652 = vunpack.c.h.b16 %v1905
          %v2653 = vunpack.c.l.b16 %v1906
          %v2654 = vunpack.c.h.b16 %v1906
          %v2655 = vunpack.c.l.b16 %v1907
          %v2656 = vunpack.c.h.b16 %v1907
          %v2657 = vunpack.c.l.b16 %v1908
          %v2658 = vunpack.c.h.b16 %v1908
          %v2659 = vunpack.c.l.b16 %v1909
          %v2660 = vunpack.c.h.b16 %v1909
          %v2661 = vunpack.c.l.b16 %v1910
          %v2662 = vunpack.c.h.b16 %v1910
          %v2663 = vunpack.c.l.b16 %v1911
          %v2664 = vunpack.c.h.b16 %v1911
          %v2665 = vunpack.c.l.b16 %v1912
          %v2666 = vunpack.c.h.b16 %v1912
          %v2667 = vunpack.c.l.b16 %v1913
          %v2668 = vunpack.c.h.b16 %v1913
          %v2669 = vunpack.c.l.b16 %v1914
          %v2670 = vunpack.c.h.b16 %v1914
          %v2671 = vunpack.c.l.b16 %v1915
          %v2672 = vunpack.c.h.b16 %v1915
          %v2673 = vunpack.c.l.b16 %v1916
          %v2674 = vunpack.c.h.b16 %v1916
          %v2675 = vunpack.c.l.b16 %v1917
          %v2676 = vunpack.c.h.b16 %v1917
          %v2677 = vunpack.c.l.b16 %v1918
          %v2678 = vunpack.c.h.b16 %v1918
          %v2679 = vunpack.c.l.b16 %v1919
          %v2680 = vunpack.c.h.b16 %v1919
          %v2681 = vunpack.c.l.b16 %v1920
          %v2682 = vunpack.c.h.b16 %v1920
          %v2683 = vunpack.c.l.b16 %v1921
          %v2684 = vunpack.c.h.b16 %v1921
          %v2685 = vunpack.c.l.b16 %v1922
          %v2686 = vunpack.c.h.b16 %v1922
          %v2687 = vunpack.c.l.b16 %v1923
          %v2688 = vunpack.c.h.b16 %v1923
          %v2689 = vunpack.c.l.b16 %v1924
          %v2690 = vunpack.c.h.b16 %v1924
          %v2691 = vunpack.c.l.b16 %v1925
          %v2692 = vunpack.c.h.b16 %v1925
          %v2693 = vunpack.c.l.b16 %v1926
          %v2694 = vunpack.c.h.b16 %v1926
          %v2695 = vunpack.c.l.b16 %v1927
          %v2696 = vunpack.c.h.b16 %v1927
          %v2697 = vunpack.c.l.b16 %v1928
          %v2698 = vunpack.c.h.b16 %v1928
          %v2699 = vunpack.c.l.b16 %v1929
          %v2700 = vunpack.c.h.b16 %v1929
          %v2701 = vunpack.c.l.b16 %v1930
          %v2702 = vunpack.c.h.b16 %v1930
          %v2703 = vunpack.c.l.b16 %v1931
          %v2704 = vunpack.c.h.b16 %v1931
          %v2705 = vunpack.c.l.b16 %v1932
          %v2706 = vunpack.c.h.b16 %v1932
          %v2707 = vunpack.c.l.b16 %v1933
          %v2708 = vunpack.c.h.b16 %v1933
          %v2709 = vunpack.c.l.b16 %v1934
          %v2710 = vunpack.c.h.b16 %v1934
          %v2711 = vunpack.c.l.b16 %v1935
          %v2712 = vunpack.c.h.b16 %v1935
          %v2713 = vunpack.c.l.b16 %v1936
          %v2714 = vunpack.c.h.b16 %v1936
          %v2715 = vunpack.c.l.b16 %v1937
          %v2716 = vunpack.c.h.b16 %v1937
          %v2717 = vunpack.c.l.b16 %v1938
          %v2718 = vunpack.c.h.b16 %v1938
          %v2719 = vunpack.c.l.b16 %v1939
          %v2720 = vunpack.c.h.b16 %v1939
          %v2721 = vunpack.c.l.b16 %v1940
          %v2722 = vunpack.c.h.b16 %v1940
          %v2723 = vunpack.c.l.b16 %v1941
          %v2724 = vunpack.c.h.b16 %v1941
          %v2725 = vunpack.c.l.b16 %v1942
          %v2726 = vunpack.c.h.b16 %v1942
          %v2727 = vunpack.c.l.b16 %v1943
          %v2728 = vunpack.c.h.b16 %v1943
          %v2729 = vunpack.c.l.b16 %v1944
          %v2730 = vunpack.c.h.b16 %v1944
          %v2731 = vunpack.c.l.b16 %v1945
          %v2732 = vunpack.c.h.b16 %v1945
          %v2733 = vunpack.c.l.b16 %v1946
          %v2734 = vunpack.c.h.b16 %v1946
          %v2735 = vunpack.c.l.b16 %v1947
          %v2736 = vunpack.c.h.b16 %v1947
          %v2737 = vunpack.c.l.b16 %v1948
          %v2738 = vunpack.c.h.b16 %v1948
          %v2739 = vpack.c.b16 %v2231, %v2227
          %v2740 = vpack.c.b16 %v2232, %v2228
          %v2741 = vpack.c.b16 %v2233, %v2229
          %v2742 = vpack.c.b16 %v2234, %v2230
          %v2743 = vpack.c.b16 %v2239, %v2235
          %v2744 = vpack.c.b16 %v2240, %v2236
          %v2745 = vpack.c.b16 %v2241, %v2237
          %v2746 = vpack.c.b16 %v2242, %v2238
          %v2747 = vpack.c.b16 %v2247, %v2243
          %v2748 = vpack.c.b16 %v2248, %v2244
          %v2749 = vpack.c.b16 %v2249, %v2245
          %v2750 = vpack.c.b16 %v2250, %v2246
          %v2751 = vpack.c.b16 %v2255, %v2251
          %v2752 = vpack.c.b16 %v2256, %v2252
          %v2753 = vpack.c.b16 %v2257, %v2253
          %v2754 = vpack.c.b16 %v2258, %v2254
          %v2755 = vpack.c.b16 %v2263, %v2259
          %v2756 = vpack.c.b16 %v2264, %v2260
          %v2757 = vpack.c.b16 %v2265, %v2261
          %v2758 = vpack.c.b16 %v2266, %v2262
          %v2759 = vpack.c.b16 %v2271, %v2267
          %v2760 = vpack.c.b16 %v2272, %v2268
          %v2761 = vpack.c.b16 %v2273, %v2269
          %v2762 = vpack.c.b16 %v2274, %v2270
          %v2763 = vpack.c.b16 %v2279, %v2275
          %v2764 = vpack.c.b16 %v2280, %v2276
          %v2765 = vpack.c.b16 %v2281, %v2277
          %v2766 = vpack.c.b16 %v2282, %v2278
          %v2767 = vpack.c.b16 %v2287, %v2283
          %v2768 = vpack.c.b16 %v2288, %v2284
          %v2769 = vpack.c.b16 %v2289, %v2285
          %v2770 = vpack.c.b16 %v2290, %v2286
          %v2771 = vpack.c.b16 %v2295, %v2291
          %v2772 = vpack.c.b16 %v2296, %v2292
          %v2773 = vpack.c.b16 %v2297, %v2293
          %v2774 = vpack.c.b16 %v2298, %v2294
          %v2775 = vpack.c.b16 %v2303, %v2299
          %v2776 = vpack.c.b16 %v2304, %v2300
          %v2777 = vpack.c.b16 %v2305, %v2301
          %v2778 = vpack.c.b16 %v2306, %v2302
          %v2779 = vpack.c.b16 %v2311, %v2307
          %v2780 = vpack.c.b16 %v2312, %v2308
          %v2781 = vpack.c.b16 %v2313, %v2309
          %v2782 = vpack.c.b16 %v2314, %v2310
          %v2783 = vpack.c.b16 %v2319, %v2315
          %v2784 = vpack.c.b16 %v2320, %v2316
          %v2785 = vpack.c.b16 %v2321, %v2317
          %v2786 = vpack.c.b16 %v2322, %v2318
          %v2787 = vpack.c.b16 %v2327, %v2323
          %v2788 = vpack.c.b16 %v2328, %v2324
          %v2789 = vpack.c.b16 %v2329, %v2325
          %v2790 = vpack.c.b16 %v2330, %v2326
          %v2791 = vpack.c.b16 %v2335, %v2331
          %v2792 = vpack.c.b16 %v2336, %v2332
          %v2793 = vpack.c.b16 %v2337, %v2333
          %v2794 = vpack.c.b16 %v2338, %v2334
          %v2795 = vpack.c.b16 %v2343, %v2339
          %v2796 = vpack.c.b16 %v2344, %v2340
          %v2797 = vpack.c.b16 %v2345, %v2341
          %v2798 = vpack.c.b16 %v2346, %v2342
          %v2799 = vpack.c.b16 %v2351, %v2347
          %v2800 = vpack.c.b16 %v2352, %v2348
          %v2801 = vpack.c.b16 %v2353, %v2349
          %v2802 = vpack.c.b16 %v2354, %v2350
          %v2803 = vpack.c.b16 %v2359, %v2355
          %v2804 = vpack.c.b16 %v2360, %v2356
          %v2805 = vpack.c.b16 %v2361, %v2357
          %v2806 = vpack.c.b16 %v2362, %v2358
          %v2807 = vpack.c.b16 %v2367, %v2363
          %v2808 = vpack.c.b16 %v2368, %v2364
          %v2809 = vpack.c.b16 %v2369, %v2365
          %v2810 = vpack.c.b16 %v2370, %v2366
          %v2811 = vpack.c.b16 %v2375, %v2371
          %v2812 = vpack.c.b16 %v2376, %v2372
          %v2813 = vpack.c.b16 %v2377, %v2373
          %v2814 = vpack.c.b16 %v2378, %v2374
          %v2815 = vpack.c.b16 %v2383, %v2379
          %v2816 = vpack.c.b16 %v2384, %v2380
          %v2817 = vpack.c.b16 %v2385, %v2381
          %v2818 = vpack.c.b16 %v2386, %v2382
          %v2819 = vpack.c.b16 %v2391, %v2387
          %v2820 = vpack.c.b16 %v2392, %v2388
          %v2821 = vpack.c.b16 %v2393, %v2389
          %v2822 = vpack.c.b16 %v2394, %v2390
          %v2823 = vpack.c.b16 %v2399, %v2395
          %v2824 = vpack.c.b16 %v2400, %v2396
          %v2825 = vpack.c.b16 %v2401, %v2397
          %v2826 = vpack.c.b16 %v2402, %v2398
          %v2827 = vpack.c.b16 %v2407, %v2403
          %v2828 = vpack.c.b16 %v2408, %v2404
          %v2829 = vpack.c.b16 %v2409, %v2405
          %v2830 = vpack.c.b16 %v2410, %v2406
          %v2831 = vpack.c.b16 %v2415, %v2411
          %v2832 = vpack.c.b16 %v2416, %v2412
          %v2833 = vpack.c.b16 %v2417, %v2413
          %v2834 = vpack.c.b16 %v2418, %v2414
          %v2835 = vpack.c.b16 %v2423, %v2419
          %v2836 = vpack.c.b16 %v2424, %v2420
          %v2837 = vpack.c.b16 %v2425, %v2421
          %v2838 = vpack.c.b16 %v2426, %v2422
          %v2839 = vpack.c.b16 %v2431, %v2427
          %v2840 = vpack.c.b16 %v2432, %v2428
          %v2841 = vpack.c.b16 %v2433, %v2429
          %v2842 = vpack.c.b16 %v2434, %v2430
          %v2843 = vpack.c.b16 %v2439, %v2435
          %v2844 = vpack.c.b16 %v2440, %v2436
          %v2845 = vpack.c.b16 %v2441, %v2437
          %v2846 = vpack.c.b16 %v2442, %v2438
          %v2847 = vpack.c.b16 %v2447, %v2443
          %v2848 = vpack.c.b16 %v2448, %v2444
          %v2849 = vpack.c.b16 %v2449, %v2445
          %v2850 = vpack.c.b16 %v2450, %v2446
          %v2851 = vpack.c.b16 %v2455, %v2451
          %v2852 = vpack.c.b16 %v2456, %v2452
          %v2853 = vpack.c.b16 %v2457, %v2453
          %v2854 = vpack.c.b16 %v2458, %v2454
          %v2855 = vpack.c.b16 %v2463, %v2459
          %v2856 = vpack.c.b16 %v2464, %v2460
          %v2857 = vpack.c.b16 %v2465, %v2461
          %v2858 = vpack.c.b16 %v2466, %v2462
          %v2859 = vpack.c.b16 %v2471, %v2467
          %v2860 = vpack.c.b16 %v2472, %v2468
          %v2861 = vpack.c.b16 %v2473, %v2469
          %v2862 = vpack.c.b16 %v2474, %v2470
          %v2863 = vpack.c.b16 %v2479, %v2475
          %v2864 = vpack.c.b16 %v2480, %v2476
          %v2865 = vpack.c.b16 %v2481, %v2477
          %v2866 = vpack.c.b16 %v2482, %v2478
          %v2867 = vpack.c.b16 %v2487, %v2483
          %v2868 = vpack.c.b16 %v2488, %v2484
          %v2869 = vpack.c.b16 %v2489, %v2485
          %v2870 = vpack.c.b16 %v2490, %v2486
          %v2871 = vpack.c.b16 %v2495, %v2491
          %v2872 = vpack.c.b16 %v2496, %v2492
          %v2873 = vpack.c.b16 %v2497, %v2493
          %v2874 = vpack.c.b16 %v2498, %v2494
          %v2875 = vpack.c.b16 %v2503, %v2499
          %v2876 = vpack.c.b16 %v2504, %v2500
          %v2877 = vpack.c.b16 %v2505, %v2501
          %v2878 = vpack.c.b16 %v2506, %v2502
          %v2879 = vpack.c.b16 %v2511, %v2507
          %v2880 = vpack.c.b16 %v2512, %v2508
          %v2881 = vpack.c.b16 %v2513, %v2509
          %v2882 = vpack.c.b16 %v2514, %v2510
          %v2883 = vpack.c.b16 %v2519, %v2515
          %v2884 = vpack.c.b16 %v2520, %v2516
          %v2885 = vpack.c.b16 %v2521, %v2517
          %v2886 = vpack.c.b16 %v2522, %v2518
          %v2887 = vpack.c.b16 %v2527, %v2523
          %v2888 = vpack.c.b16 %v2528, %v2524
          %v2889 = vpack.c.b16 %v2529, %v2525
          %v2890 = vpack.c.b16 %v2530, %v2526
          %v2891 = vpack.c.b16 %v2535, %v2531
          %v2892 = vpack.c.b16 %v2536, %v2532
          %v2893 = vpack.c.b16 %v2537, %v2533
          %v2894 = vpack.c.b16 %v2538, %v2534
          %v2895 = vpack.c.b16 %v2543, %v2539
          %v2896 = vpack.c.b16 %v2544, %v2540
          %v2897 = vpack.c.b16 %v2545, %v2541
          %v2898 = vpack.c.b16 %v2546, %v2542
          %v2899 = vpack.c.b16 %v2551, %v2547
          %v2900 = vpack.c.b16 %v2552, %v2548
          %v2901 = vpack.c.b16 %v2553, %v2549
          %v2902 = vpack.c.b16 %v2554, %v2550
          %v2903 = vpack.c.b16 %v2559, %v2555
          %v2904 = vpack.c.b16 %v2560, %v2556
          %v2905 = vpack.c.b16 %v2561, %v2557
          %v2906 = vpack.c.b16 %v2562, %v2558
          %v2907 = vpack.c.b16 %v2567, %v2563
          %v2908 = vpack.c.b16 %v2568, %v2564
          %v2909 = vpack.c.b16 %v2569, %v2565
          %v2910 = vpack.c.b16 %v2570, %v2566
          %v2911 = vpack.c.b16 %v2575, %v2571
          %v2912 = vpack.c.b16 %v2576, %v2572
          %v2913 = vpack.c.b16 %v2577, %v2573
          %v2914 = vpack.c.b16 %v2578, %v2574
          %v2915 = vpack.c.b16 %v2583, %v2579
          %v2916 = vpack.c.b16 %v2584, %v2580
          %v2917 = vpack.c.b16 %v2585, %v2581
          %v2918 = vpack.c.b16 %v2586, %v2582
          %v2919 = vpack.c.b16 %v2591, %v2587
          %v2920 = vpack.c.b16 %v2592, %v2588
          %v2921 = vpack.c.b16 %v2593, %v2589
          %v2922 = vpack.c.b16 %v2594, %v2590
          %v2923 = vpack.c.b16 %v2599, %v2595
          %v2924 = vpack.c.b16 %v2600, %v2596
          %v2925 = vpack.c.b16 %v2601, %v2597
          %v2926 = vpack.c.b16 %v2602, %v2598
          %v2927 = vpack.c.b16 %v2607, %v2603
          %v2928 = vpack.c.b16 %v2608, %v2604
          %v2929 = vpack.c.b16 %v2609, %v2605
          %v2930 = vpack.c.b16 %v2610, %v2606
          %v2931 = vpack.c.b16 %v2615, %v2611
          %v2932 = vpack.c.b16 %v2616, %v2612
          %v2933 = vpack.c.b16 %v2617, %v2613
          %v2934 = vpack.c.b16 %v2618, %v2614
          %v2935 = vpack.c.b16 %v2623, %v2619
          %v2936 = vpack.c.b16 %v2624, %v2620
          %v2937 = vpack.c.b16 %v2625, %v2621
          %v2938 = vpack.c.b16 %v2626, %v2622
          %v2939 = vpack.c.b16 %v2631, %v2627
          %v2940 = vpack.c.b16 %v2632, %v2628
          %v2941 = vpack.c.b16 %v2633, %v2629
          %v2942 = vpack.c.b16 %v2634, %v2630
          %v2943 = vpack.c.b16 %v2639, %v2635
          %v2944 = vpack.c.b16 %v2640, %v2636
          %v2945 = vpack.c.b16 %v2641, %v2637
          %v2946 = vpack.c.b16 %v2642, %v2638
          %v2947 = vpack.c.b16 %v2647, %v2643
          %v2948 = vpack.c.b16 %v2648, %v2644
          %v2949 = vpack.c.b16 %v2649, %v2645
          %v2950 = vpack.c.b16 %v2650, %v2646
          %v2951 = vpack.c.b16 %v2655, %v2651
          %v2952 = vpack.c.b16 %v2656, %v2652
          %v2953 = vpack.c.b16 %v2657, %v2653
          %v2954 = vpack.c.b16 %v2658, %v2654
          %v2955 = vpack.c.b16 %v2663, %v2659
          %v2956 = vpack.c.b16 %v2664, %v2660
          %v2957 = vpack.c.b16 %v2665, %v2661
          %v2958 = vpack.c.b16 %v2666, %v2662
          %v2959 = vpack.c.b16 %v2671, %v2667
          %v2960 = vpack.c.b16 %v2672, %v2668
          %v2961 = vpack.c.b16 %v2673, %v2669
          %v2962 = vpack.c.b16 %v2674, %v2670
          %v2963 = vpack.c.b16 %v2679, %v2675
          %v2964 = vpack.c.b16 %v2680, %v2676
          %v2965 = vpack.c.b16 %v2681, %v2677
          %v2966 = vpack.c.b16 %v2682, %v2678
          %v2967 = vpack.c.b16 %v2687, %v2683
          %v2968 = vpack.c.b16 %v2688, %v2684
          %v2969 = vpack.c.b16 %v2689, %v2685
          %v2970 = vpack.c.b16 %v2690, %v2686
          %v2971 = vpack.c.b16 %v2695, %v2691
          %v2972 = vpack.c.b16 %v2696, %v2692
          %v2973 = vpack.c.b16 %v2697, %v2693
          %v2974 = vpack.c.b16 %v2698, %v2694
          %v2975 = vpack.c.b16 %v2703, %v2699
          %v2976 = vpack.c.b16 %v2704, %v2700
          %v2977 = vpack.c.b16 %v2705, %v2701
          %v2978 = vpack.c.b16 %v2706, %v2702
          %v2979 = vpack.c.b16 %v2711, %v2707
          %v2980 = vpack.c.b16 %v2712, %v2708
          %v2981 = vpack.c.b16 %v2713, %v2709
          %v2982 = vpack.c.b16 %v2714, %v2710
          %v2983 = vpack.c.b16 %v2719, %v2715
          %v2984 = vpack.c.b16 %v2720, %v2716
          %v2985 = vpack.c.b16 %v2721, %v2717
          %v2986 = vpack.c.b16 %v2722, %v2718
          %v2987 = vpack.c.b16 %v2727, %v2723
          %v2988 = vpack.c.b16 %v2728, %v2724
          %v2989 = vpack.c.b16 %v2729, %v2725
          %v2990 = vpack.c.b16 %v2730, %v2726
          %v2991 = vpack.c.b16 %v2735, %v2731
          %v2992 = vpack.c.b16 %v2736, %v2732
          %v2993 = vpack.c.b16 %v2737, %v2733
          %v2994 = vpack.c.b16 %v2738, %v2734
          %3251 = vmatprep.subr.bf16.mxu0 %v2740
          %3252 = vmatpush1.bf16.msra.mxu0 %v2739
          %3253 = vmatprep.subr.bf16.mxu0 %v2744
          %3254 = vmatpush1.bf16.msra.mxu0 %v2743
          %3255 = vmatprep.subr.bf16.mxu0 %v2748
          %3256 = vmatpush1.bf16.msra.mxu0 %v2747
          %3257 = vmatprep.subr.bf16.mxu0 %v2752
          %3258 = vmatpush1.bf16.msra.mxu0 %v2751
          %3259 = vmatprep.subr.bf16.mxu0 %v2756
          %3260 = vmatpush1.bf16.msra.mxu0 %v2755
          %3261 = vmatprep.subr.bf16.mxu0 %v2760
          %3262 = vmatpush1.bf16.msra.mxu0 %v2759
          %3263 = vmatprep.subr.bf16.mxu0 %v2764
          %3264 = vmatpush1.bf16.msra.mxu0 %v2763
          %3265 = vmatprep.subr.bf16.mxu0 %v2768
          %3266 = vmatpush1.bf16.msra.mxu0 %v2767
          %3267 = vmatprep.subr.bf16.mxu0 %v2772
          %3268 = vmatpush1.bf16.msra.mxu0 %v2771
          %3269 = vmatprep.subr.bf16.mxu0 %v2776
          %3270 = vmatpush1.bf16.msra.mxu0 %v2775
          %3271 = vmatprep.subr.bf16.mxu0 %v2780
          %3272 = vmatpush1.bf16.msra.mxu0 %v2779
          %3273 = vmatprep.subr.bf16.mxu0 %v2784
          %3274 = vmatpush1.bf16.msra.mxu0 %v2783
          %3275 = vmatprep.subr.bf16.mxu0 %v2788
          %3276 = vmatpush1.bf16.msra.mxu0 %v2787
          %3277 = vmatprep.subr.bf16.mxu0 %v2792
          %3278 = vmatpush1.bf16.msra.mxu0 %v2791
          %3279 = vmatprep.subr.bf16.mxu0 %v2796
          %3280 = vmatpush1.bf16.msra.mxu0 %v2795
          %3281 = vmatprep.subr.bf16.mxu0 %v2800
          %3282 = vmatpush1.bf16.msra.mxu0 %v2799
          %3283 = vmatprep.mubr.bf16.mxu0 %v1686
          %3284 = vmatmul.mubr.bf16.gmra.mrb[0].mxu0 %v1685
          %v3285 = vpop.f32.mrb[0].mxu0
          %v3286 = vadd.f32 %v1954, %v3285
          %v3287 = vpop.f32.mrb[0].mxu0
          %v3288 = vadd.f32 %v1958, %v3287
          %v3289 = vpop.f32.mrb[0].mxu0
          %v3290 = vpop.f32.mrb[0].mxu0
          %3291 = vdwg.mxu0
          %3292 = vmatprep.subr.bf16.mxu0 %v2804
          %3293 = vmatpush1.bf16.msra.mxu0 %v2803
          %3294 = vmatprep.subr.bf16.mxu0 %v2808
          %3295 = vmatpush1.bf16.msra.mxu0 %v2807
          %3296 = vmatprep.subr.bf16.mxu0 %v2812
          %3297 = vmatpush1.bf16.msra.mxu0 %v2811
          %3298 = vmatprep.subr.bf16.mxu0 %v2816
          %3299 = vmatpush1.bf16.msra.mxu0 %v2815
          %3300 = vmatprep.subr.bf16.mxu0 %v2820
          %3301 = vmatpush1.bf16.msra.mxu0 %v2819
          %3302 = vmatprep.subr.bf16.mxu0 %v2824
          %3303 = vmatpush1.bf16.msra.mxu0 %v2823
          %3304 = vmatprep.subr.bf16.mxu0 %v2828
          %3305 = vmatpush1.bf16.msra.mxu0 %v2827
          %3306 = vmatprep.subr.bf16.mxu0 %v2832
          %3307 = vmatpush1.bf16.msra.mxu0 %v2831
          %3308 = vmatprep.subr.bf16.mxu0 %v2836
          %3309 = vmatpush1.bf16.msra.mxu0 %v2835
          %3310 = vmatprep.subr.bf16.mxu0 %v2840
          %3311 = vmatpush1.bf16.msra.mxu0 %v2839
          %3312 = vmatprep.subr.bf16.mxu0 %v2844
          %3313 = vmatpush1.bf16.msra.mxu0 %v2843
          %3314 = vmatprep.subr.bf16.mxu0 %v2848
          %3315 = vmatpush1.bf16.msra.mxu0 %v2847
          %3316 = vmatprep.subr.bf16.mxu0 %v2852
          %3317 = vmatpush1.bf16.msra.mxu0 %v2851
          %3318 = vmatprep.subr.bf16.mxu0 %v2856
          %3319 = vmatpush1.bf16.msra.mxu0 %v2855
          %3320 = vmatprep.subr.bf16.mxu0 %v2860
          %3321 = vmatpush1.bf16.msra.mxu0 %v2859
          %3322 = vmatprep.subr.bf16.mxu0 %v2864
          %3323 = vmatpush1.bf16.msra.mxu0 %v2863
          %3324 = vmatprep.mubr.bf16.mxu0 %v1688
          %3325 = vmatmul.mubr.bf16.gmra.mrb[0].mxu0 %v1687
          %v3326 = vpop.f32.mrb[0].mxu0
          %v3327 = vadd.f32 %v3286, %v3326
          %v3328 = vpop.f32.mrb[0].mxu0
          %v3329 = vadd.f32 %v3288, %v3328
          %v3330 = vpop.f32.mrb[0].mxu0
          %v3331 = vpop.f32.mrb[0].mxu0
          %3332 = vdwg.mxu0
          %3333 = vmatprep.subr.bf16.mxu0 %v2868
          %3334 = vmatpush1.bf16.msra.mxu0 %v2867
          %3335 = vmatprep.subr.bf16.mxu0 %v2872
          %3336 = vmatpush1.bf16.msra.mxu0 %v2871
          %3337 = vmatprep.subr.bf16.mxu0 %v2876
          %3338 = vmatpush1.bf16.msra.mxu0 %v2875
          %3339 = vmatprep.subr.bf16.mxu0 %v2880
          %3340 = vmatpush1.bf16.msra.mxu0 %v2879
          %3341 = vmatprep.subr.bf16.mxu0 %v2884
          %3342 = vmatpush1.bf16.msra.mxu0 %v2883
          %3343 = vmatprep.subr.bf16.mxu0 %v2888
          %3344 = vmatpush1.bf16.msra.mxu0 %v2887
          %3345 = vmatprep.subr.bf16.mxu0 %v2892
          %3346 = vmatpush1.bf16.msra.mxu0 %v2891
          %3347 = vmatprep.subr.bf16.mxu0 %v2896
          %3348 = vmatpush1.bf16.msra.mxu0 %v2895
          %3349 = vmatprep.subr.bf16.mxu0 %v2900
          %3350 = vmatpush1.bf16.msra.mxu0 %v2899
          %3351 = vmatprep.subr.bf16.mxu0 %v2904
          %3352 = vmatpush1.bf16.msra.mxu0 %v2903
          %3353 = vmatprep.subr.bf16.mxu0 %v2908
          %3354 = vmatpush1.bf16.msra.mxu0 %v2907
          %3355 = vmatprep.subr.bf16.mxu0 %v2912
          %3356 = vmatpush1.bf16.msra.mxu0 %v2911
          %3357 = vmatprep.subr.bf16.mxu0 %v2916
          %3358 = vmatpush1.bf16.msra.mxu0 %v2915
          %3359 = vmatprep.subr.bf16.mxu0 %v2920
          %3360 = vmatpush1.bf16.msra.mxu0 %v2919
          %3361 = vmatprep.subr.bf16.mxu0 %v2924
          %3362 = vmatpush1.bf16.msra.mxu0 %v2923
          %3363 = vmatprep.subr.bf16.mxu0 %v2928
          %3364 = vmatpush1.bf16.msra.mxu0 %v2927
          %3365 = vmatprep.mubr.bf16.mxu0 %v1690
          %3366 = vmatmul.mubr.bf16.gmra.mrb[0].mxu0 %v1689
          %v3367 = vpop.f32.mrb[0].mxu0
          %v3368 = vadd.f32 %v3327, %v3367
          %v3369 = vpop.f32.mrb[0].mxu0
          %v3370 = vadd.f32 %v3329, %v3369
          %v3371 = vpop.f32.mrb[0].mxu0
          %v3372 = vpop.f32.mrb[0].mxu0
          %3373 = vdwg.mxu0
          %3374 = vmatprep.subr.bf16.mxu0 %v2932
          %3375 = vmatpush1.bf16.msra.mxu0 %v2931
          %3376 = vmatprep.subr.bf16.mxu0 %v2936
          %3377 = vmatpush1.bf16.msra.mxu0 %v2935
          %3378 = vmatprep.subr.bf16.mxu0 %v2940
          %3379 = vmatpush1.bf16.msra.mxu0 %v2939
          %3380 = vmatprep.subr.bf16.mxu0 %v2944
          %3381 = vmatpush1.bf16.msra.mxu0 %v2943
          %3382 = vmatprep.subr.bf16.mxu0 %v2948
          %3383 = vmatpush1.bf16.msra.mxu0 %v2947
          %3384 = vmatprep.subr.bf16.mxu0 %v2952
          %3385 = vmatpush1.bf16.msra.mxu0 %v2951
          %3386 = vmatprep.subr.bf16.mxu0 %v2956
          %3387 = vmatpush1.bf16.msra.mxu0 %v2955
          %3388 = vmatprep.subr.bf16.mxu0 %v2960
          %3389 = vmatpush1.bf16.msra.mxu0 %v2959
          %3390 = vmatprep.subr.bf16.mxu0 %v2964
          %3391 = vmatpush1.bf16.msra.mxu0 %v2963
          %3392 = vmatprep.subr.bf16.mxu0 %v2968
          %3393 = vmatpush1.bf16.msra.mxu0 %v2967
          %3394 = vmatprep.subr.bf16.mxu0 %v2972
          %3395 = vmatpush1.bf16.msra.mxu0 %v2971
          %3396 = vmatprep.subr.bf16.mxu0 %v2976
          %3397 = vmatpush1.bf16.msra.mxu0 %v2975
          %3398 = vmatprep.subr.bf16.mxu0 %v2980
          %3399 = vmatpush1.bf16.msra.mxu0 %v2979
          %3400 = vmatprep.subr.bf16.mxu0 %v2984
          %3401 = vmatpush1.bf16.msra.mxu0 %v2983
          %3402 = vmatprep.subr.bf16.mxu0 %v2988
          %3403 = vmatpush1.bf16.msra.mxu0 %v2987
          %3404 = vmatprep.subr.bf16.mxu0 %v2992
          %3405 = vmatpush1.bf16.msra.mxu0 %v2991
          %3406 = vmatprep.mubr.bf16.mxu0 %v1692
          %3407 = vmatmul.mubr.bf16.gmra.mrb[0].mxu0 %v1691
          %v3408 = vpop.f32.mrb[0].mxu0
          %v3409 = vadd.f32 %v3368, %v3408
          %v3410 = vpop.f32.mrb[0].mxu0
          %v3411 = vadd.f32 %v3370, %v3410
          %v3412 = vpop.f32.mrb[0].mxu0
          %v3413 = vpop.f32.mrb[0].mxu0
          %3414 = vdwg.mxu0
          %3415 = vmatprep.subr.bf16.mxu0 %v2742
          %3416 = vmatpush1.bf16.msra.mxu0 %v2741
          %3417 = vmatprep.subr.bf16.mxu0 %v2746
          %3418 = vmatpush1.bf16.msra.mxu0 %v2745
          %3419 = vmatprep.subr.bf16.mxu0 %v2750
          %3420 = vmatpush1.bf16.msra.mxu0 %v2749
          %3421 = vmatprep.subr.bf16.mxu0 %v2754
          %3422 = vmatpush1.bf16.msra.mxu0 %v2753
          %3423 = vmatprep.subr.bf16.mxu0 %v2758
          %3424 = vmatpush1.bf16.msra.mxu0 %v2757
          %3425 = vmatprep.subr.bf16.mxu0 %v2762
          %3426 = vmatpush1.bf16.msra.mxu0 %v2761
          %3427 = vmatprep.subr.bf16.mxu0 %v2766
          %3428 = vmatpush1.bf16.msra.mxu0 %v2765
          %3429 = vmatprep.subr.bf16.mxu0 %v2770
          %3430 = vmatpush1.bf16.msra.mxu0 %v2769
          %3431 = vmatprep.subr.bf16.mxu0 %v2774
          %3432 = vmatpush1.bf16.msra.mxu0 %v2773
          %3433 = vmatprep.subr.bf16.mxu0 %v2778
          %3434 = vmatpush1.bf16.msra.mxu0 %v2777
          %3435 = vmatprep.subr.bf16.mxu0 %v2782
          %3436 = vmatpush1.bf16.msra.mxu0 %v2781
          %3437 = vmatprep.subr.bf16.mxu0 %v2786
          %3438 = vmatpush1.bf16.msra.mxu0 %v2785
          %3439 = vmatprep.subr.bf16.mxu0 %v2790
          %3440 = vmatpush1.bf16.msra.mxu0 %v2789
          %3441 = vmatprep.subr.bf16.mxu0 %v2794
          %3442 = vmatpush1.bf16.msra.mxu0 %v2793
          %3443 = vmatprep.subr.bf16.mxu0 %v2798
          %3444 = vmatpush1.bf16.msra.mxu0 %v2797
          %3445 = vmatprep.subr.bf16.mxu0 %v2802
          %3446 = vmatpush1.bf16.msra.mxu0 %v2801
          %3447 = vmatprep.mubr.bf16.mxu0 %v1686
          %3448 = vmatmul.mubr.bf16.gmra.mrb[0].mxu0 %v1685
          %v3449 = vpop.f32.mrb[0].mxu0
          %v3450 = vadd.f32 %v1962, %v3449
          %v3451 = vpop.f32.mrb[0].mxu0
          %v3452 = vadd.f32 %v1966, %v3451
          %v3453 = vpop.f32.mrb[0].mxu0
          %v3454 = vpop.f32.mrb[0].mxu0
          %3455 = vdwg.mxu0
          %3456 = vmatprep.subr.bf16.mxu0 %v2806
          %3457 = vmatpush1.bf16.msra.mxu0 %v2805
          %3458 = vmatprep.subr.bf16.mxu0 %v2810
          %3459 = vmatpush1.bf16.msra.mxu0 %v2809
          %3460 = vmatprep.subr.bf16.mxu0 %v2814
          %3461 = vmatpush1.bf16.msra.mxu0 %v2813
          %3462 = vmatprep.subr.bf16.mxu0 %v2818
          %3463 = vmatpush1.bf16.msra.mxu0 %v2817
          %3464 = vmatprep.subr.bf16.mxu0 %v2822
          %3465 = vmatpush1.bf16.msra.mxu0 %v2821
          %3466 = vmatprep.subr.bf16.mxu0 %v2826
          %3467 = vmatpush1.bf16.msra.mxu0 %v2825
          %3468 = vmatprep.subr.bf16.mxu0 %v2830
          %3469 = vmatpush1.bf16.msra.mxu0 %v2829
          %3470 = vmatprep.subr.bf16.mxu0 %v2834
          %3471 = vmatpush1.bf16.msra.mxu0 %v2833
          %3472 = vmatprep.subr.bf16.mxu0 %v2838
          %3473 = vmatpush1.bf16.msra.mxu0 %v2837
          %3474 = vmatprep.subr.bf16.mxu0 %v2842
          %3475 = vmatpush1.bf16.msra.mxu0 %v2841
          %3476 = vmatprep.subr.bf16.mxu0 %v2846
          %3477 = vmatpush1.bf16.msra.mxu0 %v2845
          %3478 = vmatprep.subr.bf16.mxu0 %v2850
          %3479 = vmatpush1.bf16.msra.mxu0 %v2849
          %3480 = vmatprep.subr.bf16.mxu0 %v2854
          %3481 = vmatpush1.bf16.msra.mxu0 %v2853
          %3482 = vmatprep.subr.bf16.mxu0 %v2858
          %3483 = vmatpush1.bf16.msra.mxu0 %v2857
          %3484 = vmatprep.subr.bf16.mxu0 %v2862
          %3485 = vmatpush1.bf16.msra.mxu0 %v2861
          %3486 = vmatprep.subr.bf16.mxu0 %v2866
          %3487 = vmatpush1.bf16.msra.mxu0 %v2865
          %3488 = vmatprep.mubr.bf16.mxu0 %v1688
          %3489 = vmatmul.mubr.bf16.gmra.mrb[0].mxu0 %v1687
          %v3490 = vpop.f32.mrb[0].mxu0
          %v3491 = vadd.f32 %v3450, %v3490
          %v3492 = vpop.f32.mrb[0].mxu0
          %v3493 = vadd.f32 %v3452, %v3492
          %v3494 = vpop.f32.mrb[0].mxu0
          %v3495 = vpop.f32.mrb[0].mxu0
          %3496 = vdwg.mxu0
          %3497 = vmatprep.subr.bf16.mxu0 %v2870
          %3498 = vmatpush1.bf16.msra.mxu0 %v2869
          %3499 = vmatprep.subr.bf16.mxu0 %v2874
          %3500 = vmatpush1.bf16.msra.mxu0 %v2873
          %3501 = vmatprep.subr.bf16.mxu0 %v2878
          %3502 = vmatpush1.bf16.msra.mxu0 %v2877
          %3503 = vmatprep.subr.bf16.mxu0 %v2882
          %3504 = vmatpush1.bf16.msra.mxu0 %v2881
          %3505 = vmatprep.subr.bf16.mxu0 %v2886
          %3506 = vmatpush1.bf16.msra.mxu0 %v2885
          %3507 = vmatprep.subr.bf16.mxu0 %v2890
          %3508 = vmatpush1.bf16.msra.mxu0 %v2889
          %3509 = vmatprep.subr.bf16.mxu0 %v2894
          %3510 = vmatpush1.bf16.msra.mxu0 %v2893
          %3511 = vmatprep.subr.bf16.mxu0 %v2898
          %3512 = vmatpush1.bf16.msra.mxu0 %v2897
          %3513 = vmatprep.subr.bf16.mxu0 %v2902
          %3514 = vmatpush1.bf16.msra.mxu0 %v2901
          %3515 = vmatprep.subr.bf16.mxu0 %v2906
          %3516 = vmatpush1.bf16.msra.mxu0 %v2905
          %3517 = vmatprep.subr.bf16.mxu0 %v2910
          %3518 = vmatpush1.bf16.msra.mxu0 %v2909
          %3519 = vmatprep.subr.bf16.mxu0 %v2914
          %3520 = vmatpush1.bf16.msra.mxu0 %v2913
          %3521 = vmatprep.subr.bf16.mxu0 %v2918
          %3522 = vmatpush1.bf16.msra.mxu0 %v2917
          %3523 = vmatprep.subr.bf16.mxu0 %v2922
          %3524 = vmatpush1.bf16.msra.mxu0 %v2921
          %3525 = vmatprep.subr.bf16.mxu0 %v2926
          %3526 = vmatpush1.bf16.msra.mxu0 %v2925
          %3527 = vmatprep.subr.bf16.mxu0 %v2930
          %3528 = vmatpush1.bf16.msra.mxu0 %v2929
          %3529 = vmatprep.mubr.bf16.mxu0 %v1690
          %3530 = vmatmul.mubr.bf16.gmra.mrb[0].mxu0 %v1689
          %v3531 = vpop.f32.mrb[0].mxu0
          %v3532 = vadd.f32 %v3491, %v3531
          %v3533 = vpop.f32.mrb[0].mxu0
          %v3534 = vadd.f32 %v3493, %v3533
          %v3535 = vpop.f32.mrb[0].mxu0
          %v3536 = vpop.f32.mrb[0].mxu0
          %3537 = vdwg.mxu0
          %3538 = vmatprep.subr.bf16.mxu0 %v2934
          %3539 = vmatpush1.bf16.msra.mxu0 %v2933
          %3540 = vmatprep.subr.bf16.mxu0 %v2938
          %3541 = vmatpush1.bf16.msra.mxu0 %v2937
          %3542 = vmatprep.subr.bf16.mxu0 %v2942
          %3543 = vmatpush1.bf16.msra.mxu0 %v2941
          %3544 = vmatprep.subr.bf16.mxu0 %v2946
          %3545 = vmatpush1.bf16.msra.mxu0 %v2945
          %3546 = vmatprep.subr.bf16.mxu0 %v2950
          %3547 = vmatpush1.bf16.msra.mxu0 %v2949
          %3548 = vmatprep.subr.bf16.mxu0 %v2954
          %3549 = vmatpush1.bf16.msra.mxu0 %v2953
          %3550 = vmatprep.subr.bf16.mxu0 %v2958
          %3551 = vmatpush1.bf16.msra.mxu0 %v2957
          %3552 = vmatprep.subr.bf16.mxu0 %v2962
          %3553 = vmatpush1.bf16.msra.mxu0 %v2961
          %3554 = vmatprep.subr.bf16.mxu0 %v2966
          %3555 = vmatpush1.bf16.msra.mxu0 %v2965
          %3556 = vmatprep.subr.bf16.mxu0 %v2970
          %3557 = vmatpush1.bf16.msra.mxu0 %v2969
          %3558 = vmatprep.subr.bf16.mxu0 %v2974
          %3559 = vmatpush1.bf16.msra.mxu0 %v2973
          %3560 = vmatprep.subr.bf16.mxu0 %v2978
          %3561 = vmatpush1.bf16.msra.mxu0 %v2977
          %3562 = vmatprep.subr.bf16.mxu0 %v2982
          %3563 = vmatpush1.bf16.msra.mxu0 %v2981
          %3564 = vmatprep.subr.bf16.mxu0 %v2986
          %3565 = vmatpush1.bf16.msra.mxu0 %v2985
          %3566 = vmatprep.subr.bf16.mxu0 %v2990
          %3567 = vmatpush1.bf16.msra.mxu0 %v2989
          %3568 = vmatprep.subr.bf16.mxu0 %v2994
          %3569 = vmatpush1.bf16.msra.mxu0 %v2993
          %3570 = vmatprep.mubr.bf16.mxu0 %v1692
          %3571 = vmatmul.mubr.bf16.gmra.mrb[0].mxu0 %v1691
          %v3572 = vpop.f32.mrb[0].mxu0
          %v3573 = vadd.f32 %v3532, %v3572
          %v3574 = vpop.f32.mrb[0].mxu0
          %v3575 = vadd.f32 %v3534, %v3574
          %v3576 = vpop.f32.mrb[0].mxu0
          %v3577 = vpop.f32.mrb[0].mxu0
          %3578 = vdwg.mxu0
          %v3579 = vmax.f32 %v3409, 0.0
          %v3580 = vmax.f32 %v3411, 0.0
          %v3581 = vmax.f32 %v3573, 0.0
          %v3582 = vmax.f32 %v3575, 0.0
          %v3583 = vpack.c.bf16 %v3579, %v3579
          %v3584 = vpack.c.bf16 %v3580, %v3580
          %v3585 = vpack.c.bf16 %v3581, %v3581
          %v3586 = vpack.c.bf16 %v3582, %v3582
          %v3587 = vld [vmem:[#allocation10] sm:$0xff]
          %v3588 = vld [vmem:[#allocation10 + $0x8] sm:$0xff]
          %v3589 = vld [vmem:[#allocation10 + $0x10] sm:$0xff]
          %v3590 = vld [vmem:[#allocation10 + $0x18] sm:$0xff]
          %v3591 = vld [vmem:[#allocation10 + $0x20] sm:$0xff]
          %v3592 = vld [vmem:[#allocation10 + $0x28] sm:$0xff]
          %v3593 = vld [vmem:[#allocation10 + $0x30] sm:$0xff]
          %v3594 = vld [vmem:[#allocation10 + $0x38] sm:$0xff]
          %v3595 = vld [vmem:[#allocation10 + $0x40] sm:$0xff]
          %v3596 = vld [vmem:[#allocation10 + $0x48] sm:$0xff]
          %v3597 = vld [vmem:[#allocation10 + $0x50] sm:$0xff]
          %v3598 = vld [vmem:[#allocation10 + $0x58] sm:$0xff]
          %v3599 = vld [vmem:[#allocation10 + $0x60] sm:$0xff]
          %v3600 = vld [vmem:[#allocation10 + $0x68] sm:$0xff]
          %v3601 = vld [vmem:[#allocation10 + $0x70] sm:$0xff]
          %v3602 = vld [vmem:[#allocation10 + $0x78] sm:$0xff]
          %v3603 = vld [vmem:[#allocation10 + $0x80] sm:$0xff]
          %v3604 = vld [vmem:[#allocation10 + $0x88] sm:$0xff]
          %v3605 = vld [vmem:[#allocation10 + $0x90] sm:$0xff]
          %v3606 = vld [vmem:[#allocation10 + $0x98] sm:$0xff]
          %v3607 = vld [vmem:[#allocation10 + $0xa0] sm:$0xff]
          %v3608 = vld [vmem:[#allocation10 + $0xa8] sm:$0xff]
          %v3609 = vld [vmem:[#allocation10 + $0xb0] sm:$0xff]
          %v3610 = vld [vmem:[#allocation10 + $0xb8] sm:$0xff]
          %v3611 = vld [vmem:[#allocation10 + $0xc0] sm:$0xff]
          %v3612 = vld [vmem:[#allocation10 + $0xc8] sm:$0xff]
          %v3613 = vld [vmem:[#allocation10 + $0xd0] sm:$0xff]
          %v3614 = vld [vmem:[#allocation10 + $0xd8] sm:$0xff]
          %v3615 = vld [vmem:[#allocation10 + $0xe0] sm:$0xff]
          %v3616 = vld [vmem:[#allocation10 + $0xe8] sm:$0xff]
          %v3617 = vld [vmem:[#allocation10 + $0xf0] sm:$0xff]
          %v3618 = vld [vmem:[#allocation10 + $0xf8] sm:$0xff]
          %v3619 = vld [vmem:[#allocation10 + $0x100] sm:$0xff]
          %v3620 = vld [vmem:[#allocation10 + $0x108] sm:$0xff]
          %v3621 = vld [vmem:[#allocation10 + $0x110] sm:$0xff]
          %v3622 = vld [vmem:[#allocation10 + $0x118] sm:$0xff]
          %v3623 = vld [vmem:[#allocation10 + $0x120] sm:$0xff]
          %v3624 = vld [vmem:[#allocation10 + $0x128] sm:$0xff]
          %v3625 = vld [vmem:[#allocation10 + $0x130] sm:$0xff]
          %v3626 = vld [vmem:[#allocation10 + $0x138] sm:$0xff]
          %v3627 = vld [vmem:[#allocation10 + $0x140] sm:$0xff]
          %v3628 = vld [vmem:[#allocation10 + $0x148] sm:$0xff]
          %v3629 = vld [vmem:[#allocation10 + $0x150] sm:$0xff]
          %v3630 = vld [vmem:[#allocation10 + $0x158] sm:$0xff]
          %v3631 = vld [vmem:[#allocation10 + $0x160] sm:$0xff]
          %v3632 = vld [vmem:[#allocation10 + $0x168] sm:$0xff]
          %v3633 = vld [vmem:[#allocation10 + $0x170] sm:$0xff]
          %v3634 = vld [vmem:[#allocation10 + $0x178] sm:$0xff]
          %v3635 = vld [vmem:[#allocation10 + $0x180] sm:$0xff]
          %v3636 = vld [vmem:[#allocation10 + $0x188] sm:$0xff]
          %v3637 = vld [vmem:[#allocation10 + $0x190] sm:$0xff]
          %v3638 = vld [vmem:[#allocation10 + $0x198] sm:$0xff]
          %v3639 = vld [vmem:[#allocation10 + $0x1a0] sm:$0xff]
          %v3640 = vld [vmem:[#allocation10 + $0x1a8] sm:$0xff]
          %v3641 = vld [vmem:[#allocation10 + $0x1b0] sm:$0xff]
          %v3642 = vld [vmem:[#allocation10 + $0x1b8] sm:$0xff]
          %v3643 = vld [vmem:[#allocation10 + $0x1c0] sm:$0xff]
          %v3644 = vld [vmem:[#allocation10 + $0x1c8] sm:$0xff]
          %v3645 = vld [vmem:[#allocation10 + $0x1d0] sm:$0xff]
          %v3646 = vld [vmem:[#allocation10 + $0x1d8] sm:$0xff]
          %v3647 = vld [vmem:[#allocation10 + $0x1e0] sm:$0xff]
          %v3648 = vld [vmem:[#allocation10 + $0x1e8] sm:$0xff]
          %v3649 = vld [vmem:[#allocation10 + $0x1f0] sm:$0xff]
          %v3650 = vld [vmem:[#allocation10 + $0x1f8] sm:$0xff]
          %v3651 = vld [vmem:[#allocation11] sm:$0x3]
          %v3653 = vlaneseq
          %v3654 = vshrl.u32 %v3653, 7
          %v3655 = vsub.s32 0, %v3654
          %v3656 = vrot.slane %v3651, %v3655
          %v3657 = vlaneseq
          %v3658 = vshrl.u32 %v3657, 7
          %v3659 = vsub.s32 1, %v3658
          %v3660 = vrot.slane %v3651, %v3659
          %v3727 = vunpack.c.l.b16 %v3587
          %v3728 = vunpack.c.h.b16 %v3587
          %v3729 = vunpack.c.l.b16 %v3588
          %v3730 = vunpack.c.h.b16 %v3588
          %v3731 = vunpack.c.l.b16 %v3589
          %v3732 = vunpack.c.h.b16 %v3589
          %v3733 = vunpack.c.l.b16 %v3590
          %v3734 = vunpack.c.h.b16 %v3590
          %v3735 = vunpack.c.l.b16 %v3591
          %v3736 = vunpack.c.h.b16 %v3591
          %v3737 = vunpack.c.l.b16 %v3592
          %v3738 = vunpack.c.h.b16 %v3592
          %v3739 = vunpack.c.l.b16 %v3593
          %v3740 = vunpack.c.h.b16 %v3593
          %v3741 = vunpack.c.l.b16 %v3594
          %v3742 = vunpack.c.h.b16 %v3594
          %v3743 = vunpack.c.l.b16 %v3595
          %v3744 = vunpack.c.h.b16 %v3595
          %v3745 = vunpack.c.l.b16 %v3596
          %v3746 = vunpack.c.h.b16 %v3596
          %v3747 = vunpack.c.l.b16 %v3597
          %v3748 = vunpack.c.h.b16 %v3597
          %v3749 = vunpack.c.l.b16 %v3598
          %v3750 = vunpack.c.h.b16 %v3598
          %v3751 = vunpack.c.l.b16 %v3599
          %v3752 = vunpack.c.h.b16 %v3599
          %v3753 = vunpack.c.l.b16 %v3600
          %v3754 = vunpack.c.h.b16 %v3600
          %v3755 = vunpack.c.l.b16 %v3601
          %v3756 = vunpack.c.h.b16 %v3601
          %v3757 = vunpack.c.l.b16 %v3602
          %v3758 = vunpack.c.h.b16 %v3602
          %v3759 = vunpack.c.l.b16 %v3603
          %v3760 = vunpack.c.h.b16 %v3603
          %v3761 = vunpack.c.l.b16 %v3604
          %v3762 = vunpack.c.h.b16 %v3604
          %v3763 = vunpack.c.l.b16 %v3605
          %v3764 = vunpack.c.h.b16 %v3605
          %v3765 = vunpack.c.l.b16 %v3606
          %v3766 = vunpack.c.h.b16 %v3606
          %v3767 = vunpack.c.l.b16 %v3607
          %v3768 = vunpack.c.h.b16 %v3607
          %v3769 = vunpack.c.l.b16 %v3608
          %v3770 = vunpack.c.h.b16 %v3608
          %v3771 = vunpack.c.l.b16 %v3609
          %v3772 = vunpack.c.h.b16 %v3609
          %v3773 = vunpack.c.l.b16 %v3610
          %v3774 = vunpack.c.h.b16 %v3610
          %v3775 = vunpack.c.l.b16 %v3611
          %v3776 = vunpack.c.h.b16 %v3611
          %v3777 = vunpack.c.l.b16 %v3612
          %v3778 = vunpack.c.h.b16 %v3612
          %v3779 = vunpack.c.l.b16 %v3613
          %v3780 = vunpack.c.h.b16 %v3613
          %v3781 = vunpack.c.l.b16 %v3614
          %v3782 = vunpack.c.h.b16 %v3614
          %v3783 = vunpack.c.l.b16 %v3615
          %v3784 = vunpack.c.h.b16 %v3615
          %v3785 = vunpack.c.l.b16 %v3616
          %v3786 = vunpack.c.h.b16 %v3616
          %v3787 = vunpack.c.l.b16 %v3617
          %v3788 = vunpack.c.h.b16 %v3617
          %v3789 = vunpack.c.l.b16 %v3618
          %v3790 = vunpack.c.h.b16 %v3618
          %v3791 = vunpack.c.l.b16 %v3619
          %v3792 = vunpack.c.h.b16 %v3619
          %v3793 = vunpack.c.l.b16 %v3620
          %v3794 = vunpack.c.h.b16 %v3620
          %v3795 = vunpack.c.l.b16 %v3621
          %v3796 = vunpack.c.h.b16 %v3621
          %v3797 = vunpack.c.l.b16 %v3622
          %v3798 = vunpack.c.h.b16 %v3622
          %v3799 = vunpack.c.l.b16 %v3623
          %v3800 = vunpack.c.h.b16 %v3623
          %v3801 = vunpack.c.l.b16 %v3624
          %v3802 = vunpack.c.h.b16 %v3624
          %v3803 = vunpack.c.l.b16 %v3625
          %v3804 = vunpack.c.h.b16 %v3625
          %v3805 = vunpack.c.l.b16 %v3626
          %v3806 = vunpack.c.h.b16 %v3626
          %v3807 = vunpack.c.l.b16 %v3627
          %v3808 = vunpack.c.h.b16 %v3627
          %v3809 = vunpack.c.l.b16 %v3628
          %v3810 = vunpack.c.h.b16 %v3628
          %v3811 = vunpack.c.l.b16 %v3629
          %v3812 = vunpack.c.h.b16 %v3629
          %v3813 = vunpack.c.l.b16 %v3630
          %v3814 = vunpack.c.h.b16 %v3630
          %v3815 = vunpack.c.l.b16 %v3631
          %v3816 = vunpack.c.h.b16 %v3631
          %v3817 = vunpack.c.l.b16 %v3632
          %v3818 = vunpack.c.h.b16 %v3632
          %v3819 = vunpack.c.l.b16 %v3633
          %v3820 = vunpack.c.h.b16 %v3633
          %v3821 = vunpack.c.l.b16 %v3634
          %v3822 = vunpack.c.h.b16 %v3634
          %v3823 = vunpack.c.l.b16 %v3635
          %v3824 = vunpack.c.h.b16 %v3635
          %v3825 = vunpack.c.l.b16 %v3636
          %v3826 = vunpack.c.h.b16 %v3636
          %v3827 = vunpack.c.l.b16 %v3637
          %v3828 = vunpack.c.h.b16 %v3637
          %v3829 = vunpack.c.l.b16 %v3638
          %v3830 = vunpack.c.h.b16 %v3638
          %v3831 = vunpack.c.l.b16 %v3639
          %v3832 = vunpack.c.h.b16 %v3639
          %v3833 = vunpack.c.l.b16 %v3640
          %v3834 = vunpack.c.h.b16 %v3640
          %v3835 = vunpack.c.l.b16 %v3641
          %v3836 = vunpack.c.h.b16 %v3641
          %v3837 = vunpack.c.l.b16 %v3642
          %v3838 = vunpack.c.h.b16 %v3642
          %v3839 = vunpack.c.l.b16 %v3643
          %v3840 = vunpack.c.h.b16 %v3643
          %v3841 = vunpack.c.l.b16 %v3644
          %v3842 = vunpack.c.h.b16 %v3644
          %v3843 = vunpack.c.l.b16 %v3645
          %v3844 = vunpack.c.h.b16 %v3645
          %v3845 = vunpack.c.l.b16 %v3646
          %v3846 = vunpack.c.h.b16 %v3646
          %v3847 = vunpack.c.l.b16 %v3647
          %v3848 = vunpack.c.h.b16 %v3647
          %v3849 = vunpack.c.l.b16 %v3648
          %v3850 = vunpack.c.h.b16 %v3648
          %v3851 = vunpack.c.l.b16 %v3649
          %v3852 = vunpack.c.h.b16 %v3649
          %v3853 = vunpack.c.l.b16 %v3650
          %v3854 = vunpack.c.h.b16 %v3650
          %v3855 = vpack.c.b16 %v3729, %v3727
          %v3856 = vpack.c.b16 %v3730, %v3728
          %v3857 = vpack.c.b16 %v3733, %v3731
          %v3858 = vpack.c.b16 %v3734, %v3732
          %v3859 = vpack.c.b16 %v3737, %v3735
          %v3860 = vpack.c.b16 %v3738, %v3736
          %v3861 = vpack.c.b16 %v3741, %v3739
          %v3862 = vpack.c.b16 %v3742, %v3740
          %v3863 = vpack.c.b16 %v3745, %v3743
          %v3864 = vpack.c.b16 %v3746, %v3744
          %v3865 = vpack.c.b16 %v3749, %v3747
          %v3866 = vpack.c.b16 %v3750, %v3748
          %v3867 = vpack.c.b16 %v3753, %v3751
          %v3868 = vpack.c.b16 %v3754, %v3752
          %v3869 = vpack.c.b16 %v3757, %v3755
          %v3870 = vpack.c.b16 %v3758, %v3756
          %v3871 = vpack.c.b16 %v3761, %v3759
          %v3872 = vpack.c.b16 %v3762, %v3760
          %v3873 = vpack.c.b16 %v3765, %v3763
          %v3874 = vpack.c.b16 %v3766, %v3764
          %v3875 = vpack.c.b16 %v3769, %v3767
          %v3876 = vpack.c.b16 %v3770, %v3768
          %v3877 = vpack.c.b16 %v3773, %v3771
          %v3878 = vpack.c.b16 %v3774, %v3772
          %v3879 = vpack.c.b16 %v3777, %v3775
          %v3880 = vpack.c.b16 %v3778, %v3776
          %v3881 = vpack.c.b16 %v3781, %v3779
          %v3882 = vpack.c.b16 %v3782, %v3780
          %v3883 = vpack.c.b16 %v3785, %v3783
          %v3884 = vpack.c.b16 %v3786, %v3784
          %v3885 = vpack.c.b16 %v3789, %v3787
          %v3886 = vpack.c.b16 %v3790, %v3788
          %v3887 = vpack.c.b16 %v3793, %v3791
          %v3888 = vpack.c.b16 %v3794, %v3792
          %v3889 = vpack.c.b16 %v3797, %v3795
          %v3890 = vpack.c.b16 %v3798, %v3796
          %v3891 = vpack.c.b16 %v3801, %v3799
          %v3892 = vpack.c.b16 %v3802, %v3800
          %v3893 = vpack.c.b16 %v3805, %v3803
          %v3894 = vpack.c.b16 %v3806, %v3804
          %v3895 = vpack.c.b16 %v3809, %v3807
          %v3896 = vpack.c.b16 %v3810, %v3808
          %v3897 = vpack.c.b16 %v3813, %v3811
          %v3898 = vpack.c.b16 %v3814, %v3812
          %v3899 = vpack.c.b16 %v3817, %v3815
          %v3900 = vpack.c.b16 %v3818, %v3816
          %v3901 = vpack.c.b16 %v3821, %v3819
          %v3902 = vpack.c.b16 %v3822, %v3820
          %v3903 = vpack.c.b16 %v3825, %v3823
          %v3904 = vpack.c.b16 %v3826, %v3824
          %v3905 = vpack.c.b16 %v3829, %v3827
          %v3906 = vpack.c.b16 %v3830, %v3828
          %v3907 = vpack.c.b16 %v3833, %v3831
          %v3908 = vpack.c.b16 %v3834, %v3832
          %v3909 = vpack.c.b16 %v3837, %v3835
          %v3910 = vpack.c.b16 %v3838, %v3836
          %v3911 = vpack.c.b16 %v3841, %v3839
          %v3912 = vpack.c.b16 %v3842, %v3840
          %v3913 = vpack.c.b16 %v3845, %v3843
          %v3914 = vpack.c.b16 %v3846, %v3844
          %v3915 = vpack.c.b16 %v3849, %v3847
          %v3916 = vpack.c.b16 %v3850, %v3848
          %v3917 = vpack.c.b16 %v3853, %v3851
          %v3918 = vpack.c.b16 %v3854, %v3852
          %3983 = vmatprep.subr.bf16.mxu0 %v3856
          %3984 = vmatpush1.bf16.msra.mxu0 %v3855
          %3985 = vmatprep.subr.bf16.mxu0 %v3858
          %3986 = vmatpush1.bf16.msra.mxu0 %v3857
          %3987 = vmatprep.subr.bf16.mxu0 %v3860
          %3988 = vmatpush1.bf16.msra.mxu0 %v3859
          %3989 = vmatprep.subr.bf16.mxu0 %v3862
          %3990 = vmatpush1.bf16.msra.mxu0 %v3861
          %3991 = vmatprep.subr.bf16.mxu0 %v3864
          %3992 = vmatpush1.bf16.msra.mxu0 %v3863
          %3993 = vmatprep.subr.bf16.mxu0 %v3866
          %3994 = vmatpush1.bf16.msra.mxu0 %v3865
          %3995 = vmatprep.subr.bf16.mxu0 %v3868
          %3996 = vmatpush1.bf16.msra.mxu0 %v3867
          %3997 = vmatprep.subr.bf16.mxu0 %v3870
          %3998 = vmatpush1.bf16.msra.mxu0 %v3869
          %3999 = vmatprep.subr.bf16.mxu0 %v3872
          %4000 = vmatpush1.bf16.msra.mxu0 %v3871
          %4001 = vmatprep.subr.bf16.mxu0 %v3874
          %4002 = vmatpush1.bf16.msra.mxu0 %v3873
          %4003 = vmatprep.subr.bf16.mxu0 %v3876
          %4004 = vmatpush1.bf16.msra.mxu0 %v3875
          %4005 = vmatprep.subr.bf16.mxu0 %v3878
          %4006 = vmatpush1.bf16.msra.mxu0 %v3877
          %4007 = vmatprep.subr.bf16.mxu0 %v3880
          %4008 = vmatpush1.bf16.msra.mxu0 %v3879
          %4009 = vmatprep.subr.bf16.mxu0 %v3882
          %4010 = vmatpush1.bf16.msra.mxu0 %v3881
          %4011 = vmatprep.subr.bf16.mxu0 %v3884
          %4012 = vmatpush1.bf16.msra.mxu0 %v3883
          %4013 = vmatprep.subr.bf16.mxu0 %v3886
          %4014 = vmatpush1.bf16.msra.mxu0 %v3885
          %4015 = vmatprep.mubr.bf16.mxu0 %v3584
          %4016 = vmatmul.mubr.bf16.gmra.mrb[0].mxu0 %v3583
          %v4017 = vpop.f32.mrb[0].mxu0
          %v4018 = vadd.f32 %v3656, %v4017
          %v4019 = vpop.f32.mrb[0].mxu0
          %v4020 = vadd.f32 %v3660, %v4019
          %v4021 = vpop.f32.mrb[0].mxu0
          %v4022 = vpop.f32.mrb[0].mxu0
          %4023 = vdwg.mxu0
          %4024 = vmatprep.subr.bf16.mxu0 %v3888
          %4025 = vmatpush1.bf16.msra.mxu0 %v3887
          %4026 = vmatprep.subr.bf16.mxu0 %v3890
          %4027 = vmatpush1.bf16.msra.mxu0 %v3889
          %4028 = vmatprep.subr.bf16.mxu0 %v3892
          %4029 = vmatpush1.bf16.msra.mxu0 %v3891
          %4030 = vmatprep.subr.bf16.mxu0 %v3894
          %4031 = vmatpush1.bf16.msra.mxu0 %v3893
          %4032 = vmatprep.subr.bf16.mxu0 %v3896
          %4033 = vmatpush1.bf16.msra.mxu0 %v3895
          %4034 = vmatprep.subr.bf16.mxu0 %v3898
          %4035 = vmatpush1.bf16.msra.mxu0 %v3897
          %4036 = vmatprep.subr.bf16.mxu0 %v3900
          %4037 = vmatpush1.bf16.msra.mxu0 %v3899
          %4038 = vmatprep.subr.bf16.mxu0 %v3902
          %4039 = vmatpush1.bf16.msra.mxu0 %v3901
          %4040 = vmatprep.subr.bf16.mxu0 %v3904
          %4041 = vmatpush1.bf16.msra.mxu0 %v3903
          %4042 = vmatprep.subr.bf16.mxu0 %v3906
          %4043 = vmatpush1.bf16.msra.mxu0 %v3905
          %4044 = vmatprep.subr.bf16.mxu0 %v3908
          %4045 = vmatpush1.bf16.msra.mxu0 %v3907
          %4046 = vmatprep.subr.bf16.mxu0 %v3910
          %4047 = vmatpush1.bf16.msra.mxu0 %v3909
          %4048 = vmatprep.subr.bf16.mxu0 %v3912
          %4049 = vmatpush1.bf16.msra.mxu0 %v3911
          %4050 = vmatprep.subr.bf16.mxu0 %v3914
          %4051 = vmatpush1.bf16.msra.mxu0 %v3913
          %4052 = vmatprep.subr.bf16.mxu0 %v3916
          %4053 = vmatpush1.bf16.msra.mxu0 %v3915
          %4054 = vmatprep.subr.bf16.mxu0 %v3918
          %4055 = vmatpush1.bf16.msra.mxu0 %v3917
          %4056 = vmatprep.mubr.bf16.mxu0 %v3586
          %4057 = vmatmul.mubr.bf16.gmra.mrb[0].mxu0 %v3585
          %v4058 = vpop.f32.mrb[0].mxu0
          %v4059 = vadd.f32 %v4018, %v4058
          %v4060 = vpop.f32.mrb[0].mxu0
          %v4061 = vadd.f32 %v4020, %v4060
          %v4062 = vpop.f32.mrb[0].mxu0
          %v4063 = vpop.f32.mrb[0].mxu0
          %4064 = vdwg.mxu0
          %v4065 = vmax.f32 %v4059, 0.0
          %v4066 = vmax.f32 %v4061, 0.0
          %v4067 = vpack.c.bf16 %v4065, %v4065
          %v4068 = vpack.c.bf16 %v4066, %v4066
          %v4069 = vld [vmem:[#allocation13] sm:$0xf]
          %v4070 = vld [vmem:[#allocation13 + $0x4] sm:$0xf]
          %v4071 = vld [vmem:[#allocation13 + $0x8] sm:$0xf]
          %v4072 = vld [vmem:[#allocation13 + $0xc] sm:$0xf]
          %v4073 = vld [vmem:[#allocation13 + $0x10] sm:$0xf]
          %v4074 = vld [vmem:[#allocation13 + $0x14] sm:$0xf]
          %v4075 = vld [vmem:[#allocation13 + $0x18] sm:$0xf]
          %v4076 = vld [vmem:[#allocation13 + $0x1c] sm:$0xf]
          %v4077 = vld [vmem:[#allocation13 + $0x20] sm:$0xf]
          %v4078 = vld [vmem:[#allocation13 + $0x24] sm:$0xf]
          %v4079 = vld [vmem:[#allocation13 + $0x28] sm:$0xf]
          %v4080 = vld [vmem:[#allocation13 + $0x2c] sm:$0xf]
          %v4081 = vld [vmem:[#allocation13 + $0x30] sm:$0xf]
          %v4082 = vld [vmem:[#allocation13 + $0x34] sm:$0xf]
          %v4083 = vld [vmem:[#allocation13 + $0x38] sm:$0xf]
          %v4084 = vld [vmem:[#allocation13 + $0x3c] sm:$0xf]
          %v4085 = vld [vmem:[#allocation13 + $0x40] sm:$0xf]
          %v4086 = vld [vmem:[#allocation13 + $0x44] sm:$0xf]
          %v4087 = vld [vmem:[#allocation13 + $0x48] sm:$0xf]
          %v4088 = vld [vmem:[#allocation13 + $0x4c] sm:$0xf]
          %v4089 = vld [vmem:[#allocation13 + $0x50] sm:$0xf]
          %v4090 = vld [vmem:[#allocation13 + $0x54] sm:$0xf]
          %v4091 = vld [vmem:[#allocation13 + $0x58] sm:$0xf]
          %v4092 = vld [vmem:[#allocation13 + $0x5c] sm:$0xf]
          %v4093 = vld [vmem:[#allocation13 + $0x60] sm:$0xf]
          %v4094 = vld [vmem:[#allocation13 + $0x64] sm:$0xf]
          %v4095 = vld [vmem:[#allocation13 + $0x68] sm:$0xf]
          %v4096 = vld [vmem:[#allocation13 + $0x6c] sm:$0xf]
          %v4097 = vld [vmem:[#allocation13 + $0x70] sm:$0xf]
          %v4098 = vld [vmem:[#allocation13 + $0x74] sm:$0xf]
          %v4099 = vld [vmem:[#allocation13 + $0x78] sm:$0xf]
          %v4100 = vld [vmem:[#allocation13 + $0x7c] sm:$0xf]
          %v4101 = vld [vmem:[#allocation14] sm:$0x1]
          %v4103 = vlaneseq
          %v4104 = vshrl.u32 %v4103, 7
          %v4105 = vsub.s32 0, %v4104
          %v4106 = vrot.slane %v4101, %v4105
          %v4140 = vunpack.c.l.b16 %v4069
          %v4141 = vunpack.c.l.b16 %v4070
          %v4142 = vunpack.c.l.b16 %v4071
          %v4143 = vunpack.c.l.b16 %v4072
          %v4144 = vunpack.c.l.b16 %v4073
          %v4145 = vunpack.c.l.b16 %v4074
          %v4146 = vunpack.c.l.b16 %v4075
          %v4147 = vunpack.c.l.b16 %v4076
          %v4148 = vunpack.c.l.b16 %v4077
          %v4149 = vunpack.c.l.b16 %v4078
          %v4150 = vunpack.c.l.b16 %v4079
          %v4151 = vunpack.c.l.b16 %v4080
          %v4152 = vunpack.c.l.b16 %v4081
          %v4153 = vunpack.c.l.b16 %v4082
          %v4154 = vunpack.c.l.b16 %v4083
          %v4155 = vunpack.c.l.b16 %v4084
          %v4156 = vunpack.c.l.b16 %v4085
          %v4157 = vunpack.c.l.b16 %v4086
          %v4158 = vunpack.c.l.b16 %v4087
          %v4159 = vunpack.c.l.b16 %v4088
          %v4160 = vunpack.c.l.b16 %v4089
          %v4161 = vunpack.c.l.b16 %v4090
          %v4162 = vunpack.c.l.b16 %v4091
          %v4163 = vunpack.c.l.b16 %v4092
          %v4164 = vunpack.c.l.b16 %v4093
          %v4165 = vunpack.c.l.b16 %v4094
          %v4166 = vunpack.c.l.b16 %v4095
          %v4167 = vunpack.c.l.b16 %v4096
          %v4168 = vunpack.c.l.b16 %v4097
          %v4169 = vunpack.c.l.b16 %v4098
          %v4170 = vunpack.c.l.b16 %v4099
          %v4171 = vunpack.c.l.b16 %v4100
          %v4172 = vpack.c.b16 %v4141, %v4140
          %v4173 = vpack.c.b16 %v4143, %v4142
          %v4174 = vpack.c.b16 %v4145, %v4144
          %v4175 = vpack.c.b16 %v4147, %v4146
          %v4176 = vpack.c.b16 %v4149, %v4148
          %v4177 = vpack.c.b16 %v4151, %v4150
          %v4178 = vpack.c.b16 %v4153, %v4152
          %v4179 = vpack.c.b16 %v4155, %v4154
          %v4180 = vpack.c.b16 %v4157, %v4156
          %v4181 = vpack.c.b16 %v4159, %v4158
          %v4182 = vpack.c.b16 %v4161, %v4160
          %v4183 = vpack.c.b16 %v4163, %v4162
          %v4184 = vpack.c.b16 %v4165, %v4164
          %v4185 = vpack.c.b16 %v4167, %v4166
          %v4186 = vpack.c.b16 %v4169, %v4168
          %v4187 = vpack.c.b16 %v4171, %v4170
          %4204 = vmatprep.subr.bf16.mxu0 0
          %4205 = vmatpush1.bf16.msra.mxu0 %v4172
          %4206 = vmatprep.subr.bf16.mxu0 0
          %4207 = vmatpush1.bf16.msra.mxu0 %v4173
          %4208 = vmatprep.subr.bf16.mxu0 0
          %4209 = vmatpush1.bf16.msra.mxu0 %v4174
          %4210 = vmatprep.subr.bf16.mxu0 0
          %4211 = vmatpush1.bf16.msra.mxu0 %v4175
          %4212 = vmatprep.subr.bf16.mxu0 0
          %4213 = vmatpush1.bf16.msra.mxu0 %v4176
          %4214 = vmatprep.subr.bf16.mxu0 0
          %4215 = vmatpush1.bf16.msra.mxu0 %v4177
          %4216 = vmatprep.subr.bf16.mxu0 0
          %4217 = vmatpush1.bf16.msra.mxu0 %v4178
          %4218 = vmatprep.subr.bf16.mxu0 0
          %4219 = vmatpush1.bf16.msra.mxu0 %v4179
          %4220 = vmatprep.subr.bf16.mxu0 0
          %4221 = vmatpush1.bf16.msra.mxu0 %v4180
          %4222 = vmatprep.subr.bf16.mxu0 0
          %4223 = vmatpush1.bf16.msra.mxu0 %v4181
          %4224 = vmatprep.subr.bf16.mxu0 0
          %4225 = vmatpush1.bf16.msra.mxu0 %v4182
          %4226 = vmatprep.subr.bf16.mxu0 0
          %4227 = vmatpush1.bf16.msra.mxu0 %v4183
          %4228 = vmatprep.subr.bf16.mxu0 0
          %4229 = vmatpush1.bf16.msra.mxu0 %v4184
          %4230 = vmatprep.subr.bf16.mxu0 0
          %4231 = vmatpush1.bf16.msra.mxu0 %v4185
          %4232 = vmatprep.subr.bf16.mxu0 0
          %4233 = vmatpush1.bf16.msra.mxu0 %v4186
          %4234 = vmatprep.subr.bf16.mxu0 0
          %4235 = vmatpush1.bf16.msra.mxu0 %v4187
          %4236 = vmatprep.mubr.bf16.mxu0 %v4068
          %4237 = vmatmul.mubr.bf16.gmra.mrb[0].mxu0 %v4067
          %v4238 = vpop.f32.mrb[0].mxu0
          %v4239 = vadd.f32 %v4106, %v4238
          %v4240 = vpop.f32.mrb[0].mxu0
          %v4241 = vpop.f32.mrb[0].mxu0
          %v4242 = vpop.f32.mrb[0].mxu0
          %4243 = vdwg.mxu0
          %v4244 = vmax.f32 %v4239, 0.0
          %v4245 = vpack.c.bf16 %v4244, %v4244
          %v4246 = vld [vmem:[%s9] sm:$0xf]
          %v4247 = vld [vmem:[%s9 + $0x4] sm:$0xf]
          %v4248 = vld [vmem:[%s9 + $0x8] sm:$0xf]
          %v4249 = vld [vmem:[%s9 + $0xc] sm:$0xf]
          %v4250 = vld [vmem:[%s9 + $0x10] sm:$0xf]
          %v4251 = vld [vmem:[%s9 + $0x14] sm:$0xf]
          %v4252 = vld [vmem:[%s9 + $0x18] sm:$0xf]
          %v4253 = vld [vmem:[%s9 + $0x1c] sm:$0xf]
          %v4254 = vld [vmem:[%s9 + $0x20] sm:$0xf]
          %v4255 = vld [vmem:[%s9 + $0x24] sm:$0xf]
          %v4256 = vld [vmem:[%s9 + $0x28] sm:$0xf]
          %v4257 = vld [vmem:[%s9 + $0x2c] sm:$0xf]
          %v4258 = vld [vmem:[%s9 + $0x30] sm:$0xf]
          %v4259 = vld [vmem:[%s9 + $0x34] sm:$0xf]
          %v4260 = vld [vmem:[%s9 + $0x38] sm:$0xf]
          %v4261 = vld [vmem:[%s9 + $0x3c] sm:$0xf]
          %v4262 = vld [vmem:[#allocation16] sm:$0x1]
          %v4264 = vlaneseq
          %v4265 = vshrl.u32 %v4264, 7
          %v4266 = vsub.s32 0, %v4265
          %v4267 = vrot.slane %v4262, %v4266
          %v4285 = vunpack.c.l.b16 %v4246
          %v4286 = vunpack.c.l.b16 %v4247
          %v4287 = vunpack.c.l.b16 %v4248
          %v4288 = vunpack.c.l.b16 %v4249
          %v4289 = vunpack.c.l.b16 %v4250
          %v4290 = vunpack.c.l.b16 %v4251
          %v4291 = vunpack.c.l.b16 %v4252
          %v4292 = vunpack.c.l.b16 %v4253
          %v4293 = vunpack.c.l.b16 %v4254
          %v4294 = vunpack.c.l.b16 %v4255
          %v4295 = vunpack.c.l.b16 %v4256
          %v4296 = vunpack.c.l.b16 %v4257
          %v4297 = vunpack.c.l.b16 %v4258
          %v4298 = vunpack.c.l.b16 %v4259
          %v4299 = vunpack.c.l.b16 %v4260
          %v4300 = vunpack.c.l.b16 %v4261
          %v4301 = vpack.c.b16 %v4286, %v4285
          %v4302 = vpack.c.b16 %v4288, %v4287
          %v4303 = vpack.c.b16 %v4290, %v4289
          %v4304 = vpack.c.b16 %v4292, %v4291
          %v4305 = vpack.c.b16 %v4294, %v4293
          %v4306 = vpack.c.b16 %v4296, %v4295
          %v4307 = vpack.c.b16 %v4298, %v4297
          %v4308 = vpack.c.b16 %v4300, %v4299
          %4317 = vmatprep.subr.bf16.mxu0 0
          %4318 = vmatpush1.bf16.msra.mxu0 %v4301
          %4319 = vmatprep.subr.bf16.mxu0 0
          %4320 = vmatpush1.bf16.msra.mxu0 %v4302
          %4321 = vmatprep.subr.bf16.mxu0 0
          %4322 = vmatpush1.bf16.msra.mxu0 %v4303
          %4323 = vmatprep.subr.bf16.mxu0 0
          %4324 = vmatpush1.bf16.msra.mxu0 %v4304
          %4325 = vmatprep.subr.bf16.mxu0 0
          %4326 = vmatpush1.bf16.msra.mxu0 %v4305
          %4327 = vmatprep.subr.bf16.mxu0 0
          %4328 = vmatpush1.bf16.msra.mxu0 %v4306
          %4329 = vmatprep.subr.bf16.mxu0 0
          %4330 = vmatpush1.bf16.msra.mxu0 %v4307
          %4331 = vmatprep.subr.bf16.mxu0 0
          %4332 = vmatpush1.bf16.msra.mxu0 %v4308
          %4333 = vmatprep.subr.bf16.mxu0 0
          %4334 = vmatpush1.bf16.msra.mxu0 0
          %4335 = vmatprep.subr.bf16.mxu0 0
          %4336 = vmatpush1.bf16.msra.mxu0 0
          %4337 = vmatprep.subr.bf16.mxu0 0
          %4338 = vmatpush1.bf16.msra.mxu0 0
          %4339 = vmatprep.subr.bf16.mxu0 0
          %4340 = vmatpush1.bf16.msra.mxu0 0
          %4341 = vmatprep.subr.bf16.mxu0 0
          %4342 = vmatpush1.bf16.msra.mxu0 0
          %4343 = vmatprep.subr.bf16.mxu0 0
          %4344 = vmatpush1.bf16.msra.mxu0 0
          %4345 = vmatprep.subr.bf16.mxu0 0
          %4346 = vmatpush1.bf16.msra.mxu0 0
          %4347 = vmatprep.subr.bf16.mxu0 0
          %4348 = vmatpush1.bf16.msra.mxu0 0
          %4349 = vmatprep.mubr.bf16.mxu0 0
          %4350 = vmatmul.mubr.bf16.gmra.mrb[0].mxu0 %v4245
          %v4351 = vpop.f32.mrb[0].mxu0
          %v4352 = vadd.f32 %v4267, %v4351
          %v4353 = vpop.f32.mrb[0].mxu0
          %v4354 = vpop.f32.mrb[0].mxu0
          %v4355 = vpop.f32.mrb[0].mxu0
          %4356 = vdwg.mxu0
          %v4357 = vmax.f32 %v4352, 0.0
          %v4358 = vpack.c.bf16 %v4357, %v4357
          %v4359 = vld [vmem:[#allocation17] sm:$0xf]
          %v4360 = vld [vmem:[#allocation17 + $0x4] sm:$0xf]
          %v4361 = vld [vmem:[#allocation17 + $0x8] sm:$0xf]
          %v4362 = vld [vmem:[#allocation17 + $0xc] sm:$0xf]
          %v4363 = vld [vmem:[#allocation17 + $0x10] sm:$0xf]
          %v4364 = vld [vmem:[#allocation17 + $0x14] sm:$0xf]
          %v4365 = vld [vmem:[#allocation17 + $0x18] sm:$0xf]
          %v4366 = vld [vmem:[#allocation17 + $0x1c] sm:$0xf]
          %v4367 = vld [vmem:[#allocation19] sm:$0x1]
          %v4369 = vlaneseq
          %v4370 = vshrl.u32 %v4369, 7
          %v4371 = vsub.s32 0, %v4370
          %v4372 = vrot.slane %v4367, %v4371
          %v4382 = vunpack.c.l.b16 %v4359
          %v4383 = vunpack.c.l.b16 %v4360
          %v4384 = vunpack.c.l.b16 %v4361
          %v4385 = vunpack.c.l.b16 %v4362
          %v4386 = vunpack.c.l.b16 %v4363
          %v4387 = vunpack.c.l.b16 %v4364
          %v4388 = vunpack.c.l.b16 %v4365
          %v4389 = vunpack.c.l.b16 %v4366
          %v4390 = vpack.c.b16 %v4383, %v4382
          %v4391 = vpack.c.b16 %v4385, %v4384
          %v4392 = vpack.c.b16 %v4387, %v4386
          %v4393 = vpack.c.b16 %v4389, %v4388
          %vm4398 = vcmask 523264
          %v4400 = vsel %vm4398, %v4358, 0
          %4402 = vmatprep.subr.bf16.mxu0 0
          %4403 = vmatpush1.bf16.msra.mxu0 %v4390
          %4404 = vmatprep.subr.bf16.mxu0 0
          %4405 = vmatpush1.bf16.msra.mxu0 %v4391
          %4406 = vmatprep.subr.bf16.mxu0 0
          %4407 = vmatpush1.bf16.msra.mxu0 %v4392
          %4408 = vmatprep.subr.bf16.mxu0 0
          %4409 = vmatpush1.bf16.msra.mxu0 %v4393
          %4410 = vmatprep.subr.bf16.mxu0 0
          %4411 = vmatpush1.bf16.msra.mxu0 0
          %4412 = vmatprep.subr.bf16.mxu0 0
          %4413 = vmatpush1.bf16.msra.mxu0 0
          %4414 = vmatprep.subr.bf16.mxu0 0
          %4415 = vmatpush1.bf16.msra.mxu0 0
          %4416 = vmatprep.subr.bf16.mxu0 0
          %4417 = vmatpush1.bf16.msra.mxu0 0
          %4418 = vmatprep.subr.bf16.mxu0 0
          %4419 = vmatpush1.bf16.msra.mxu0 0
          %4420 = vmatprep.subr.bf16.mxu0 0
          %4421 = vmatpush1.bf16.msra.mxu0 0
          %4422 = vmatprep.subr.bf16.mxu0 0
          %4423 = vmatpush1.bf16.msra.mxu0 0
          %4424 = vmatprep.subr.bf16.mxu0 0
          %4425 = vmatpush1.bf16.msra.mxu0 0
          %4426 = vmatprep.subr.bf16.mxu0 0
          %4427 = vmatpush1.bf16.msra.mxu0 0
          %4428 = vmatprep.subr.bf16.mxu0 0
          %4429 = vmatpush1.bf16.msra.mxu0 0
          %4430 = vmatprep.subr.bf16.mxu0 0
          %4431 = vmatpush1.bf16.msra.mxu0 0
          %4432 = vmatprep.subr.bf16.mxu0 0
          %4433 = vmatpush1.bf16.msra.mxu0 0
          %4434 = vmatprep.mubr.bf16.mxu0 0
          %4435 = vmatmul.mubr.bf16.gmra.mrb[0].mxu0 %v4400
          %v4436 = vpop.f32.mrb[0].mxu0
          %v4437 = vadd.f32 %v4372, %v4436
          %v4438 = vpop.f32.mrb[0].mxu0
          %v4439 = vpop.f32.mrb[0].mxu0
          %v4440 = vpop.f32.mrb[0].mxu0
          %4441 = vdwg.mxu0
          %4442 = vst [vmem:[%s641] sm:$0xff] %v4437
        $region124: #{simple_nn_forward.1} parent=71 // pred_fallthru
          _
        %p4443 = scmp.lt.s32.totalorder %s36, 0
        %s4444 = scalar_select %p4443, %s36, 0
        %s4445 = smul.addr %s4444, 8
        %s4446 = scalar_lea.vmem %s13, %s4445
        // Predicated region
        $region125: #{simple_nn_forward.1} parent=71 // pred_check
          %p4447 = pneg %p347
        $region126: #{simple_nn_forward.1} parent=71 // pred_check_branch
          %4449 = sbr.rel (%p4447) target = $region128
        $region127: #{simple_nn_forward.1} parent=71 // pred_region
          _
        $region128: #{simple_nn_forward.1} parent=71 // pred_fallthru
          _
        // Predicated region
        $region129: #{simple_nn_forward.1} parent=71 // pred_check
          %p4450 = pneg %p347
        $region130: #{simple_nn_forward.1} parent=71 // pred_check_branch
          %4452 = sbr.rel (%p4450) target = $region132
        $region131: #{simple_nn_forward.1} parent=71 // pred_region
          %p4453 = scmp.lt.s32.totalorder %s36, 0
          %s4454 = scalar_select %p4453, %s36, 0
          %s4455 = smul.addr %s4454, 8
          %s4456 = scalar_lea.vmem %s13, %s4455
        $region132: #{simple_nn_forward.1} parent=71 // pred_fallthru
          _
      $region72: #{simple_nn_forward.1} parent=5 // pred_fallthru
        _
      %p4457 = scmp.le.s32.totalorder 2, %s27
      // Predicated region
      $region133: #{simple_nn_forward.1} parent=5 // pred_check
        %p4458 = pneg %p4457
      $region134: #{simple_nn_forward.1} parent=5 // pred_check_branch
        %4460 = sbr.rel (%p4458) target = $region136
      $region135: #{simple_nn_forward.1} parent=5 // pred_region
        %s4461 = ssub.s32 %s27, 2
      $region136: #{simple_nn_forward.1} parent=5 // pred_fallthru
        _
    $region6: #{simple_nn_forward.1} parent=1 // loop_footer
      %s31 = sadd.s32 1, %s27
    $region7: #{simple_nn_forward.1} parent=1 // loop_footer_branch
      %26 = sbr.rel target = $region3
    $region8: #{simple_nn_forward.1} parent=1 // loop_exit
      _
    %4462 = vsyncpa [#allocation4], 1
    %s4463 = scalar_lea.sflag [#allocation4], 1
    %4464 = vsyncpa %s4463, 1
    %4465 = vsyncpa [#allocation6], 1
    %4466 = vsyncpa [#allocation9], 1
    %4467 = vsyncpa [#allocation12], 1
    %4468 = vsyncpa [#allocation15], 1
    %4469 = vsyncpa [#allocation18], 1

</llo_original>
